<compile_context>
chip_gen: v7x
topology: tpu7x:2x2x1
jax: 0.10.0
libtpu: 0.0.40
codegen_flags: <defaults>
</compile_context>

<pallas_src>
import functools

import jax
import jax.numpy as jnp
from jax import lax
from jax.experimental import pallas as pl
from jax.experimental.pallas import tpu as pltpu


def _round_up(x: int, m: int) -> int:
    return ((x + m - 1) // m) * m


def _default_max_tile_rows() -> int:
    """512 on 128-MiB-VMEM chips (v5e/v6e), 256 on v7x (64 MiB) / unknown."""
    try:
        kind = jax.devices()[0].device_kind.lower()
    except Exception:
        return 256
    if "v7" in kind:
        return 256
    if "v5" in kind or "v6" in kind:
        return 512
    return 256


def _lane_sum(a):
    """(R, W) -> (1, 128) per-lane partial sum; W must be a multiple of 128.

    Column-block adds are plain VPU adds; only the final (R,128)->(1,128) row
    reduce touches the sublane/XLU path, once per term.
    """
    acc = a[:, 0:128]
    for c in range(128, a.shape[1], 128):
        acc = acc + a[:, c:c + 128]
    return jnp.sum(acc, axis=0, keepdims=True)


def _row_masked_lane_sum(a, row_ok):
    """Like _lane_sum, but zeroes padded rows.  The mask is row-constant, so it is
    applied once to the 128-wide accumulator rather than per element."""
    acc = a[:, 0:128]
    for c in range(128, a.shape[1], 128):
        acc = acc + a[:, c:c + 128]
    return jnp.sum(jnp.where(row_ok, acc, 0.0), axis=0, keepdims=True)


def _stft_loss_kernel(zf_ref, basis_ref, o_ref, *,
                      tm, n_cos, n_im, n_valid_lo, n_valid_hi, m_true):
    # zf_ref:    (2, tm, fft)     x frames at [0], y frames at [1]
    # basis_ref: (fft, n_cos+n_im) fused windowed [cos | -sin] DFT basis
    # o_ref:     (8, 128)         rows 0..2 hold 128-lane partial sums
    fft = zf_ref.shape[-1]
    # Collapse the x/y dim into rows: (2, tm, fft) -> (2*tm, fft).  tm % 8 == 0,
    # so this is a pure re-tagging of sublanes (no relayout), and we get ONE
    # fused MXU matmul per tile (RHS pushed once instead of twice).
    z = zf_ref[...].reshape(2 * tm, fft)
    zw = jnp.dot(z, basis_ref[...], preferred_element_type=jnp.float32)

    xr = zw[:tm, :n_cos]
    xi = zw[:tm, n_cos:]
    yr = zw[tm:, :n_cos]
    yi = zw[tm:, n_cos:]

    eps = jnp.float32(1e-7)
    # Bins [0, n_im): complex.  Bins [n_im, n_cos): real-only (sin basis is
    # exactly zero at Nyquist; columns >= n_bins are zero pad).
    xr_lo = xr[:, :n_im]
    yr_lo = yr[:, :n_im]
    # NOTE: the eps clamp also guarantees px == py == eps on pad rows/bins, which
    # makes their contribution to the diff and (masked) log terms exactly zero.
    px_lo = jnp.maximum(xr_lo * xr_lo + xi * xi, eps)
    py_lo = jnp.maximum(yr_lo * yr_lo + yi * yi, eps)

    row_ok = (lax.broadcasted_iota(jnp.int32, (tm, 128), 0)
              + pl.program_id(0) * tm) < m_true                      # (tm, 128)

    # Spectral-convergence numerator: pad rows / pad bins give px == py == eps
    # exactly -> sqrt(py) - sqrt(px) == 0 there, so no mask is needed.
    d_lo = jnp.sqrt(py_lo) - jnp.sqrt(px_lo)
    d2 = _lane_sum(d_lo * d_lo)

    # |log y_mag - log x_mag| = 0.5 * |log(py/px)|  (one EUP log, approx recip).
    lr_lo = jnp.abs(jnp.log(py_lo * pl.reciprocal(px_lo, approx=True)))

    if n_valid_lo < n_im:
        # General (non-128-aligned) fallback: per-element column + row mask.
        col_lo = lax.broadcasted_iota(jnp.int32, px_lo.shape, 1)
        rows_lo = (lax.broadcasted_iota(jnp.int32, px_lo.shape, 0)
                   + pl.program_id(0) * tm)
        ok_lo = (col_lo < n_valid_lo) & (rows_lo < m_true)
        y2 = _lane_sum(jnp.where(ok_lo, py_lo, 0.0))
        lg = _lane_sum(jnp.where(ok_lo, lr_lo, 0.0))
    else:
        # Default path: every lo column is a valid bin -> only row masking, applied
        # to the (tm, 128) accumulator instead of per element.
        y2 = _row_masked_lane_sum(py_lo, row_ok)
        lg = _row_masked_lane_sum(lr_lo, row_ok)

    if n_cos > n_im:
        # Real-only high bins (default config: just the Nyquist bin + zero pad).
        xr_hi = xr[:, n_im:]
        yr_hi = yr[:, n_im:]
        px_hi = jnp.maximum(xr_hi * xr_hi, eps)
        py_hi = jnp.maximum(yr_hi * yr_hi, eps)
        d_hi = jnp.sqrt(py_hi) - jnp.sqrt(px_hi)
        d2 = d2 + _lane_sum(d_hi * d_hi)

        col_hi = lax.broadcasted_iota(jnp.int32, px_hi.shape, 1)
        rows_hi = (lax.broadcasted_iota(jnp.int32, px_hi.shape, 0)
                   + pl.program_id(0) * tm)
        ok_hi = (col_hi < n_valid_hi) & (rows_hi < m_true)
        lr_hi = jnp.abs(jnp.log(py_hi * pl.reciprocal(px_hi, approx=True)))
        y2 = y2 + _lane_sum(jnp.where(ok_hi, py_hi, 0.0))
        lg = lg + _lane_sum(jnp.where(ok_hi, lr_hi, 0.0))

    lg = 0.5 * lg

    srow = lax.broadcasted_iota(jnp.int32, (8, 128), 0)
    o_ref[...] = jnp.where(srow == 0, d2,
                  jnp.where(srow == 1, y2,
                   jnp.where(srow == 2, lg, jnp.float32(0.0))))


class STFTLoss:
    """JAX/Pallas port of the PyTorch STFTLoss module: returns (sc_loss, mag_loss)."""

    def __init__(self, fft_size: int = 1024, shift_size: int = 120,
                 win_length: int = 600, compute_dtype=jnp.bfloat16,
                 max_tile_rows: int | None = None):
        self.fft_size = fft_size
        self.shift_size = shift_size
        self.win_length = win_length
        # bf16 matmul inputs (f32 accumulation).  Set compute_dtype=jnp.float32 for
        # stricter numerics vs. the f32 torch reference (low-energy log bins drift
        # ~1e-2 relative in bf16).
        self.compute_dtype = compute_dtype
        self.max_tile_rows = (max_tile_rows if max_tile_rows is not None
                              else _default_max_tile_rows())

        self.n_bins = fft_size // 2 + 1                    # 513 for fft=1024
        self.n_cos = _round_up(self.n_bins, 128)           # 640 (lane multiple)
        half = fft_size // 2
        # sin basis is identically zero at k=0 and Nyquist; if the half spectrum is
        # 128-aligned the imaginary half only needs k in [0, half) -> 1152-wide basis.
        self.n_im = half if half % 128 == 0 else self.n_cos

        # Hann window (torch default: periodic=True), zero-padded & centered to fft.
        n = jnp.arange(win_length, dtype=jnp.float32)
        window = 0.5 - 0.5 * jnp.cos(2.0 * jnp.pi * n / win_length)
        lpad = (fft_size - win_length) // 2
        window = jnp.pad(window, (lpad, fft_size - win_length - lpad))

        # One-sided windowed DFT bases: X[k] = sum_n w[n] x[n] e^{-2pi i nk/N}.
        t = jnp.arange(fft_size, dtype=jnp.float32)
        k_cos = jnp.arange(self.n_bins, dtype=jnp.float32)
        ang_c = (2.0 * jnp.pi / fft_size) * t[:, None] * k_cos[None, :]
        cos_b = jnp.cos(ang_c) * window[:, None]                    # (fft, n_bins)
        cos_b = jnp.pad(cos_b, ((0, 0), (0, self.n_cos - self.n_bins)))

        n_sin_real = min(self.n_im, self.n_bins)
        k_sin = jnp.arange(n_sin_real, dtype=jnp.float32)
        ang_s = (2.0 * jnp.pi / fft_size) * t[:, None] * k_sin[None, :]
        sin_b = -jnp.sin(ang_s) * window[:, None]                   # (fft, n_sin_real)
        sin_b = jnp.pad(sin_b, ((0, 0), (0, self.n_im - n_sin_real)))

        # Fused [cos | -sin] basis, (fft, n_cos + n_im).
        self.basis = jnp.concatenate([cos_b, sin_b], axis=1).astype(compute_dtype)

    def _frames(self, x: jax.Array, y: jax.Array, m_pad: int) -> jax.Array:
        """(B,T) x 2 -> (2, m_pad, fft): torch.stft center=True reflect framing for
        x and y stacked together (no HBM concatenate of framed arrays)."""
        B, T = x.shape
        pad = self.fft_size // 2
        if T <= pad:
            raise ValueError(
                f"signal length T={T} must exceed fft_size//2={pad} for reflect pad")
        z = jnp.concatenate([x, y], axis=0)                         # (2B, T), tiny
        zp = jnp.pad(z, ((0, 0), (pad, pad)), mode="reflect")
        n_frames = 1 + T // self.shift_size
        idx = (jnp.arange(n_frames)[:, None] * self.shift_size
               + jnp.arange(self.fft_size)[None, :])
        # TODO(synk): in-kernel framing via memory_space=pl.ANY + pl.ds to avoid
        # this ~8.5x im2col expansion (fft/hop) of both signals in HBM.
        fr = zp[:, idx].reshape(2, B * n_frames, self.fft_size)     # x rows, y rows
        fr = jnp.pad(fr, ((0, 0), (0, m_pad - B * n_frames), (0, 0)))
        return fr.astype(self.compute_dtype)

    def __call__(self, x: jax.Array, y: jax.Array):
        B, T = x.shape
        n_frames = 1 + T // self.shift_size
        m_true = B * n_frames
        # Aim for >= 2 grid steps so v7x's 2nd TensorCore gets work, cap by VMEM.
        tm = _round_up(max(-(-m_true // 2), 8), 8)
        tm = min(tm, self.max_tile_rows)
        m_pad = _round_up(m_true, tm)
        nt = m_pad // tm
        fft = self.fft_size
        nbt = self.n_cos + self.n_im          # fused basis width (1152 for fft=1024)

        zf = self._frames(x, y, m_pad)        # (2, m_pad, fft)

        kernel = functools.partial(
            _stft_loss_kernel, tm=tm, n_cos=self.n_cos, n_im=self.n_im,
            n_valid_lo=min(self.n_bins, self.n_im),
            n_valid_hi=max(self.n_bins - self.n_im, 0), m_true=m_true)

        cost = pl.CostEstimate(
            flops=2 * (2 * tm) * fft * nbt * nt,
            transcendentals=6 * tm * self.n_cos * nt,
            bytes_accessed=(2 * m_pad * fft * zf.dtype.itemsize
                            + fft * nbt * self.basis.dtype.itemsize
                            + nt * 8 * 128 * 4))

        out = pl.pallas_call(
            kernel,
            out_shape=jax.ShapeDtypeStruct((nt * 8, 128), jnp.float32),
            grid_spec=pltpu.PrefetchScalarGridSpec(
                num_scalar_prefetch=0,
                grid=(nt,),
                in_specs=[
                    pl.BlockSpec((2, tm, fft), lambda i: (0, i, 0)),
                    # Constant index_map + single buffer: basis DMA'd once and
                    # stays resident; no wasted second VMEM buffer.
                    pl.BlockSpec((fft, nbt), lambda i: (0, 0),
                                 pipeline_mode=pl.Buffered(1)),
                ],
                out_specs=pl.BlockSpec((8, 128), lambda i: (i, 0)),
            ),
            compiler_params=pltpu.CompilerParams(
                dimension_semantics=("parallel",),
                vmem_limit_bytes=(64 if tm > 256 else 32) * 1024 * 1024),
            cost_estimate=cost,
        )(zf, self.basis)

        # Finish the reduction: sum over tiles and over the 128 lanes.
        parts = out.reshape(nt, 8, 128)[:, :3, :]
        sums = jnp.sum(parts, axis=(0, 2))                  # (3,)
        sc_loss = jnp.sqrt(sums[0]) / jnp.sqrt(sums[1])
        mag_loss = sums[2] / (m_true * self.n_bins)
        return sc_loss, mag_loss


if __name__ == "__main__":
    key = jax.random.PRNGKey(0)
    kx, ky = jax.random.split(key)
    B, T = 2, 2400                       # small signal, > fft_size//2 for reflect pad
    x = 0.5 * jax.random.normal(kx, (B, T), dtype=jnp.float32)
    y = 0.5 * jax.random.normal(ky, (B, T), dtype=jnp.float32)

    loss_mod = STFTLoss(fft_size=1024, shift_size=120, win_length=600)
    sc_loss, mag_loss = jax.jit(loss_mod.__call__)(x, y)
    jax.block_until_ready((sc_loss, mag_loss))
    assert bool(jnp.isfinite(sc_loss)) and bool(jnp.isfinite(mag_loss))
    print("KERNEL_OK")
</pallas_src>

<mosaic_0001>
module attributes {stable_mosaic.version = 11 : i64} {
  func.func @_stft_loss_kernel(%arg0: i32, %arg1: memref<2x24x1024xbf16, #tpu.memory_space<vmem>>, %arg2: memref<1024x1152xbf16, #tpu.memory_space<vmem>>, %arg3: memref<8x128xf32, #tpu.memory_space<vmem>>) attributes {dimension_semantics = [#tpu.dimension_semantics<parallel>], iteration_bounds = array<i64: 2>, scalar_prefetch = 0 : i64, scratch_operands = 0 : i64, tpu.core_type = #tpu.core_type<tc>, window_params = [{transform_indices = @transform_0, window_bounds = array<i64: 2, 24, 1024>}, {pipeline_mode = #tpu.pipeline_mode<synchronous>, transform_indices = @transform_1, window_bounds = array<i64: 1024, 1152>}, {transform_indices = @transform_2, window_bounds = array<i64: 8, 128>}]} {
    %c0 = arith.constant 0 : index
    %c0_0 = arith.constant 0 : index
    %c0_1 = arith.constant 0 : index
    %0 = vector.load %arg1[%c0, %c0_0, %c0_1] : memref<2x24x1024xbf16, #tpu.memory_space<vmem>>, vector<2x24x1024xbf16>
    %1 = vector.shape_cast %0 : vector<2x24x1024xbf16> to vector<48x1024xbf16>
    %c0_2 = arith.constant 0 : index
    %c0_3 = arith.constant 0 : index
    %2 = vector.load %arg2[%c0_2, %c0_3] : memref<1024x1152xbf16, #tpu.memory_space<vmem>>, vector<1024x1152xbf16>
    %cst = arith.constant dense<0.000000e+00> : vector<48x1152xf32>
    %3 = tpu.matmul %1, %2, %cst {dimension_numbers = #tpu.dot_dimension_numbers<[1], [0], [0], [1], [0, 0, 1, 1], [], []>} : vector<48x1024xbf16>, vector<1024x1152xbf16>, vector<48x1152xf32> -> vector<48x1152xf32>
    %4 = vector.extract_strided_slice %3 {offsets = [0, 0], sizes = [24, 640], strides = [1, 1]} : vector<48x1152xf32> to vector<24x640xf32>
    %5 = vector.extract_strided_slice %3 {offsets = [0, 640], sizes = [24, 512], strides = [1, 1]} : vector<48x1152xf32> to vector<24x512xf32>
    %6 = vector.extract_strided_slice %3 {offsets = [24, 0], sizes = [24, 640], strides = [1, 1]} : vector<48x1152xf32> to vector<24x640xf32>
    %7 = vector.extract_strided_slice %3 {offsets = [24, 640], sizes = [24, 512], strides = [1, 1]} : vector<48x1152xf32> to vector<24x512xf32>
    %8 = vector.extract_strided_slice %4 {offsets = [0, 0], sizes = [24, 512], strides = [1, 1]} : vector<24x640xf32> to vector<24x512xf32>
    %9 = vector.extract_strided_slice %6 {offsets = [0, 0], sizes = [24, 512], strides = [1, 1]} : vector<24x640xf32> to vector<24x512xf32>
    %10 = arith.mulf %8, %8 : vector<24x512xf32>
    %11 = arith.mulf %5, %5 : vector<24x512xf32>
    %12 = arith.addf %10, %11 : vector<24x512xf32>
    %cst_4 = arith.constant 1.000000e-07 : f32
    %13 = vector.broadcast %cst_4 : f32 to vector<24x512xf32>
    %14 = arith.maximumf %12, %13 : vector<24x512xf32>
    %15 = arith.mulf %9, %9 : vector<24x512xf32>
    %16 = arith.mulf %7, %7 : vector<24x512xf32>
    %17 = arith.addf %15, %16 : vector<24x512xf32>
    %cst_5 = arith.constant 1.000000e-07 : f32
    %18 = vector.broadcast %cst_5 : f32 to vector<24x512xf32>
    %19 = arith.maximumf %17, %18 : vector<24x512xf32>
    %20 = tpu.iota {dimensions = array<i32: 0>} : vector<24x128xi32>
    %c24_i32 = arith.constant 24 : i32
    %21 = arith.muli %arg0, %c24_i32 : i32
    %22 = vector.broadcast %21 : i32 to vector<24x128xi32>
    %23 = arith.addi %20, %22 : vector<24x128xi32>
    %c42_i32 = arith.constant 42 : i32
    %24 = vector.broadcast %c42_i32 : i32 to vector<24x128xi32>
    %25 = arith.cmpi slt, %23, %24 : vector<24x128xi32>
    %26 = math.sqrt %19 : vector<24x512xf32>
    %27 = math.sqrt %14 : vector<24x512xf32>
    %28 = arith.subf %26, %27 : vector<24x512xf32>
    %29 = arith.mulf %28, %28 : vector<24x512xf32>
    %30 = vector.extract_strided_slice %29 {offsets = [0, 0], sizes = [24, 128], strides = [1, 1]} : vector<24x512xf32> to vector<24x128xf32>
    %31 = vector.extract_strided_slice %29 {offsets = [0, 128], sizes = [24, 128], strides = [1, 1]} : vector<24x512xf32> to vector<24x128xf32>
    %32 = arith.addf %30, %31 : vector<24x128xf32>
    %33 = vector.extract_strided_slice %29 {offsets = [0, 256], sizes = [24, 128], strides = [1, 1]} : vector<24x512xf32> to vector<24x128xf32>
    %34 = arith.addf %32, %33 : vector<24x128xf32>
    %35 = vector.extract_strided_slice %29 {offsets = [0, 384], sizes = [24, 128], strides = [1, 1]} : vector<24x512xf32> to vector<24x128xf32>
    %36 = arith.addf %34, %35 : vector<24x128xf32>
    %cst_6 = arith.constant dense<0.000000e+00> : vector<128xf32>
    %37 = vector.multi_reduction <add>, %36, %cst_6 [0] : vector<24x128xf32> to vector<128xf32>
    %38 = vector.shape_cast %37 : vector<128xf32> to vector<1x128xf32>
    %39 = tpu.reciprocal %14 {approx = true} : vector<24x512xf32> -> vector<24x512xf32>
    %40 = arith.mulf %19, %39 : vector<24x512xf32>
    %41 = math.log %40 : vector<24x512xf32>
    %42 = math.absf %41 : vector<24x512xf32>
    %43 = vector.extract_strided_slice %19 {offsets = [0, 0], sizes = [24, 128], strides = [1, 1]} : vector<24x512xf32> to vector<24x128xf32>
    %44 = vector.extract_strided_slice %19 {offsets = [0, 128], sizes = [24, 128], strides = [1, 1]} : vector<24x512xf32> to vector<24x128xf32>
    %45 = arith.addf %43, %44 : vector<24x128xf32>
    %46 = vector.extract_strided_slice %19 {offsets = [0, 256], sizes = [24, 128], strides = [1, 1]} : vector<24x512xf32> to vector<24x128xf32>
    %47 = arith.addf %45, %46 : vector<24x128xf32>
    %48 = vector.extract_strided_slice %19 {offsets = [0, 384], sizes = [24, 128], strides = [1, 1]} : vector<24x512xf32> to vector<24x128xf32>
    %49 = arith.addf %47, %48 : vector<24x128xf32>
    %cst_7 = arith.constant 0.000000e+00 : f32
    %50 = vector.broadcast %cst_7 : f32 to vector<24x128xf32>
    %51 = arith.select %25, %49, %50 : vector<24x128xi1>, vector<24x128xf32>
    %cst_8 = arith.constant dense<0.000000e+00> : vector<128xf32>
    %52 = vector.multi_reduction <add>, %51, %cst_8 [0] : vector<24x128xf32> to vector<128xf32>
    %53 = vector.shape_cast %52 : vector<128xf32> to vector<1x128xf32>
    %54 = vector.extract_strided_slice %42 {offsets = [0, 0], sizes = [24, 128], strides = [1, 1]} : vector<24x512xf32> to vector<24x128xf32>
    %55 = vector.extract_strided_slice %42 {offsets = [0, 128], sizes = [24, 128], strides = [1, 1]} : vector<24x512xf32> to vector<24x128xf32>
    %56 = arith.addf %54, %55 : vector<24x128xf32>
    %57 = vector.extract_strided_slice %42 {offsets = [0, 256], sizes = [24, 128], strides = [1, 1]} : vector<24x512xf32> to vector<24x128xf32>
    %58 = arith.addf %56, %57 : vector<24x128xf32>
    %59 = vector.extract_strided_slice %42 {offsets = [0, 384], sizes = [24, 128], strides = [1, 1]} : vector<24x512xf32> to vector<24x128xf32>
    %60 = arith.addf %58, %59 : vector<24x128xf32>
    %cst_9 = arith.constant 0.000000e+00 : f32
    %61 = vector.broadcast %cst_9 : f32 to vector<24x128xf32>
    %62 = arith.select %25, %60, %61 : vector<24x128xi1>, vector<24x128xf32>
    %cst_10 = arith.constant dense<0.000000e+00> : vector<128xf32>
    %63 = vector.multi_reduction <add>, %62, %cst_10 [0] : vector<24x128xf32> to vector<128xf32>
    %64 = vector.shape_cast %63 : vector<128xf32> to vector<1x128xf32>
    %65 = vector.extract_strided_slice %4 {offsets = [0, 512], sizes = [24, 128], strides = [1, 1]} : vector<24x640xf32> to vector<24x128xf32>
    %66 = vector.extract_strided_slice %6 {offsets = [0, 512], sizes = [24, 128], strides = [1, 1]} : vector<24x640xf32> to vector<24x128xf32>
    %67 = arith.mulf %65, %65 : vector<24x128xf32>
    %cst_11 = arith.constant 1.000000e-07 : f32
    %68 = vector.broadcast %cst_11 : f32 to vector<24x128xf32>
    %69 = arith.maximumf %67, %68 : vector<24x128xf32>
    %70 = arith.mulf %66, %66 : vector<24x128xf32>
    %cst_12 = arith.constant 1.000000e-07 : f32
    %71 = vector.broadcast %cst_12 : f32 to vector<24x128xf32>
    %72 = arith.maximumf %70, %71 : vector<24x128xf32>
    %73 = math.sqrt %72 : vector<24x128xf32>
    %74 = math.sqrt %69 : vector<24x128xf32>
    %75 = arith.subf %73, %74 : vector<24x128xf32>
    %76 = arith.mulf %75, %75 : vector<24x128xf32>
    %cst_13 = arith.constant dense<0.000000e+00> : vector<128xf32>
    %77 = vector.multi_reduction <add>, %76, %cst_13 [0] : vector<24x128xf32> to vector<128xf32>
    %78 = vector.shape_cast %77 : vector<128xf32> to vector<1x128xf32>
    %79 = arith.addf %38, %78 : vector<1x128xf32>
    %80 = tpu.iota {dimensions = array<i32: 1>} : vector<24x128xi32>
    %81 = tpu.iota {dimensions = array<i32: 0>} : vector<24x128xi32>
    %c24_i32_14 = arith.constant 24 : i32
    %82 = arith.muli %arg0, %c24_i32_14 : i32
    %83 = vector.broadcast %82 : i32 to vector<24x128xi32>
    %84 = arith.addi %81, %83 : vector<24x128xi32>
    %c1_i32 = arith.constant 1 : i32
    %85 = vector.broadcast %c1_i32 : i32 to vector<24x128xi32>
    %86 = arith.cmpi slt, %80, %85 : vector<24x128xi32>
    %c42_i32_15 = arith.constant 42 : i32
    %87 = vector.broadcast %c42_i32_15 : i32 to vector<24x128xi32>
    %88 = arith.cmpi slt, %84, %87 : vector<24x128xi32>
    %89 = arith.andi %86, %88 : vector<24x128xi1>
    %90 = tpu.reciprocal %69 {approx = true} : vector<24x128xf32> -> vector<24x128xf32>
    %91 = arith.mulf %72, %90 : vector<24x128xf32>
    %92 = math.log %91 : vector<24x128xf32>
    %93 = math.absf %92 : vector<24x128xf32>
    %cst_16 = arith.constant 0.000000e+00 : f32
    %94 = vector.broadcast %cst_16 : f32 to vector<24x128xf32>
    %95 = arith.select %89, %72, %94 : vector<24x128xi1>, vector<24x128xf32>
    %cst_17 = arith.constant dense<0.000000e+00> : vector<128xf32>
    %96 = vector.multi_reduction <add>, %95, %cst_17 [0] : vector<24x128xf32> to vector<128xf32>
    %97 = vector.shape_cast %96 : vector<128xf32> to vector<1x128xf32>
    %98 = arith.addf %53, %97 : vector<1x128xf32>
    %cst_18 = arith.constant 0.000000e+00 : f32
    %99 = vector.broadcast %cst_18 : f32 to vector<24x128xf32>
    %100 = arith.select %89, %93, %99 : vector<24x128xi1>, vector<24x128xf32>
    %cst_19 = arith.constant dense<0.000000e+00> : vector<128xf32>
    %101 = vector.multi_reduction <add>, %100, %cst_19 [0] : vector<24x128xf32> to vector<128xf32>
    %102 = vector.shape_cast %101 : vector<128xf32> to vector<1x128xf32>
    %103 = arith.addf %64, %102 : vector<1x128xf32>
    %cst_20 = arith.constant 5.000000e-01 : f32
    %104 = vector.broadcast %cst_20 : f32 to vector<1x128xf32>
    %105 = arith.mulf %104, %103 : vector<1x128xf32>
    %106 = tpu.iota {dimensions = array<i32: 0>} : vector<8x128xi32>
    %c0_i32 = arith.constant 0 : i32
    %107 = vector.broadcast %c0_i32 : i32 to vector<8x128xi32>
    %108 = arith.cmpi eq, %106, %107 : vector<8x128xi32>
    %c1_i32_21 = arith.constant 1 : i32
    %109 = vector.broadcast %c1_i32_21 : i32 to vector<8x128xi32>
    %110 = arith.cmpi eq, %106, %109 : vector<8x128xi32>
    %c2_i32 = arith.constant 2 : i32
    %111 = vector.broadcast %c2_i32 : i32 to vector<8x128xi32>
    %112 = arith.cmpi eq, %106, %111 : vector<8x128xi32>
    %cst_22 = arith.constant 0.000000e+00 : f32
    %113 = vector.shape_cast %105 : vector<1x128xf32> to vector<1x128xf32>
    %114 = vector.broadcast %113 : vector<1x128xf32> to vector<8x128xf32>
    %115 = vector.broadcast %cst_22 : f32 to vector<8x128xf32>
    %116 = arith.select %112, %114, %115 : vector<8x128xi1>, vector<8x128xf32>
    %117 = vector.shape_cast %98 : vector<1x128xf32> to vector<1x128xf32>
    %118 = vector.broadcast %117 : vector<1x128xf32> to vector<8x128xf32>
    %119 = arith.select %110, %118, %116 : vector<8x128xi1>, vector<8x128xf32>
    %120 = vector.shape_cast %79 : vector<1x128xf32> to vector<1x128xf32>
    %121 = vector.broadcast %120 : vector<1x128xf32> to vector<8x128xf32>
    %122 = arith.select %108, %121, %119 : vector<8x128xi1>, vector<8x128xf32>
    %c0_23 = arith.constant 0 : index
    %c0_24 = arith.constant 0 : index
    %123 = vector.load %arg3[%c0_23, %c0_24] : memref<8x128xf32, #tpu.memory_space<vmem>>, vector<8x128xf32>
    tpu.vector_store %arg3[%c0_23, %c0_24], %122 {strides = array<i32>} : memref<8x128xf32, #tpu.memory_space<vmem>>, vector<8x128xf32>,
    return
  }
  func.func @transform_0(%arg0: i32) -> (i32, i32, i32) {
    %c0_i32 = arith.constant 0 : i32
    %c0_i32_0 = arith.constant 0 : i32
    %c0_i32_1 = arith.constant 0 : i32
    return %c0_i32, %arg0, %c0_i32_0 : i32, i32, i32
  }
  func.func @transform_1(%arg0: i32) -> (i32, i32) {
    %c0_i32 = arith.constant 0 : i32
    %c0_i32_0 = arith.constant 0 : i32
    %c0_i32_1 = arith.constant 0 : i32
    return %c0_i32, %c0_i32_0 : i32, i32
  }
  func.func @transform_2(%arg0: i32) -> (i32, i32) {
    %c0_i32 = arith.constant 0 : i32
    %c0_i32_0 = arith.constant 0 : i32
    return %arg0, %c0_i32 : i32, i32
  }
}

</mosaic_0001>

<llo_original>
// kernel: a_call__.1
$region0: #{a_call__.1}
  #allocation0 [shape = 'u32[]', space=smem, size = 0x4, offset = 0x4, fixed_abs, tag = 'smem constant byte address 0x4 - core index']
  #allocation1 [shape = 'u32[144,128]{1,0:T(1,128)}', space=vmem, size = 0x12000, scoped, tag = 'internal scratch']
  %s0 = inlined_call_operand.vmem [shape: bf16[2,48,1024], index: 0, kind: input, shape index: {}]
  %s1 = inlined_call_operand.vmem [shape: bf16[1024,1152], index: 1, kind: input, shape index: {}]
  %s2 = inlined_call_operand.vmem [shape: f32[16,128], index: 2, kind: output, shape index: {}]
  %s3 = sld [smem:[#allocation0]]
  $region64: #{a_call__.1} parent=0
    _
  %s5 = ssub.s32 1, %s3
  %s6 = scalar_select 0, %s5, %s3
  $region1: #{a_call__.1} parent=0
    #allocation2 [shape = 'u8[196608]{0}', space=vmem, size = 0x30000, scoped, tag = 'input window, operand 0']
    loop: start=0, step=1, limit=4
    $region2: #{a_call__.1} parent=1 // loop_pre_header
      _
    $region3: #{a_call__.1} parent=1 // loop_header
      %s8 = sphi 0, %s12
      %p9 = scmp.ge.s32.totalorder %s8, 4
      %s18 = sphi 0, %s20
      %s21 = sphi 0, %s18
      %s22 = sphi 0, %s21
      %s38 = sphi 0, %s22
      %s42 = sphi 0, %s42
      %s44 = sphi 0, %s42
      %s45 = sphi 0, %s44
      %s59 = sphi 0, %s45
      %s65 = sphi 0, %s67
      %s68 = sphi 0, %s65
      %s69 = sphi 0, %s68
      %s85 = sphi 0, %s69
    $region4: #{a_call__.1} parent=1 // loop_header_branch
      %11 = sbr.rel (%p9) target = $region8
    $region5: #{a_call__.1} parent=1 // loop_body
      %s13 = ssub.s32 %s8, 1
      %s14 = ssub.s32 %s8, 2
      %s15 = sadd.s32 %s8, 1
      %s16 = ssub.s32 %s8, %s15
      %p17 = scmp.eq.s32.totalorder %s16, 0
      %s19 = sadd.s32 %s18, 1
      %s20 = scalar_select %p17, %s18, %s19
      %p23 = pneg %p17
      %p24 = scmp.eq.s32.totalorder %s8, 1
      %p25 = por %p23, %p24
      %p26 = scmp.ne.s32.totalorder %s18, %s21
      %p27 = scmp.eq.s32.totalorder %s8, 0
      %p28 = por %p26, %p27
      %p29 = scmp.ne.s32.totalorder %s18, %s21
      %p30 = scmp.eq.s32.totalorder %s13, 1
      %p31 = por %p29, %p30
      %p32 = scmp.ne.s32.totalorder %s21, %s22
      %p33 = scmp.eq.s32.totalorder %s13, 0
      %p34 = por %p32, %p33
      %p35 = scmp.ne.s32.totalorder %s21, %s22
      %p36 = scmp.eq.s32.totalorder %s14, 1
      %p37 = por %p35, %p36
      %p39 = scmp.ne.s32.totalorder %s22, %s38
      %p40 = scmp.eq.s32.totalorder %s14, 0
      %p41 = por %p39, %p40
      %s43 = sadd.s32 %s42, 1
      %p46 = scmp.eq.s32.totalorder %s8, 1
      %p47 = scmp.ne.s32.totalorder %s42, %s44
      %p48 = scmp.eq.s32.totalorder %s8, 0
      %p49 = por %p47, %p48
      %p50 = scmp.ne.s32.totalorder %s42, %s44
      %p51 = scmp.eq.s32.totalorder %s13, 1
      %p52 = por %p50, %p51
      %p53 = scmp.ne.s32.totalorder %s44, %s45
      %p54 = scmp.eq.s32.totalorder %s13, 0
      %p55 = por %p53, %p54
      %p56 = scmp.ne.s32.totalorder %s44, %s45
      %p57 = scmp.eq.s32.totalorder %s14, 1
      %p58 = por %p56, %p57
      %p60 = scmp.ne.s32.totalorder %s45, %s59
      %p61 = scmp.eq.s32.totalorder %s14, 0
      %p62 = por %p60, %p61
      %s63 = ssub.s32 %s8, %s15
      %p64 = scmp.eq.s32.totalorder %s63, 0
      %s66 = sadd.s32 %s65, 1
      %s67 = scalar_select %p64, %s65, %s66
      %p70 = pneg %p64
      %p71 = scmp.eq.s32.totalorder %s8, 1
      %p72 = por %p70, %p71
      %p73 = scmp.ne.s32.totalorder %s65, %s68
      %p74 = scmp.eq.s32.totalorder %s8, 0
      %p75 = por %p73, %p74
      %p76 = scmp.ne.s32.totalorder %s65, %s68
      %p77 = scmp.eq.s32.totalorder %s13, 1
      %p78 = por %p76, %p77
      %p79 = scmp.ne.s32.totalorder %s68, %s69
      %p80 = scmp.eq.s32.totalorder %s13, 0
      %p81 = por %p79, %p80
      %p82 = scmp.ne.s32.totalorder %s68, %s69
      %p83 = scmp.eq.s32.totalorder %s14, 1
      %p84 = por %p82, %p83
      %p86 = scmp.ne.s32.totalorder %s69, %s85
      %p87 = scmp.eq.s32.totalorder %s14, 0
      %p88 = por %p86, %p87
      %p89 = scmp.le.s32.totalorder 1, %s8
      %p90 = scmp.lt.s32.totalorder %s8, 3
      %p91 = pnand %p89, %p90
      %p92 = pneg %p91
      // Predicated region
      $region9: #{a_call__.1} parent=5 // pred_check
        _
      $region10: #{a_call__.1} parent=5 // pred_check_branch
        %94 = sbr.rel (%p91) target = $region12
      $region11: #{a_call__.1} parent=5 // pred_region
        %s95 = ssub.s32 %s8, 1
        // Predicated region
        $region13: #{a_call__.1} parent=11 // pred_check
          %p96 = pneg %p55
        $region14: #{a_call__.1} parent=11 // pred_check_branch
          %98 = sbr.rel (%p96) target = $region16
        $region15: #{a_call__.1} parent=11 // pred_region
          _
        $region16: #{a_call__.1} parent=11 // pred_fallthru
          _
      $region12: #{a_call__.1} parent=5 // pred_fallthru
        _
      %p99 = scmp.lt.s32.totalorder %s8, 2
      // Predicated region
      $region17: #{a_call__.1} parent=5 // pred_check
        %p100 = pneg %p99
      $region18: #{a_call__.1} parent=5 // pred_check_branch
        %102 = sbr.rel (%p100) target = $region20
      $region19: #{a_call__.1} parent=5 // pred_region
        // Predicated region
        $region21: #{a_call__.1} parent=19 // pred_check
          %p103 = pneg %p28
        $region22: #{a_call__.1} parent=19 // pred_check_branch
          %105 = sbr.rel (%p103) target = $region24
        $region23: #{a_call__.1} parent=19 // pred_region
          %s106 = sand.u32 %s18, 1
          %s107 = sand.u32 %s18, 1
          %s108 = smul.addr %s107, 192
          %s109 = scalar_lea.vmem [#allocation2], %s108
          %s110 = smul.u32 3, %s8
          %s111 = smul.addr %s110, 8
          %s112 = smul.addr %s111, 4
          %s113 = scalar_lea.vmem %s0, %s112
          // Predicated region
          $region25: #{a_call__.1} parent=23 // pred_check
            _
          $region26: #{a_call__.1} parent=23 // pred_check_branch
            %115 = sbr.rel (0) target = $region28
          $region27: #{a_call__.1} parent=23 // pred_region
            // Predicated region
            $region29: #{a_call__.1} parent=27 // pred_check
              _
            $region30: #{a_call__.1} parent=27 // pred_check_branch
              %117 = sbr.rel (0) target = $region32
            $region31: #{a_call__.1} parent=27 // pred_region
              loop: start=0, step=1, limit=1
              $region33: #{a_call__.1} parent=31 // loop_pre_header
                _
              $region34: #{a_call__.1} parent=31 // loop_header
                %s119 = sphi 0, %s123
                %p120 = scmp.ge.s32.totalorder %s119, 1
                %s124 = sphi %s113, %s113
                %s125 = sphi %s109, %s109
              $region35: #{a_call__.1} parent=31 // loop_header_branch
                %122 = sbr.rel (%p120) target = $region39
              $region36: #{a_call__.1} parent=31 // loop_body
                %v126 = vld [vmem:[%s124] sm:$0xff]
                %127 = vst [vmem:[%s125] sm:$0xff] %v126
                %v128 = vld [vmem:[%s124 + $0x8] sm:$0xff]
                %129 = vst [vmem:[%s125 + $0x8] sm:$0xff] %v128
                %v130 = vld [vmem:[%s124 + $0x10] sm:$0xff]
                %131 = vst [vmem:[%s125 + $0x10] sm:$0xff] %v130
                %v132 = vld [vmem:[%s124 + $0x18] sm:$0xff]
                %133 = vst [vmem:[%s125 + $0x18] sm:$0xff] %v132
                %v134 = vld [vmem:[%s124 + $0x20] sm:$0xff]
                %135 = vst [vmem:[%s125 + $0x20] sm:$0xff] %v134
                %v136 = vld [vmem:[%s124 + $0x28] sm:$0xff]
                %137 = vst [vmem:[%s125 + $0x28] sm:$0xff] %v136
                %v138 = vld [vmem:[%s124 + $0x30] sm:$0xff]
                %139 = vst [vmem:[%s125 + $0x30] sm:$0xff] %v138
                %v140 = vld [vmem:[%s124 + $0x38] sm:$0xff]
                %141 = vst [vmem:[%s125 + $0x38] sm:$0xff] %v140
                %v142 = vld [vmem:[%s124 + $0x40] sm:$0xff]
                %143 = vst [vmem:[%s125 + $0x40] sm:$0xff] %v142
                %v144 = vld [vmem:[%s124 + $0x48] sm:$0xff]
                %145 = vst [vmem:[%s125 + $0x48] sm:$0xff] %v144
                %v146 = vld [vmem:[%s124 + $0x50] sm:$0xff]
                %147 = vst [vmem:[%s125 + $0x50] sm:$0xff] %v146
                %v148 = vld [vmem:[%s124 + $0x58] sm:$0xff]
                %149 = vst [vmem:[%s125 + $0x58] sm:$0xff] %v148
                %v150 = vld [vmem:[%s124 + $0xc0] sm:$0xff]
                %151 = vst [vmem:[%s125 + $0x60] sm:$0xff] %v150
                %v152 = vld [vmem:[%s124 + $0xc8] sm:$0xff]
                %153 = vst [vmem:[%s125 + $0x68] sm:$0xff] %v152
                %v154 = vld [vmem:[%s124 + $0xd0] sm:$0xff]
                %155 = vst [vmem:[%s125 + $0x70] sm:$0xff] %v154
                %v156 = vld [vmem:[%s124 + $0xd8] sm:$0xff]
                %157 = vst [vmem:[%s125 + $0x78] sm:$0xff] %v156
                %v158 = vld [vmem:[%s124 + $0xe0] sm:$0xff]
                %159 = vst [vmem:[%s125 + $0x80] sm:$0xff] %v158
                %v160 = vld [vmem:[%s124 + $0xe8] sm:$0xff]
                %161 = vst [vmem:[%s125 + $0x88] sm:$0xff] %v160
                %v162 = vld [vmem:[%s124 + $0xf0] sm:$0xff]
                %163 = vst [vmem:[%s125 + $0x90] sm:$0xff] %v162
                %v164 = vld [vmem:[%s124 + $0xf8] sm:$0xff]
                %165 = vst [vmem:[%s125 + $0x98] sm:$0xff] %v164
                %v166 = vld [vmem:[%s124 + $0x100] sm:$0xff]
                %167 = vst [vmem:[%s125 + $0xa0] sm:$0xff] %v166
                %v168 = vld [vmem:[%s124 + $0x108] sm:$0xff]
                %169 = vst [vmem:[%s125 + $0xa8] sm:$0xff] %v168
                %v170 = vld [vmem:[%s124 + $0x110] sm:$0xff]
                %171 = vst [vmem:[%s125 + $0xb0] sm:$0xff] %v170
                %v172 = vld [vmem:[%s124 + $0x118] sm:$0xff]
                %173 = vst [vmem:[%s125 + $0xb8] sm:$0xff] %v172
              $region37: #{a_call__.1} parent=31 // loop_footer
                %s123 = sadd.s32 1, %s119
              $region38: #{a_call__.1} parent=31 // loop_footer_branch
                %118 = sbr.rel target = $region34
              $region39: #{a_call__.1} parent=31 // loop_exit
                _
            $region32: #{a_call__.1} parent=27 // pred_fallthru
              _
            // Predicated region
            $region40: #{a_call__.1} parent=27 // pred_check
              _
            $region41: #{a_call__.1} parent=27 // pred_check_branch
              %175 = sbr.rel target = $region43
            $region42: #{a_call__.1} parent=27 // pred_region
              _
            $region43: #{a_call__.1} parent=27 // pred_fallthru
              _
          $region28: #{a_call__.1} parent=23 // pred_fallthru
            _
          %176 = vnop
        $region24: #{a_call__.1} parent=19 // pred_fallthru
          _
      $region20: #{a_call__.1} parent=5 // pred_fallthru
        _
      %p177 = scmp.le.s32.totalorder 1, %s8
      %p178 = scmp.lt.s32.totalorder %s8, 3
      %p179 = pnand %p177, %p178
      %p180 = pneg %p179
      // Predicated region
      $region44: #{a_call__.1} parent=5 // pred_check
        _
      $region45: #{a_call__.1} parent=5 // pred_check_branch
        %182 = sbr.rel (%p179) target = $region47
      $region46: #{a_call__.1} parent=5 // pred_region
        %s183 = ssub.s32 %s8, 1
        %s184 = sand.u32 %s21, 1
        %s185 = sand.u32 %s21, 1
        %s186 = smul.addr %s185, 192
        %s187 = scalar_lea.vmem [#allocation2], %s186
        // Predicated region
        $region48: #{a_call__.1} parent=46 // pred_check
          %p188 = pneg %p34
        $region49: #{a_call__.1} parent=46 // pred_check_branch
          %190 = sbr.rel (%p188) target = $region51
        $region50: #{a_call__.1} parent=46 // pred_region
          _
        $region51: #{a_call__.1} parent=46 // pred_fallthru
          _
        %s191 = sand.u32 %s21, 1
        %s192 = sand.u32 %s21, 1
        %s193 = smul.addr %s192, 192
        %s194 = scalar_lea.vmem [#allocation2], %s193
        %p195 = pneg %p34
        %p196 = pneg %p31
        %p197 = pneg %p55
        %p198 = pneg %p52
        %p199 = pneg %p81
        %p200 = pneg %p78
        %p201 = scmp.lt.s32.totalorder %s13, 1
        %s202 = scalar_select %p201, %s13, 1
        %s203 = smul.addr %s202, 8
        %s204 = scalar_lea.vmem %s2, %s203
        %s205 = smul.u32 3, %s13
        %p206 = scmp.lt.s32.totalorder %s13, 1
        %s207 = scalar_select %p206, %s13, 1
        %s208 = smul.addr %s207, 8
        %s209 = scalar_lea.vmem %s2, %s208
        %v211 = vld [vmem:[%s187] sm:$0xff]
        %v212 = vld [vmem:[%s187 + $0x8] sm:$0xff]
        %v213 = vld [vmem:[%s187 + $0x10] sm:$0xff]
        %v214 = vld [vmem:[%s187 + $0x18] sm:$0xff]
        %v215 = vld [vmem:[%s187 + $0x20] sm:$0xff]
        %v216 = vld [vmem:[%s187 + $0x28] sm:$0xff]
        %v217 = vld [vmem:[%s187 + $0x30] sm:$0xff]
        %v218 = vld [vmem:[%s187 + $0x38] sm:$0xff]
        %v219 = vld [vmem:[%s187 + $0x40] sm:$0xff]
        %v220 = vld [vmem:[%s187 + $0x48] sm:$0xff]
        %v221 = vld [vmem:[%s187 + $0x50] sm:$0xff]
        %v222 = vld [vmem:[%s187 + $0x58] sm:$0xff]
        %v223 = vld [vmem:[%s187 + $0x60] sm:$0xff]
        %v224 = vld [vmem:[%s187 + $0x68] sm:$0xff]
        %v225 = vld [vmem:[%s187 + $0x70] sm:$0xff]
        %v226 = vld [vmem:[%s187 + $0x78] sm:$0xff]
        %v227 = vld [vmem:[%s187 + $0x80] sm:$0xff]
        %v228 = vld [vmem:[%s187 + $0x88] sm:$0xff]
        %v229 = vld [vmem:[%s187 + $0x90] sm:$0xff]
        %v230 = vld [vmem:[%s187 + $0x98] sm:$0xff]
        %v231 = vld [vmem:[%s187 + $0xa0] sm:$0xff]
        %v232 = vld [vmem:[%s187 + $0xa8] sm:$0xff]
        %v233 = vld [vmem:[%s187 + $0xb0] sm:$0xff]
        %v234 = vld [vmem:[%s187 + $0xb8] sm:$0xff]
        %v235 = vld [vmem:[%s1] sm:$0xff]
        %v236 = vld [vmem:[%s1 + $0x8] sm:$0xff]
        %v237 = vld [vmem:[%s1 + $0x10] sm:$0xff]
        %v238 = vld [vmem:[%s1 + $0x18] sm:$0xff]
        %v239 = vld [vmem:[%s1 + $0x20] sm:$0xf]
        %v240 = vld [vmem:[%s1 + $0x24] sm:$0xff]
        %v241 = vld [vmem:[%s1 + $0x2c] sm:$0xff]
        %v242 = vld [vmem:[%s1 + $0x34] sm:$0xff]
        %v243 = vld [vmem:[%s1 + $0x3c] sm:$0xff]
        %v244 = vld [vmem:[%s1 + $0x44] sm:$0xf]
        %v245 = vld [vmem:[%s1 + $0x48] sm:$0xff]
        %v246 = vld [vmem:[%s1 + $0x50] sm:$0xff]
        %v247 = vld [vmem:[%s1 + $0x58] sm:$0xff]
        %v248 = vld [vmem:[%s1 + $0x60] sm:$0xff]
        %v249 = vld [vmem:[%s1 + $0x68] sm:$0xf]
        %v250 = vld [vmem:[%s1 + $0x6c] sm:$0xff]
        %v251 = vld [vmem:[%s1 + $0x74] sm:$0xff]
        %v252 = vld [vmem:[%s1 + $0x7c] sm:$0xff]
        %v253 = vld [vmem:[%s1 + $0x84] sm:$0xff]
        %v254 = vld [vmem:[%s1 + $0x8c] sm:$0xf]
        %v255 = vld [vmem:[%s1 + $0x90] sm:$0xff]
        %v256 = vld [vmem:[%s1 + $0x98] sm:$0xff]
        %v257 = vld [vmem:[%s1 + $0xa0] sm:$0xff]
        %v258 = vld [vmem:[%s1 + $0xa8] sm:$0xff]
        %v259 = vld [vmem:[%s1 + $0xb0] sm:$0xf]
        %v260 = vld [vmem:[%s1 + $0xb4] sm:$0xff]
        %v261 = vld [vmem:[%s1 + $0xbc] sm:$0xff]
        %v262 = vld [vmem:[%s1 + $0xc4] sm:$0xff]
        %v263 = vld [vmem:[%s1 + $0xcc] sm:$0xff]
        %v264 = vld [vmem:[%s1 + $0xd4] sm:$0xf]
        %v265 = vld [vmem:[%s1 + $0xd8] sm:$0xff]
        %v266 = vld [vmem:[%s1 + $0xe0] sm:$0xff]
        %v267 = vld [vmem:[%s1 + $0xe8] sm:$0xff]
        %v268 = vld [vmem:[%s1 + $0xf0] sm:$0xff]
        %v269 = vld [vmem:[%s1 + $0xf8] sm:$0xf]
        %v270 = vld [vmem:[%s1 + $0xfc] sm:$0xff]
        %v271 = vld [vmem:[%s1 + $0x104] sm:$0xff]
        %v272 = vld [vmem:[%s1 + $0x10c] sm:$0xff]
        %v273 = vld [vmem:[%s1 + $0x114] sm:$0xff]
        %v274 = vld [vmem:[%s1 + $0x11c] sm:$0xf]
        %v275 = vld [vmem:[%s1 + $0x120] sm:$0xff]
        %v276 = vld [vmem:[%s1 + $0x128] sm:$0xff]
        %v277 = vld [vmem:[%s1 + $0x130] sm:$0xff]
        %v278 = vld [vmem:[%s1 + $0x138] sm:$0xff]
        %v279 = vld [vmem:[%s1 + $0x140] sm:$0xf]
        %v280 = vld [vmem:[%s1 + $0x144] sm:$0xff]
        %v281 = vld [vmem:[%s1 + $0x14c] sm:$0xff]
        %v282 = vld [vmem:[%s1 + $0x154] sm:$0xff]
        %v283 = vld [vmem:[%s1 + $0x15c] sm:$0xff]
        %v284 = vld [vmem:[%s1 + $0x164] sm:$0xf]
        %v285 = vld [vmem:[%s1 + $0x168] sm:$0xff]
        %v286 = vld [vmem:[%s1 + $0x170] sm:$0xff]
        %v287 = vld [vmem:[%s1 + $0x178] sm:$0xff]
        %v288 = vld [vmem:[%s1 + $0x180] sm:$0xff]
        %v289 = vld [vmem:[%s1 + $0x188] sm:$0xf]
        %v290 = vld [vmem:[%s1 + $0x18c] sm:$0xff]
        %v291 = vld [vmem:[%s1 + $0x194] sm:$0xff]
        %v292 = vld [vmem:[%s1 + $0x19c] sm:$0xff]
        %v293 = vld [vmem:[%s1 + $0x1a4] sm:$0xff]
        %v294 = vld [vmem:[%s1 + $0x1ac] sm:$0xf]
        %v295 = vld [vmem:[%s1 + $0x1b0] sm:$0xff]
        %v296 = vld [vmem:[%s1 + $0x1b8] sm:$0xff]
        %v297 = vld [vmem:[%s1 + $0x1c0] sm:$0xff]
        %v298 = vld [vmem:[%s1 + $0x1c8] sm:$0xff]
        %v299 = vld [vmem:[%s1 + $0x1d0] sm:$0xf]
        %v300 = vld [vmem:[%s1 + $0x1d4] sm:$0xff]
        %v301 = vld [vmem:[%s1 + $0x1dc] sm:$0xff]
        %v302 = vld [vmem:[%s1 + $0x1e4] sm:$0xff]
        %v303 = vld [vmem:[%s1 + $0x1ec] sm:$0xff]
        %v304 = vld [vmem:[%s1 + $0x1f4] sm:$0xf]
        %v305 = vld [vmem:[%s1 + $0x1f8] sm:$0xff]
        %v306 = vld [vmem:[%s1 + $0x200] sm:$0xff]
        %v307 = vld [vmem:[%s1 + $0x208] sm:$0xff]
        %v308 = vld [vmem:[%s1 + $0x210] sm:$0xff]
        %v309 = vld [vmem:[%s1 + $0x218] sm:$0xf]
        %v310 = vld [vmem:[%s1 + $0x21c] sm:$0xff]
        %v311 = vld [vmem:[%s1 + $0x224] sm:$0xff]
        %v312 = vld [vmem:[%s1 + $0x22c] sm:$0xff]
        %v313 = vld [vmem:[%s1 + $0x234] sm:$0xff]
        %v314 = vld [vmem:[%s1 + $0x23c] sm:$0xf]
        %v315 = vld [vmem:[%s1 + $0x240] sm:$0xff]
        %v316 = vld [vmem:[%s1 + $0x248] sm:$0xff]
        %v317 = vld [vmem:[%s1 + $0x250] sm:$0xff]
        %v318 = vld [vmem:[%s1 + $0x258] sm:$0xff]
        %v319 = vld [vmem:[%s1 + $0x260] sm:$0xf]
        %v320 = vld [vmem:[%s1 + $0x264] sm:$0xff]
        %v321 = vld [vmem:[%s1 + $0x26c] sm:$0xff]
        %v322 = vld [vmem:[%s1 + $0x274] sm:$0xff]
        %v323 = vld [vmem:[%s1 + $0x27c] sm:$0xff]
        %v324 = vld [vmem:[%s1 + $0x284] sm:$0xf]
        %v325 = vld [vmem:[%s1 + $0x288] sm:$0xff]
        %v326 = vld [vmem:[%s1 + $0x290] sm:$0xff]
        %v327 = vld [vmem:[%s1 + $0x298] sm:$0xff]
        %v328 = vld [vmem:[%s1 + $0x2a0] sm:$0xff]
        %v329 = vld [vmem:[%s1 + $0x2a8] sm:$0xf]
        %v330 = vld [vmem:[%s1 + $0x2ac] sm:$0xff]
        %v331 = vld [vmem:[%s1 + $0x2b4] sm:$0xff]
        %v332 = vld [vmem:[%s1 + $0x2bc] sm:$0xff]
        %v333 = vld [vmem:[%s1 + $0x2c4] sm:$0xff]
        %v334 = vld [vmem:[%s1 + $0x2cc] sm:$0xf]
        %v335 = vld [vmem:[%s1 + $0x2d0] sm:$0xff]
        %v336 = vld [vmem:[%s1 + $0x2d8] sm:$0xff]
        %v337 = vld [vmem:[%s1 + $0x2e0] sm:$0xff]
        %v338 = vld [vmem:[%s1 + $0x2e8] sm:$0xff]
        %v339 = vld [vmem:[%s1 + $0x2f0] sm:$0xf]
        %v340 = vld [vmem:[%s1 + $0x2f4] sm:$0xff]
        %v341 = vld [vmem:[%s1 + $0x2fc] sm:$0xff]
        %v342 = vld [vmem:[%s1 + $0x304] sm:$0xff]
        %v343 = vld [vmem:[%s1 + $0x30c] sm:$0xff]
        %v344 = vld [vmem:[%s1 + $0x314] sm:$0xf]
        %v345 = vld [vmem:[%s1 + $0x318] sm:$0xff]
        %v346 = vld [vmem:[%s1 + $0x320] sm:$0xff]
        %v347 = vld [vmem:[%s1 + $0x328] sm:$0xff]
        %v348 = vld [vmem:[%s1 + $0x330] sm:$0xff]
        %v349 = vld [vmem:[%s1 + $0x338] sm:$0xf]
        %v350 = vld [vmem:[%s1 + $0x33c] sm:$0xff]
        %v351 = vld [vmem:[%s1 + $0x344] sm:$0xff]
        %v352 = vld [vmem:[%s1 + $0x34c] sm:$0xff]
        %v353 = vld [vmem:[%s1 + $0x354] sm:$0xff]
        %v354 = vld [vmem:[%s1 + $0x35c] sm:$0xf]
        %v355 = vld [vmem:[%s1 + $0x360] sm:$0xff]
        %v356 = vld [vmem:[%s1 + $0x368] sm:$0xff]
        %v357 = vld [vmem:[%s1 + $0x370] sm:$0xff]
        %v358 = vld [vmem:[%s1 + $0x378] sm:$0xff]
        %v359 = vld [vmem:[%s1 + $0x380] sm:$0xf]
        %v360 = vld [vmem:[%s1 + $0x384] sm:$0xff]
        %v361 = vld [vmem:[%s1 + $0x38c] sm:$0xff]
        %v362 = vld [vmem:[%s1 + $0x394] sm:$0xff]
        %v363 = vld [vmem:[%s1 + $0x39c] sm:$0xff]
        %v364 = vld [vmem:[%s1 + $0x3a4] sm:$0xf]
        %v365 = vld [vmem:[%s1 + $0x3a8] sm:$0xff]
        %v366 = vld [vmem:[%s1 + $0x3b0] sm:$0xff]
        %v367 = vld [vmem:[%s1 + $0x3b8] sm:$0xff]
        %v368 = vld [vmem:[%s1 + $0x3c0] sm:$0xff]
        %v369 = vld [vmem:[%s1 + $0x3c8] sm:$0xf]
        %v370 = vld [vmem:[%s1 + $0x3cc] sm:$0xff]
        %v371 = vld [vmem:[%s1 + $0x3d4] sm:$0xff]
        %v372 = vld [vmem:[%s1 + $0x3dc] sm:$0xff]
        %v373 = vld [vmem:[%s1 + $0x3e4] sm:$0xff]
        %v374 = vld [vmem:[%s1 + $0x3ec] sm:$0xf]
        %v375 = vld [vmem:[%s1 + $0x3f0] sm:$0xff]
        %v376 = vld [vmem:[%s1 + $0x3f8] sm:$0xff]
        %v377 = vld [vmem:[%s1 + $0x400] sm:$0xff]
        %v378 = vld [vmem:[%s1 + $0x408] sm:$0xff]
        %v379 = vld [vmem:[%s1 + $0x410] sm:$0xf]
        %v380 = vld [vmem:[%s1 + $0x414] sm:$0xff]
        %v381 = vld [vmem:[%s1 + $0x41c] sm:$0xff]
        %v382 = vld [vmem:[%s1 + $0x424] sm:$0xff]
        %v383 = vld [vmem:[%s1 + $0x42c] sm:$0xff]
        %v384 = vld [vmem:[%s1 + $0x434] sm:$0xf]
        %v385 = vld [vmem:[%s1 + $0x438] sm:$0xff]
        %v386 = vld [vmem:[%s1 + $0x440] sm:$0xff]
        %v387 = vld [vmem:[%s1 + $0x448] sm:$0xff]
        %v388 = vld [vmem:[%s1 + $0x450] sm:$0xff]
        %v389 = vld [vmem:[%s1 + $0x458] sm:$0xf]
        %v390 = vld [vmem:[%s1 + $0x45c] sm:$0xff]
        %v391 = vld [vmem:[%s1 + $0x464] sm:$0xff]
        %v392 = vld [vmem:[%s1 + $0x46c] sm:$0xff]
        %v393 = vld [vmem:[%s1 + $0x474] sm:$0xff]
        %v394 = vld [vmem:[%s1 + $0x47c] sm:$0xf]
        %v395 = vld [vmem:[%s1 + $0x480] sm:$0xff]
        %v396 = vld [vmem:[%s1 + $0x488] sm:$0xff]
        %v397 = vld [vmem:[%s1 + $0x490] sm:$0xff]
        %v398 = vld [vmem:[%s1 + $0x498] sm:$0xff]
        %v399 = vld [vmem:[%s1 + $0x4a0] sm:$0xf]
        %v400 = vld [vmem:[%s1 + $0x4a4] sm:$0xff]
        %v401 = vld [vmem:[%s1 + $0x4ac] sm:$0xff]
        %v402 = vld [vmem:[%s1 + $0x4b4] sm:$0xff]
        %v403 = vld [vmem:[%s1 + $0x4bc] sm:$0xff]
        %v404 = vld [vmem:[%s1 + $0x4c4] sm:$0xf]
        %v405 = vld [vmem:[%s1 + $0x4c8] sm:$0xff]
        %v406 = vld [vmem:[%s1 + $0x4d0] sm:$0xff]
        %v407 = vld [vmem:[%s1 + $0x4d8] sm:$0xff]
        %v408 = vld [vmem:[%s1 + $0x4e0] sm:$0xff]
        %v409 = vld [vmem:[%s1 + $0x4e8] sm:$0xf]
        %v410 = vld [vmem:[%s1 + $0x4ec] sm:$0xff]
        %v411 = vld [vmem:[%s1 + $0x4f4] sm:$0xff]
        %v412 = vld [vmem:[%s1 + $0x4fc] sm:$0xff]
        %v413 = vld [vmem:[%s1 + $0x504] sm:$0xff]
        %v414 = vld [vmem:[%s1 + $0x50c] sm:$0xf]
        %v415 = vld [vmem:[%s1 + $0x510] sm:$0xff]
        %v416 = vld [vmem:[%s1 + $0x518] sm:$0xff]
        %v417 = vld [vmem:[%s1 + $0x520] sm:$0xff]
        %v418 = vld [vmem:[%s1 + $0x528] sm:$0xff]
        %v419 = vld [vmem:[%s1 + $0x530] sm:$0xf]
        %v420 = vld [vmem:[%s1 + $0x534] sm:$0xff]
        %v421 = vld [vmem:[%s1 + $0x53c] sm:$0xff]
        %v422 = vld [vmem:[%s1 + $0x544] sm:$0xff]
        %v423 = vld [vmem:[%s1 + $0x54c] sm:$0xff]
        %v424 = vld [vmem:[%s1 + $0x554] sm:$0xf]
        %v425 = vld [vmem:[%s1 + $0x558] sm:$0xff]
        %v426 = vld [vmem:[%s1 + $0x560] sm:$0xff]
        %v427 = vld [vmem:[%s1 + $0x568] sm:$0xff]
        %v428 = vld [vmem:[%s1 + $0x570] sm:$0xff]
        %v429 = vld [vmem:[%s1 + $0x578] sm:$0xf]
        %v430 = vld [vmem:[%s1 + $0x57c] sm:$0xff]
        %v431 = vld [vmem:[%s1 + $0x584] sm:$0xff]
        %v432 = vld [vmem:[%s1 + $0x58c] sm:$0xff]
        %v433 = vld [vmem:[%s1 + $0x594] sm:$0xff]
        %v434 = vld [vmem:[%s1 + $0x59c] sm:$0xf]
        %v435 = vld [vmem:[%s1 + $0x5a0] sm:$0xff]
        %v436 = vld [vmem:[%s1 + $0x5a8] sm:$0xff]
        %v437 = vld [vmem:[%s1 + $0x5b0] sm:$0xff]
        %v438 = vld [vmem:[%s1 + $0x5b8] sm:$0xff]
        %v439 = vld [vmem:[%s1 + $0x5c0] sm:$0xf]
        %v440 = vld [vmem:[%s1 + $0x5c4] sm:$0xff]
        %v441 = vld [vmem:[%s1 + $0x5cc] sm:$0xff]
        %v442 = vld [vmem:[%s1 + $0x5d4] sm:$0xff]
        %v443 = vld [vmem:[%s1 + $0x5dc] sm:$0xff]
        %v444 = vld [vmem:[%s1 + $0x5e4] sm:$0xf]
        %v445 = vld [vmem:[%s1 + $0x5e8] sm:$0xff]
        %v446 = vld [vmem:[%s1 + $0x5f0] sm:$0xff]
        %v447 = vld [vmem:[%s1 + $0x5f8] sm:$0xff]
        %v448 = vld [vmem:[%s1 + $0x600] sm:$0xff]
        %v449 = vld [vmem:[%s1 + $0x608] sm:$0xf]
        %v450 = vld [vmem:[%s1 + $0x60c] sm:$0xff]
        %v451 = vld [vmem:[%s1 + $0x614] sm:$0xff]
        %v452 = vld [vmem:[%s1 + $0x61c] sm:$0xff]
        %v453 = vld [vmem:[%s1 + $0x624] sm:$0xff]
        %v454 = vld [vmem:[%s1 + $0x62c] sm:$0xf]
        %v455 = vld [vmem:[%s1 + $0x630] sm:$0xff]
        %v456 = vld [vmem:[%s1 + $0x638] sm:$0xff]
        %v457 = vld [vmem:[%s1 + $0x640] sm:$0xff]
        %v458 = vld [vmem:[%s1 + $0x648] sm:$0xff]
        %v459 = vld [vmem:[%s1 + $0x650] sm:$0xf]
        %v460 = vld [vmem:[%s1 + $0x654] sm:$0xff]
        %v461 = vld [vmem:[%s1 + $0x65c] sm:$0xff]
        %v462 = vld [vmem:[%s1 + $0x664] sm:$0xff]
        %v463 = vld [vmem:[%s1 + $0x66c] sm:$0xff]
        %v464 = vld [vmem:[%s1 + $0x674] sm:$0xf]
        %v465 = vld [vmem:[%s1 + $0x678] sm:$0xff]
        %v466 = vld [vmem:[%s1 + $0x680] sm:$0xff]
        %v467 = vld [vmem:[%s1 + $0x688] sm:$0xff]
        %v468 = vld [vmem:[%s1 + $0x690] sm:$0xff]
        %v469 = vld [vmem:[%s1 + $0x698] sm:$0xf]
        %v470 = vld [vmem:[%s1 + $0x69c] sm:$0xff]
        %v471 = vld [vmem:[%s1 + $0x6a4] sm:$0xff]
        %v472 = vld [vmem:[%s1 + $0x6ac] sm:$0xff]
        %v473 = vld [vmem:[%s1 + $0x6b4] sm:$0xff]
        %v474 = vld [vmem:[%s1 + $0x6bc] sm:$0xf]
        %v475 = vld [vmem:[%s1 + $0x6c0] sm:$0xff]
        %v476 = vld [vmem:[%s1 + $0x6c8] sm:$0xff]
        %v477 = vld [vmem:[%s1 + $0x6d0] sm:$0xff]
        %v478 = vld [vmem:[%s1 + $0x6d8] sm:$0xff]
        %v479 = vld [vmem:[%s1 + $0x6e0] sm:$0xf]
        %v480 = vld [vmem:[%s1 + $0x6e4] sm:$0xff]
        %v481 = vld [vmem:[%s1 + $0x6ec] sm:$0xff]
        %v482 = vld [vmem:[%s1 + $0x6f4] sm:$0xff]
        %v483 = vld [vmem:[%s1 + $0x6fc] sm:$0xff]
        %v484 = vld [vmem:[%s1 + $0x704] sm:$0xf]
        %v485 = vld [vmem:[%s1 + $0x708] sm:$0xff]
        %v486 = vld [vmem:[%s1 + $0x710] sm:$0xff]
        %v487 = vld [vmem:[%s1 + $0x718] sm:$0xff]
        %v488 = vld [vmem:[%s1 + $0x720] sm:$0xff]
        %v489 = vld [vmem:[%s1 + $0x728] sm:$0xf]
        %v490 = vld [vmem:[%s1 + $0x72c] sm:$0xff]
        %v491 = vld [vmem:[%s1 + $0x734] sm:$0xff]
        %v492 = vld [vmem:[%s1 + $0x73c] sm:$0xff]
        %v493 = vld [vmem:[%s1 + $0x744] sm:$0xff]
        %v494 = vld [vmem:[%s1 + $0x74c] sm:$0xf]
        %v495 = vld [vmem:[%s1 + $0x750] sm:$0xff]
        %v496 = vld [vmem:[%s1 + $0x758] sm:$0xff]
        %v497 = vld [vmem:[%s1 + $0x760] sm:$0xff]
        %v498 = vld [vmem:[%s1 + $0x768] sm:$0xff]
        %v499 = vld [vmem:[%s1 + $0x770] sm:$0xf]
        %v500 = vld [vmem:[%s1 + $0x774] sm:$0xff]
        %v501 = vld [vmem:[%s1 + $0x77c] sm:$0xff]
        %v502 = vld [vmem:[%s1 + $0x784] sm:$0xff]
        %v503 = vld [vmem:[%s1 + $0x78c] sm:$0xff]
        %v504 = vld [vmem:[%s1 + $0x794] sm:$0xf]
        %v505 = vld [vmem:[%s1 + $0x798] sm:$0xff]
        %v506 = vld [vmem:[%s1 + $0x7a0] sm:$0xff]
        %v507 = vld [vmem:[%s1 + $0x7a8] sm:$0xff]
        %v508 = vld [vmem:[%s1 + $0x7b0] sm:$0xff]
        %v509 = vld [vmem:[%s1 + $0x7b8] sm:$0xf]
        %v510 = vld [vmem:[%s1 + $0x7bc] sm:$0xff]
        %v511 = vld [vmem:[%s1 + $0x7c4] sm:$0xff]
        %v512 = vld [vmem:[%s1 + $0x7cc] sm:$0xff]
        %v513 = vld [vmem:[%s1 + $0x7d4] sm:$0xff]
        %v514 = vld [vmem:[%s1 + $0x7dc] sm:$0xf]
        %v515 = vld [vmem:[%s1 + $0x7e0] sm:$0xff]
        %v516 = vld [vmem:[%s1 + $0x7e8] sm:$0xff]
        %v517 = vld [vmem:[%s1 + $0x7f0] sm:$0xff]
        %v518 = vld [vmem:[%s1 + $0x7f8] sm:$0xff]
        %v519 = vld [vmem:[%s1 + $0x800] sm:$0xf]
        %v520 = vld [vmem:[%s1 + $0x804] sm:$0xff]
        %v521 = vld [vmem:[%s1 + $0x80c] sm:$0xff]
        %v522 = vld [vmem:[%s1 + $0x814] sm:$0xff]
        %v523 = vld [vmem:[%s1 + $0x81c] sm:$0xff]
        %v524 = vld [vmem:[%s1 + $0x824] sm:$0xf]
        %v525 = vld [vmem:[%s1 + $0x828] sm:$0xff]
        %v526 = vld [vmem:[%s1 + $0x830] sm:$0xff]
        %v527 = vld [vmem:[%s1 + $0x838] sm:$0xff]
        %v528 = vld [vmem:[%s1 + $0x840] sm:$0xff]
        %v529 = vld [vmem:[%s1 + $0x848] sm:$0xf]
        %v530 = vld [vmem:[%s1 + $0x84c] sm:$0xff]
        %v531 = vld [vmem:[%s1 + $0x854] sm:$0xff]
        %v532 = vld [vmem:[%s1 + $0x85c] sm:$0xff]
        %v533 = vld [vmem:[%s1 + $0x864] sm:$0xff]
        %v534 = vld [vmem:[%s1 + $0x86c] sm:$0xf]
        %v535 = vld [vmem:[%s1 + $0x870] sm:$0xff]
        %v536 = vld [vmem:[%s1 + $0x878] sm:$0xff]
        %v537 = vld [vmem:[%s1 + $0x880] sm:$0xff]
        %v538 = vld [vmem:[%s1 + $0x888] sm:$0xff]
        %v539 = vld [vmem:[%s1 + $0x890] sm:$0xf]
        %v540 = vld [vmem:[%s1 + $0x894] sm:$0xff]
        %v541 = vld [vmem:[%s1 + $0x89c] sm:$0xff]
        %v542 = vld [vmem:[%s1 + $0x8a4] sm:$0xff]
        %v543 = vld [vmem:[%s1 + $0x8ac] sm:$0xff]
        %v544 = vld [vmem:[%s1 + $0x8b4] sm:$0xf]
        %v545 = vld [vmem:[%s1 + $0x8b8] sm:$0xff]
        %v546 = vld [vmem:[%s1 + $0x8c0] sm:$0xff]
        %v547 = vld [vmem:[%s1 + $0x8c8] sm:$0xff]
        %v548 = vld [vmem:[%s1 + $0x8d0] sm:$0xff]
        %v549 = vld [vmem:[%s1 + $0x8d8] sm:$0xf]
        %v550 = vld [vmem:[%s1 + $0x8dc] sm:$0xff]
        %v551 = vld [vmem:[%s1 + $0x8e4] sm:$0xff]
        %v552 = vld [vmem:[%s1 + $0x8ec] sm:$0xff]
        %v553 = vld [vmem:[%s1 + $0x8f4] sm:$0xff]
        %v554 = vld [vmem:[%s1 + $0x8fc] sm:$0xf]
        %v555 = vld [vmem:[%s1 + $0x900] sm:$0xff]
        %v556 = vld [vmem:[%s1 + $0x908] sm:$0xff]
        %v557 = vld [vmem:[%s1 + $0x910] sm:$0xff]
        %v558 = vld [vmem:[%s1 + $0x918] sm:$0xff]
        %v559 = vld [vmem:[%s1 + $0x920] sm:$0xf]
        %v560 = vld [vmem:[%s1 + $0x924] sm:$0xff]
        %v561 = vld [vmem:[%s1 + $0x92c] sm:$0xff]
        %v562 = vld [vmem:[%s1 + $0x934] sm:$0xff]
        %v563 = vld [vmem:[%s1 + $0x93c] sm:$0xff]
        %v564 = vld [vmem:[%s1 + $0x944] sm:$0xf]
        %v565 = vld [vmem:[%s1 + $0x948] sm:$0xff]
        %v566 = vld [vmem:[%s1 + $0x950] sm:$0xff]
        %v567 = vld [vmem:[%s1 + $0x958] sm:$0xff]
        %v568 = vld [vmem:[%s1 + $0x960] sm:$0xff]
        %v569 = vld [vmem:[%s1 + $0x968] sm:$0xf]
        %v570 = vld [vmem:[%s1 + $0x96c] sm:$0xff]
        %v571 = vld [vmem:[%s1 + $0x974] sm:$0xff]
        %v572 = vld [vmem:[%s1 + $0x97c] sm:$0xff]
        %v573 = vld [vmem:[%s1 + $0x984] sm:$0xff]
        %v574 = vld [vmem:[%s1 + $0x98c] sm:$0xf]
        %v575 = vld [vmem:[%s1 + $0x990] sm:$0xff]
        %v576 = vld [vmem:[%s1 + $0x998] sm:$0xff]
        %v577 = vld [vmem:[%s1 + $0x9a0] sm:$0xff]
        %v578 = vld [vmem:[%s1 + $0x9a8] sm:$0xff]
        %v579 = vld [vmem:[%s1 + $0x9b0] sm:$0xf]
        %v580 = vld [vmem:[%s1 + $0x9b4] sm:$0xff]
        %v581 = vld [vmem:[%s1 + $0x9bc] sm:$0xff]
        %v582 = vld [vmem:[%s1 + $0x9c4] sm:$0xff]
        %v583 = vld [vmem:[%s1 + $0x9cc] sm:$0xff]
        %v584 = vld [vmem:[%s1 + $0x9d4] sm:$0xf]
        %v585 = vld [vmem:[%s1 + $0x9d8] sm:$0xff]
        %v586 = vld [vmem:[%s1 + $0x9e0] sm:$0xff]
        %v587 = vld [vmem:[%s1 + $0x9e8] sm:$0xff]
        %v588 = vld [vmem:[%s1 + $0x9f0] sm:$0xff]
        %v589 = vld [vmem:[%s1 + $0x9f8] sm:$0xf]
        %v590 = vld [vmem:[%s1 + $0x9fc] sm:$0xff]
        %v591 = vld [vmem:[%s1 + $0xa04] sm:$0xff]
        %v592 = vld [vmem:[%s1 + $0xa0c] sm:$0xff]
        %v593 = vld [vmem:[%s1 + $0xa14] sm:$0xff]
        %v594 = vld [vmem:[%s1 + $0xa1c] sm:$0xf]
        %v595 = vld [vmem:[%s1 + $0xa20] sm:$0xff]
        %v596 = vld [vmem:[%s1 + $0xa28] sm:$0xff]
        %v597 = vld [vmem:[%s1 + $0xa30] sm:$0xff]
        %v598 = vld [vmem:[%s1 + $0xa38] sm:$0xff]
        %v599 = vld [vmem:[%s1 + $0xa40] sm:$0xf]
        %v600 = vld [vmem:[%s1 + $0xa44] sm:$0xff]
        %v601 = vld [vmem:[%s1 + $0xa4c] sm:$0xff]
        %v602 = vld [vmem:[%s1 + $0xa54] sm:$0xff]
        %v603 = vld [vmem:[%s1 + $0xa5c] sm:$0xff]
        %v604 = vld [vmem:[%s1 + $0xa64] sm:$0xf]
        %v605 = vld [vmem:[%s1 + $0xa68] sm:$0xff]
        %v606 = vld [vmem:[%s1 + $0xa70] sm:$0xff]
        %v607 = vld [vmem:[%s1 + $0xa78] sm:$0xff]
        %v608 = vld [vmem:[%s1 + $0xa80] sm:$0xff]
        %v609 = vld [vmem:[%s1 + $0xa88] sm:$0xf]
        %v610 = vld [vmem:[%s1 + $0xa8c] sm:$0xff]
        %v611 = vld [vmem:[%s1 + $0xa94] sm:$0xff]
        %v612 = vld [vmem:[%s1 + $0xa9c] sm:$0xff]
        %v613 = vld [vmem:[%s1 + $0xaa4] sm:$0xff]
        %v614 = vld [vmem:[%s1 + $0xaac] sm:$0xf]
        %v615 = vld [vmem:[%s1 + $0xab0] sm:$0xff]
        %v616 = vld [vmem:[%s1 + $0xab8] sm:$0xff]
        %v617 = vld [vmem:[%s1 + $0xac0] sm:$0xff]
        %v618 = vld [vmem:[%s1 + $0xac8] sm:$0xff]
        %v619 = vld [vmem:[%s1 + $0xad0] sm:$0xf]
        %v620 = vld [vmem:[%s1 + $0xad4] sm:$0xff]
        %v621 = vld [vmem:[%s1 + $0xadc] sm:$0xff]
        %v622 = vld [vmem:[%s1 + $0xae4] sm:$0xff]
        %v623 = vld [vmem:[%s1 + $0xaec] sm:$0xff]
        %v624 = vld [vmem:[%s1 + $0xaf4] sm:$0xf]
        %v625 = vld [vmem:[%s1 + $0xaf8] sm:$0xff]
        %v626 = vld [vmem:[%s1 + $0xb00] sm:$0xff]
        %v627 = vld [vmem:[%s1 + $0xb08] sm:$0xff]
        %v628 = vld [vmem:[%s1 + $0xb10] sm:$0xff]
        %v629 = vld [vmem:[%s1 + $0xb18] sm:$0xf]
        %v630 = vld [vmem:[%s1 + $0xb1c] sm:$0xff]
        %v631 = vld [vmem:[%s1 + $0xb24] sm:$0xff]
        %v632 = vld [vmem:[%s1 + $0xb2c] sm:$0xff]
        %v633 = vld [vmem:[%s1 + $0xb34] sm:$0xff]
        %v634 = vld [vmem:[%s1 + $0xb3c] sm:$0xf]
        %v635 = vld [vmem:[%s1 + $0xb40] sm:$0xff]
        %v636 = vld [vmem:[%s1 + $0xb48] sm:$0xff]
        %v637 = vld [vmem:[%s1 + $0xb50] sm:$0xff]
        %v638 = vld [vmem:[%s1 + $0xb58] sm:$0xff]
        %v639 = vld [vmem:[%s1 + $0xb60] sm:$0xf]
        %v640 = vld [vmem:[%s1 + $0xb64] sm:$0xff]
        %v641 = vld [vmem:[%s1 + $0xb6c] sm:$0xff]
        %v642 = vld [vmem:[%s1 + $0xb74] sm:$0xff]
        %v643 = vld [vmem:[%s1 + $0xb7c] sm:$0xff]
        %v644 = vld [vmem:[%s1 + $0xb84] sm:$0xf]
        %v645 = vld [vmem:[%s1 + $0xb88] sm:$0xff]
        %v646 = vld [vmem:[%s1 + $0xb90] sm:$0xff]
        %v647 = vld [vmem:[%s1 + $0xb98] sm:$0xff]
        %v648 = vld [vmem:[%s1 + $0xba0] sm:$0xff]
        %v649 = vld [vmem:[%s1 + $0xba8] sm:$0xf]
        %v650 = vld [vmem:[%s1 + $0xbac] sm:$0xff]
        %v651 = vld [vmem:[%s1 + $0xbb4] sm:$0xff]
        %v652 = vld [vmem:[%s1 + $0xbbc] sm:$0xff]
        %v653 = vld [vmem:[%s1 + $0xbc4] sm:$0xff]
        %v654 = vld [vmem:[%s1 + $0xbcc] sm:$0xf]
        %v655 = vld [vmem:[%s1 + $0xbd0] sm:$0xff]
        %v656 = vld [vmem:[%s1 + $0xbd8] sm:$0xff]
        %v657 = vld [vmem:[%s1 + $0xbe0] sm:$0xff]
        %v658 = vld [vmem:[%s1 + $0xbe8] sm:$0xff]
        %v659 = vld [vmem:[%s1 + $0xbf0] sm:$0xf]
        %v660 = vld [vmem:[%s1 + $0xbf4] sm:$0xff]
        %v661 = vld [vmem:[%s1 + $0xbfc] sm:$0xff]
        %v662 = vld [vmem:[%s1 + $0xc04] sm:$0xff]
        %v663 = vld [vmem:[%s1 + $0xc0c] sm:$0xff]
        %v664 = vld [vmem:[%s1 + $0xc14] sm:$0xf]
        %v665 = vld [vmem:[%s1 + $0xc18] sm:$0xff]
        %v666 = vld [vmem:[%s1 + $0xc20] sm:$0xff]
        %v667 = vld [vmem:[%s1 + $0xc28] sm:$0xff]
        %v668 = vld [vmem:[%s1 + $0xc30] sm:$0xff]
        %v669 = vld [vmem:[%s1 + $0xc38] sm:$0xf]
        %v670 = vld [vmem:[%s1 + $0xc3c] sm:$0xff]
        %v671 = vld [vmem:[%s1 + $0xc44] sm:$0xff]
        %v672 = vld [vmem:[%s1 + $0xc4c] sm:$0xff]
        %v673 = vld [vmem:[%s1 + $0xc54] sm:$0xff]
        %v674 = vld [vmem:[%s1 + $0xc5c] sm:$0xf]
        %v675 = vld [vmem:[%s1 + $0xc60] sm:$0xff]
        %v676 = vld [vmem:[%s1 + $0xc68] sm:$0xff]
        %v677 = vld [vmem:[%s1 + $0xc70] sm:$0xff]
        %v678 = vld [vmem:[%s1 + $0xc78] sm:$0xff]
        %v679 = vld [vmem:[%s1 + $0xc80] sm:$0xf]
        %v680 = vld [vmem:[%s1 + $0xc84] sm:$0xff]
        %v681 = vld [vmem:[%s1 + $0xc8c] sm:$0xff]
        %v682 = vld [vmem:[%s1 + $0xc94] sm:$0xff]
        %v683 = vld [vmem:[%s1 + $0xc9c] sm:$0xff]
        %v684 = vld [vmem:[%s1 + $0xca4] sm:$0xf]
        %v685 = vld [vmem:[%s1 + $0xca8] sm:$0xff]
        %v686 = vld [vmem:[%s1 + $0xcb0] sm:$0xff]
        %v687 = vld [vmem:[%s1 + $0xcb8] sm:$0xff]
        %v688 = vld [vmem:[%s1 + $0xcc0] sm:$0xff]
        %v689 = vld [vmem:[%s1 + $0xcc8] sm:$0xf]
        %v690 = vld [vmem:[%s1 + $0xccc] sm:$0xff]
        %v691 = vld [vmem:[%s1 + $0xcd4] sm:$0xff]
        %v692 = vld [vmem:[%s1 + $0xcdc] sm:$0xff]
        %v693 = vld [vmem:[%s1 + $0xce4] sm:$0xff]
        %v694 = vld [vmem:[%s1 + $0xcec] sm:$0xf]
        %v695 = vld [vmem:[%s1 + $0xcf0] sm:$0xff]
        %v696 = vld [vmem:[%s1 + $0xcf8] sm:$0xff]
        %v697 = vld [vmem:[%s1 + $0xd00] sm:$0xff]
        %v698 = vld [vmem:[%s1 + $0xd08] sm:$0xff]
        %v699 = vld [vmem:[%s1 + $0xd10] sm:$0xf]
        %v700 = vld [vmem:[%s1 + $0xd14] sm:$0xff]
        %v701 = vld [vmem:[%s1 + $0xd1c] sm:$0xff]
        %v702 = vld [vmem:[%s1 + $0xd24] sm:$0xff]
        %v703 = vld [vmem:[%s1 + $0xd2c] sm:$0xff]
        %v704 = vld [vmem:[%s1 + $0xd34] sm:$0xf]
        %v705 = vld [vmem:[%s1 + $0xd38] sm:$0xff]
        %v706 = vld [vmem:[%s1 + $0xd40] sm:$0xff]
        %v707 = vld [vmem:[%s1 + $0xd48] sm:$0xff]
        %v708 = vld [vmem:[%s1 + $0xd50] sm:$0xff]
        %v709 = vld [vmem:[%s1 + $0xd58] sm:$0xf]
        %v710 = vld [vmem:[%s1 + $0xd5c] sm:$0xff]
        %v711 = vld [vmem:[%s1 + $0xd64] sm:$0xff]
        %v712 = vld [vmem:[%s1 + $0xd6c] sm:$0xff]
        %v713 = vld [vmem:[%s1 + $0xd74] sm:$0xff]
        %v714 = vld [vmem:[%s1 + $0xd7c] sm:$0xf]
        %v715 = vld [vmem:[%s1 + $0xd80] sm:$0xff]
        %v716 = vld [vmem:[%s1 + $0xd88] sm:$0xff]
        %v717 = vld [vmem:[%s1 + $0xd90] sm:$0xff]
        %v718 = vld [vmem:[%s1 + $0xd98] sm:$0xff]
        %v719 = vld [vmem:[%s1 + $0xda0] sm:$0xf]
        %v720 = vld [vmem:[%s1 + $0xda4] sm:$0xff]
        %v721 = vld [vmem:[%s1 + $0xdac] sm:$0xff]
        %v722 = vld [vmem:[%s1 + $0xdb4] sm:$0xff]
        %v723 = vld [vmem:[%s1 + $0xdbc] sm:$0xff]
        %v724 = vld [vmem:[%s1 + $0xdc4] sm:$0xf]
        %v725 = vld [vmem:[%s1 + $0xdc8] sm:$0xff]
        %v726 = vld [vmem:[%s1 + $0xdd0] sm:$0xff]
        %v727 = vld [vmem:[%s1 + $0xdd8] sm:$0xff]
        %v728 = vld [vmem:[%s1 + $0xde0] sm:$0xff]
        %v729 = vld [vmem:[%s1 + $0xde8] sm:$0xf]
        %v730 = vld [vmem:[%s1 + $0xdec] sm:$0xff]
        %v731 = vld [vmem:[%s1 + $0xdf4] sm:$0xff]
        %v732 = vld [vmem:[%s1 + $0xdfc] sm:$0xff]
        %v733 = vld [vmem:[%s1 + $0xe04] sm:$0xff]
        %v734 = vld [vmem:[%s1 + $0xe0c] sm:$0xf]
        %v735 = vld [vmem:[%s1 + $0xe10] sm:$0xff]
        %v736 = vld [vmem:[%s1 + $0xe18] sm:$0xff]
        %v737 = vld [vmem:[%s1 + $0xe20] sm:$0xff]
        %v738 = vld [vmem:[%s1 + $0xe28] sm:$0xff]
        %v739 = vld [vmem:[%s1 + $0xe30] sm:$0xf]
        %v740 = vld [vmem:[%s1 + $0xe34] sm:$0xff]
        %v741 = vld [vmem:[%s1 + $0xe3c] sm:$0xff]
        %v742 = vld [vmem:[%s1 + $0xe44] sm:$0xff]
        %v743 = vld [vmem:[%s1 + $0xe4c] sm:$0xff]
        %v744 = vld [vmem:[%s1 + $0xe54] sm:$0xf]
        %v745 = vld [vmem:[%s1 + $0xe58] sm:$0xff]
        %v746 = vld [vmem:[%s1 + $0xe60] sm:$0xff]
        %v747 = vld [vmem:[%s1 + $0xe68] sm:$0xff]
        %v748 = vld [vmem:[%s1 + $0xe70] sm:$0xff]
        %v749 = vld [vmem:[%s1 + $0xe78] sm:$0xf]
        %v750 = vld [vmem:[%s1 + $0xe7c] sm:$0xff]
        %v751 = vld [vmem:[%s1 + $0xe84] sm:$0xff]
        %v752 = vld [vmem:[%s1 + $0xe8c] sm:$0xff]
        %v753 = vld [vmem:[%s1 + $0xe94] sm:$0xff]
        %v754 = vld [vmem:[%s1 + $0xe9c] sm:$0xf]
        %v755 = vld [vmem:[%s1 + $0xea0] sm:$0xff]
        %v756 = vld [vmem:[%s1 + $0xea8] sm:$0xff]
        %v757 = vld [vmem:[%s1 + $0xeb0] sm:$0xff]
        %v758 = vld [vmem:[%s1 + $0xeb8] sm:$0xff]
        %v759 = vld [vmem:[%s1 + $0xec0] sm:$0xf]
        %v760 = vld [vmem:[%s1 + $0xec4] sm:$0xff]
        %v761 = vld [vmem:[%s1 + $0xecc] sm:$0xff]
        %v762 = vld [vmem:[%s1 + $0xed4] sm:$0xff]
        %v763 = vld [vmem:[%s1 + $0xedc] sm:$0xff]
        %v764 = vld [vmem:[%s1 + $0xee4] sm:$0xf]
        %v765 = vld [vmem:[%s1 + $0xee8] sm:$0xff]
        %v766 = vld [vmem:[%s1 + $0xef0] sm:$0xff]
        %v767 = vld [vmem:[%s1 + $0xef8] sm:$0xff]
        %v768 = vld [vmem:[%s1 + $0xf00] sm:$0xff]
        %v769 = vld [vmem:[%s1 + $0xf08] sm:$0xf]
        %v770 = vld [vmem:[%s1 + $0xf0c] sm:$0xff]
        %v771 = vld [vmem:[%s1 + $0xf14] sm:$0xff]
        %v772 = vld [vmem:[%s1 + $0xf1c] sm:$0xff]
        %v773 = vld [vmem:[%s1 + $0xf24] sm:$0xff]
        %v774 = vld [vmem:[%s1 + $0xf2c] sm:$0xf]
        %v775 = vld [vmem:[%s1 + $0xf30] sm:$0xff]
        %v776 = vld [vmem:[%s1 + $0xf38] sm:$0xff]
        %v777 = vld [vmem:[%s1 + $0xf40] sm:$0xff]
        %v778 = vld [vmem:[%s1 + $0xf48] sm:$0xff]
        %v779 = vld [vmem:[%s1 + $0xf50] sm:$0xf]
        %v780 = vld [vmem:[%s1 + $0xf54] sm:$0xff]
        %v781 = vld [vmem:[%s1 + $0xf5c] sm:$0xff]
        %v782 = vld [vmem:[%s1 + $0xf64] sm:$0xff]
        %v783 = vld [vmem:[%s1 + $0xf6c] sm:$0xff]
        %v784 = vld [vmem:[%s1 + $0xf74] sm:$0xf]
        %v785 = vld [vmem:[%s1 + $0xf78] sm:$0xff]
        %v786 = vld [vmem:[%s1 + $0xf80] sm:$0xff]
        %v787 = vld [vmem:[%s1 + $0xf88] sm:$0xff]
        %v788 = vld [vmem:[%s1 + $0xf90] sm:$0xff]
        %v789 = vld [vmem:[%s1 + $0xf98] sm:$0xf]
        %v790 = vld [vmem:[%s1 + $0xf9c] sm:$0xff]
        %v791 = vld [vmem:[%s1 + $0xfa4] sm:$0xff]
        %v792 = vld [vmem:[%s1 + $0xfac] sm:$0xff]
        %v793 = vld [vmem:[%s1 + $0xfb4] sm:$0xff]
        %v794 = vld [vmem:[%s1 + $0xfbc] sm:$0xf]
        %v795 = vld [vmem:[%s1 + $0xfc0] sm:$0xff]
        %v796 = vld [vmem:[%s1 + $0xfc8] sm:$0xff]
        %v797 = vld [vmem:[%s1 + $0xfd0] sm:$0xff]
        %v798 = vld [vmem:[%s1 + $0xfd8] sm:$0xff]
        %v799 = vld [vmem:[%s1 + $0xfe0] sm:$0xf]
        %v800 = vld [vmem:[%s1 + $0xfe4] sm:$0xff]
        %v801 = vld [vmem:[%s1 + $0xfec] sm:$0xff]
        %v802 = vld [vmem:[%s1 + $0xff4] sm:$0xff]
        %v803 = vld [vmem:[%s1 + $0xffc] sm:$0xff]
        %v804 = vld [vmem:[%s1 + $0x1004] sm:$0xf]
        %v805 = vld [vmem:[%s1 + $0x1008] sm:$0xff]
        %v806 = vld [vmem:[%s1 + $0x1010] sm:$0xff]
        %v807 = vld [vmem:[%s1 + $0x1018] sm:$0xff]
        %v808 = vld [vmem:[%s1 + $0x1020] sm:$0xff]
        %v809 = vld [vmem:[%s1 + $0x1028] sm:$0xf]
        %v810 = vld [vmem:[%s1 + $0x102c] sm:$0xff]
        %v811 = vld [vmem:[%s1 + $0x1034] sm:$0xff]
        %v812 = vld [vmem:[%s1 + $0x103c] sm:$0xff]
        %v813 = vld [vmem:[%s1 + $0x1044] sm:$0xff]
        %v814 = vld [vmem:[%s1 + $0x104c] sm:$0xf]
        %v815 = vld [vmem:[%s1 + $0x1050] sm:$0xff]
        %v816 = vld [vmem:[%s1 + $0x1058] sm:$0xff]
        %v817 = vld [vmem:[%s1 + $0x1060] sm:$0xff]
        %v818 = vld [vmem:[%s1 + $0x1068] sm:$0xff]
        %v819 = vld [vmem:[%s1 + $0x1070] sm:$0xf]
        %v820 = vld [vmem:[%s1 + $0x1074] sm:$0xff]
        %v821 = vld [vmem:[%s1 + $0x107c] sm:$0xff]
        %v822 = vld [vmem:[%s1 + $0x1084] sm:$0xff]
        %v823 = vld [vmem:[%s1 + $0x108c] sm:$0xff]
        %v824 = vld [vmem:[%s1 + $0x1094] sm:$0xf]
        %v825 = vld [vmem:[%s1 + $0x1098] sm:$0xff]
        %v826 = vld [vmem:[%s1 + $0x10a0] sm:$0xff]
        %v827 = vld [vmem:[%s1 + $0x10a8] sm:$0xff]
        %v828 = vld [vmem:[%s1 + $0x10b0] sm:$0xff]
        %v829 = vld [vmem:[%s1 + $0x10b8] sm:$0xf]
        %v830 = vld [vmem:[%s1 + $0x10bc] sm:$0xff]
        %v831 = vld [vmem:[%s1 + $0x10c4] sm:$0xff]
        %v832 = vld [vmem:[%s1 + $0x10cc] sm:$0xff]
        %v833 = vld [vmem:[%s1 + $0x10d4] sm:$0xff]
        %v834 = vld [vmem:[%s1 + $0x10dc] sm:$0xf]
        %v835 = vld [vmem:[%s1 + $0x10e0] sm:$0xff]
        %v836 = vld [vmem:[%s1 + $0x10e8] sm:$0xff]
        %v837 = vld [vmem:[%s1 + $0x10f0] sm:$0xff]
        %v838 = vld [vmem:[%s1 + $0x10f8] sm:$0xff]
        %v839 = vld [vmem:[%s1 + $0x1100] sm:$0xf]
        %v840 = vld [vmem:[%s1 + $0x1104] sm:$0xff]
        %v841 = vld [vmem:[%s1 + $0x110c] sm:$0xff]
        %v842 = vld [vmem:[%s1 + $0x1114] sm:$0xff]
        %v843 = vld [vmem:[%s1 + $0x111c] sm:$0xff]
        %v844 = vld [vmem:[%s1 + $0x1124] sm:$0xf]
        %v845 = vld [vmem:[%s1 + $0x1128] sm:$0xff]
        %v846 = vld [vmem:[%s1 + $0x1130] sm:$0xff]
        %v847 = vld [vmem:[%s1 + $0x1138] sm:$0xff]
        %v848 = vld [vmem:[%s1 + $0x1140] sm:$0xff]
        %v849 = vld [vmem:[%s1 + $0x1148] sm:$0xf]
        %v850 = vld [vmem:[%s1 + $0x114c] sm:$0xff]
        %v851 = vld [vmem:[%s1 + $0x1154] sm:$0xff]
        %v852 = vld [vmem:[%s1 + $0x115c] sm:$0xff]
        %v853 = vld [vmem:[%s1 + $0x1164] sm:$0xff]
        %v854 = vld [vmem:[%s1 + $0x116c] sm:$0xf]
        %v855 = vld [vmem:[%s1 + $0x1170] sm:$0xff]
        %v856 = vld [vmem:[%s1 + $0x1178] sm:$0xff]
        %v857 = vld [vmem:[%s1 + $0x1180] sm:$0xff]
        %v858 = vld [vmem:[%s1 + $0x1188] sm:$0xff]
        %v859 = vld [vmem:[%s1 + $0x1190] sm:$0xf]
        %v860 = vld [vmem:[%s1 + $0x1194] sm:$0xff]
        %v861 = vld [vmem:[%s1 + $0x119c] sm:$0xff]
        %v862 = vld [vmem:[%s1 + $0x11a4] sm:$0xff]
        %v863 = vld [vmem:[%s1 + $0x11ac] sm:$0xff]
        %v864 = vld [vmem:[%s1 + $0x11b4] sm:$0xf]
        %v865 = vld [vmem:[%s1 + $0x11b8] sm:$0xff]
        %v866 = vld [vmem:[%s1 + $0x11c0] sm:$0xff]
        %v867 = vld [vmem:[%s1 + $0x11c8] sm:$0xff]
        %v868 = vld [vmem:[%s1 + $0x11d0] sm:$0xff]
        %v869 = vld [vmem:[%s1 + $0x11d8] sm:$0xf]
        %v870 = vld [vmem:[%s1 + $0x11dc] sm:$0xff]
        %v871 = vld [vmem:[%s1 + $0x11e4] sm:$0xff]
        %v872 = vld [vmem:[%s1 + $0x11ec] sm:$0xff]
        %v873 = vld [vmem:[%s1 + $0x11f4] sm:$0xff]
        %v874 = vld [vmem:[%s1 + $0x11fc] sm:$0xf]
        %v899 = vunpack.c.l.b16 %v211
        %v900 = vunpack.c.h.b16 %v211
        %v901 = vunpack.c.l.b16 %v212
        %v902 = vunpack.c.h.b16 %v212
        %v903 = vunpack.c.l.b16 %v213
        %v904 = vunpack.c.h.b16 %v213
        %v905 = vunpack.c.l.b16 %v214
        %v906 = vunpack.c.h.b16 %v214
        %v907 = vunpack.c.l.b16 %v215
        %v908 = vunpack.c.h.b16 %v215
        %v909 = vunpack.c.l.b16 %v216
        %v910 = vunpack.c.h.b16 %v216
        %v911 = vunpack.c.l.b16 %v217
        %v912 = vunpack.c.h.b16 %v217
        %v913 = vunpack.c.l.b16 %v218
        %v914 = vunpack.c.h.b16 %v218
        %v915 = vunpack.c.l.b16 %v219
        %v916 = vunpack.c.h.b16 %v219
        %v917 = vunpack.c.l.b16 %v220
        %v918 = vunpack.c.h.b16 %v220
        %v919 = vunpack.c.l.b16 %v221
        %v920 = vunpack.c.h.b16 %v221
        %v921 = vunpack.c.l.b16 %v222
        %v922 = vunpack.c.h.b16 %v222
        %v923 = vunpack.c.l.b16 %v223
        %v924 = vunpack.c.h.b16 %v223
        %v925 = vunpack.c.l.b16 %v224
        %v926 = vunpack.c.h.b16 %v224
        %v927 = vunpack.c.l.b16 %v225
        %v928 = vunpack.c.h.b16 %v225
        %v929 = vunpack.c.l.b16 %v226
        %v930 = vunpack.c.h.b16 %v226
        %v931 = vunpack.c.l.b16 %v227
        %v932 = vunpack.c.h.b16 %v227
        %v933 = vunpack.c.l.b16 %v228
        %v934 = vunpack.c.h.b16 %v228
        %v935 = vunpack.c.l.b16 %v229
        %v936 = vunpack.c.h.b16 %v229
        %v937 = vunpack.c.l.b16 %v230
        %v938 = vunpack.c.h.b16 %v230
        %v939 = vunpack.c.l.b16 %v231
        %v940 = vunpack.c.h.b16 %v231
        %v941 = vunpack.c.l.b16 %v232
        %v942 = vunpack.c.h.b16 %v232
        %v943 = vunpack.c.l.b16 %v233
        %v944 = vunpack.c.h.b16 %v233
        %v945 = vunpack.c.l.b16 %v234
        %v946 = vunpack.c.h.b16 %v234
        %v947 = vpack.c.b16 %v907, %v899
        %v948 = vpack.c.b16 %v908, %v900
        %v949 = vpack.c.b16 %v909, %v901
        %v950 = vpack.c.b16 %v910, %v902
        %v951 = vpack.c.b16 %v911, %v903
        %v952 = vpack.c.b16 %v912, %v904
        %v953 = vpack.c.b16 %v913, %v905
        %v954 = vpack.c.b16 %v914, %v906
        %v955 = vpack.c.b16 %v923, %v915
        %v956 = vpack.c.b16 %v924, %v916
        %v957 = vpack.c.b16 %v925, %v917
        %v958 = vpack.c.b16 %v926, %v918
        %v959 = vpack.c.b16 %v927, %v919
        %v960 = vpack.c.b16 %v928, %v920
        %v961 = vpack.c.b16 %v929, %v921
        %v962 = vpack.c.b16 %v930, %v922
        %v963 = vpack.c.b16 %v939, %v931
        %v964 = vpack.c.b16 %v940, %v932
        %v965 = vpack.c.b16 %v941, %v933
        %v966 = vpack.c.b16 %v942, %v934
        %v967 = vpack.c.b16 %v943, %v935
        %v968 = vpack.c.b16 %v944, %v936
        %v969 = vpack.c.b16 %v945, %v937
        %v970 = vpack.c.b16 %v946, %v938
        %v1635 = vunpack.c.l.b16 %v235
        %v1636 = vunpack.c.h.b16 %v235
        %v1637 = vunpack.c.l.b16 %v236
        %v1638 = vunpack.c.h.b16 %v236
        %v1639 = vunpack.c.l.b16 %v237
        %v1640 = vunpack.c.h.b16 %v237
        %v1641 = vunpack.c.l.b16 %v238
        %v1642 = vunpack.c.h.b16 %v238
        %v1643 = vunpack.c.l.b16 %v239
        %v1644 = vunpack.c.l.b16 %v240
        %v1645 = vunpack.c.h.b16 %v240
        %v1646 = vunpack.c.l.b16 %v241
        %v1647 = vunpack.c.h.b16 %v241
        %v1648 = vunpack.c.l.b16 %v242
        %v1649 = vunpack.c.h.b16 %v242
        %v1650 = vunpack.c.l.b16 %v243
        %v1651 = vunpack.c.h.b16 %v243
        %v1652 = vunpack.c.l.b16 %v244
        %v1653 = vunpack.c.l.b16 %v245
        %v1654 = vunpack.c.h.b16 %v245
        %v1655 = vunpack.c.l.b16 %v246
        %v1656 = vunpack.c.h.b16 %v246
        %v1657 = vunpack.c.l.b16 %v247
        %v1658 = vunpack.c.h.b16 %v247
        %v1659 = vunpack.c.l.b16 %v248
        %v1660 = vunpack.c.h.b16 %v248
        %v1661 = vunpack.c.l.b16 %v249
        %v1662 = vunpack.c.l.b16 %v250
        %v1663 = vunpack.c.h.b16 %v250
        %v1664 = vunpack.c.l.b16 %v251
        %v1665 = vunpack.c.h.b16 %v251
        %v1666 = vunpack.c.l.b16 %v252
        %v1667 = vunpack.c.h.b16 %v252
        %v1668 = vunpack.c.l.b16 %v253
        %v1669 = vunpack.c.h.b16 %v253
        %v1670 = vunpack.c.l.b16 %v254
        %v1671 = vunpack.c.l.b16 %v255
        %v1672 = vunpack.c.h.b16 %v255
        %v1673 = vunpack.c.l.b16 %v256
        %v1674 = vunpack.c.h.b16 %v256
        %v1675 = vunpack.c.l.b16 %v257
        %v1676 = vunpack.c.h.b16 %v257
        %v1677 = vunpack.c.l.b16 %v258
        %v1678 = vunpack.c.h.b16 %v258
        %v1679 = vunpack.c.l.b16 %v259
        %v1680 = vunpack.c.l.b16 %v260
        %v1681 = vunpack.c.h.b16 %v260
        %v1682 = vunpack.c.l.b16 %v261
        %v1683 = vunpack.c.h.b16 %v261
        %v1684 = vunpack.c.l.b16 %v262
        %v1685 = vunpack.c.h.b16 %v262
        %v1686 = vunpack.c.l.b16 %v263
        %v1687 = vunpack.c.h.b16 %v263
        %v1688 = vunpack.c.l.b16 %v264
        %v1689 = vunpack.c.l.b16 %v265
        %v1690 = vunpack.c.h.b16 %v265
        %v1691 = vunpack.c.l.b16 %v266
        %v1692 = vunpack.c.h.b16 %v266
        %v1693 = vunpack.c.l.b16 %v267
        %v1694 = vunpack.c.h.b16 %v267
        %v1695 = vunpack.c.l.b16 %v268
        %v1696 = vunpack.c.h.b16 %v268
        %v1697 = vunpack.c.l.b16 %v269
        %v1698 = vunpack.c.l.b16 %v270
        %v1699 = vunpack.c.h.b16 %v270
        %v1700 = vunpack.c.l.b16 %v271
        %v1701 = vunpack.c.h.b16 %v271
        %v1702 = vunpack.c.l.b16 %v272
        %v1703 = vunpack.c.h.b16 %v272
        %v1704 = vunpack.c.l.b16 %v273
        %v1705 = vunpack.c.h.b16 %v273
        %v1706 = vunpack.c.l.b16 %v274
        %v1707 = vunpack.c.l.b16 %v275
        %v1708 = vunpack.c.h.b16 %v275
        %v1709 = vunpack.c.l.b16 %v276
        %v1710 = vunpack.c.h.b16 %v276
        %v1711 = vunpack.c.l.b16 %v277
        %v1712 = vunpack.c.h.b16 %v277
        %v1713 = vunpack.c.l.b16 %v278
        %v1714 = vunpack.c.h.b16 %v278
        %v1715 = vunpack.c.l.b16 %v279
        %v1716 = vunpack.c.l.b16 %v280
        %v1717 = vunpack.c.h.b16 %v280
        %v1718 = vunpack.c.l.b16 %v281
        %v1719 = vunpack.c.h.b16 %v281
        %v1720 = vunpack.c.l.b16 %v282
        %v1721 = vunpack.c.h.b16 %v282
        %v1722 = vunpack.c.l.b16 %v283
        %v1723 = vunpack.c.h.b16 %v283
        %v1724 = vunpack.c.l.b16 %v284
        %v1725 = vunpack.c.l.b16 %v285
        %v1726 = vunpack.c.h.b16 %v285
        %v1727 = vunpack.c.l.b16 %v286
        %v1728 = vunpack.c.h.b16 %v286
        %v1729 = vunpack.c.l.b16 %v287
        %v1730 = vunpack.c.h.b16 %v287
        %v1731 = vunpack.c.l.b16 %v288
        %v1732 = vunpack.c.h.b16 %v288
        %v1733 = vunpack.c.l.b16 %v289
        %v1734 = vunpack.c.l.b16 %v290
        %v1735 = vunpack.c.h.b16 %v290
        %v1736 = vunpack.c.l.b16 %v291
        %v1737 = vunpack.c.h.b16 %v291
        %v1738 = vunpack.c.l.b16 %v292
        %v1739 = vunpack.c.h.b16 %v292
        %v1740 = vunpack.c.l.b16 %v293
        %v1741 = vunpack.c.h.b16 %v293
        %v1742 = vunpack.c.l.b16 %v294
        %v1743 = vunpack.c.l.b16 %v295
        %v1744 = vunpack.c.h.b16 %v295
        %v1745 = vunpack.c.l.b16 %v296
        %v1746 = vunpack.c.h.b16 %v296
        %v1747 = vunpack.c.l.b16 %v297
        %v1748 = vunpack.c.h.b16 %v297
        %v1749 = vunpack.c.l.b16 %v298
        %v1750 = vunpack.c.h.b16 %v298
        %v1751 = vunpack.c.l.b16 %v299
        %v1752 = vunpack.c.l.b16 %v300
        %v1753 = vunpack.c.h.b16 %v300
        %v1754 = vunpack.c.l.b16 %v301
        %v1755 = vunpack.c.h.b16 %v301
        %v1756 = vunpack.c.l.b16 %v302
        %v1757 = vunpack.c.h.b16 %v302
        %v1758 = vunpack.c.l.b16 %v303
        %v1759 = vunpack.c.h.b16 %v303
        %v1760 = vunpack.c.l.b16 %v304
        %v1761 = vunpack.c.l.b16 %v305
        %v1762 = vunpack.c.h.b16 %v305
        %v1763 = vunpack.c.l.b16 %v306
        %v1764 = vunpack.c.h.b16 %v306
        %v1765 = vunpack.c.l.b16 %v307
        %v1766 = vunpack.c.h.b16 %v307
        %v1767 = vunpack.c.l.b16 %v308
        %v1768 = vunpack.c.h.b16 %v308
        %v1769 = vunpack.c.l.b16 %v309
        %v1770 = vunpack.c.l.b16 %v310
        %v1771 = vunpack.c.h.b16 %v310
        %v1772 = vunpack.c.l.b16 %v311
        %v1773 = vunpack.c.h.b16 %v311
        %v1774 = vunpack.c.l.b16 %v312
        %v1775 = vunpack.c.h.b16 %v312
        %v1776 = vunpack.c.l.b16 %v313
        %v1777 = vunpack.c.h.b16 %v313
        %v1778 = vunpack.c.l.b16 %v314
        %v1779 = vunpack.c.l.b16 %v315
        %v1780 = vunpack.c.h.b16 %v315
        %v1781 = vunpack.c.l.b16 %v316
        %v1782 = vunpack.c.h.b16 %v316
        %v1783 = vunpack.c.l.b16 %v317
        %v1784 = vunpack.c.h.b16 %v317
        %v1785 = vunpack.c.l.b16 %v318
        %v1786 = vunpack.c.h.b16 %v318
        %v1787 = vunpack.c.l.b16 %v319
        %v1788 = vunpack.c.l.b16 %v320
        %v1789 = vunpack.c.h.b16 %v320
        %v1790 = vunpack.c.l.b16 %v321
        %v1791 = vunpack.c.h.b16 %v321
        %v1792 = vunpack.c.l.b16 %v322
        %v1793 = vunpack.c.h.b16 %v322
        %v1794 = vunpack.c.l.b16 %v323
        %v1795 = vunpack.c.h.b16 %v323
        %v1796 = vunpack.c.l.b16 %v324
        %v1797 = vunpack.c.l.b16 %v325
        %v1798 = vunpack.c.h.b16 %v325
        %v1799 = vunpack.c.l.b16 %v326
        %v1800 = vunpack.c.h.b16 %v326
        %v1801 = vunpack.c.l.b16 %v327
        %v1802 = vunpack.c.h.b16 %v327
        %v1803 = vunpack.c.l.b16 %v328
        %v1804 = vunpack.c.h.b16 %v328
        %v1805 = vunpack.c.l.b16 %v329
        %v1806 = vunpack.c.l.b16 %v330
        %v1807 = vunpack.c.h.b16 %v330
        %v1808 = vunpack.c.l.b16 %v331
        %v1809 = vunpack.c.h.b16 %v331
        %v1810 = vunpack.c.l.b16 %v332
        %v1811 = vunpack.c.h.b16 %v332
        %v1812 = vunpack.c.l.b16 %v333
        %v1813 = vunpack.c.h.b16 %v333
        %v1814 = vunpack.c.l.b16 %v334
        %v1815 = vunpack.c.l.b16 %v335
        %v1816 = vunpack.c.h.b16 %v335
        %v1817 = vunpack.c.l.b16 %v336
        %v1818 = vunpack.c.h.b16 %v336
        %v1819 = vunpack.c.l.b16 %v337
        %v1820 = vunpack.c.h.b16 %v337
        %v1821 = vunpack.c.l.b16 %v338
        %v1822 = vunpack.c.h.b16 %v338
        %v1823 = vunpack.c.l.b16 %v339
        %v1824 = vunpack.c.l.b16 %v340
        %v1825 = vunpack.c.h.b16 %v340
        %v1826 = vunpack.c.l.b16 %v341
        %v1827 = vunpack.c.h.b16 %v341
        %v1828 = vunpack.c.l.b16 %v342
        %v1829 = vunpack.c.h.b16 %v342
        %v1830 = vunpack.c.l.b16 %v343
        %v1831 = vunpack.c.h.b16 %v343
        %v1832 = vunpack.c.l.b16 %v344
        %v1833 = vunpack.c.l.b16 %v345
        %v1834 = vunpack.c.h.b16 %v345
        %v1835 = vunpack.c.l.b16 %v346
        %v1836 = vunpack.c.h.b16 %v346
        %v1837 = vunpack.c.l.b16 %v347
        %v1838 = vunpack.c.h.b16 %v347
        %v1839 = vunpack.c.l.b16 %v348
        %v1840 = vunpack.c.h.b16 %v348
        %v1841 = vunpack.c.l.b16 %v349
        %v1842 = vunpack.c.l.b16 %v350
        %v1843 = vunpack.c.h.b16 %v350
        %v1844 = vunpack.c.l.b16 %v351
        %v1845 = vunpack.c.h.b16 %v351
        %v1846 = vunpack.c.l.b16 %v352
        %v1847 = vunpack.c.h.b16 %v352
        %v1848 = vunpack.c.l.b16 %v353
        %v1849 = vunpack.c.h.b16 %v353
        %v1850 = vunpack.c.l.b16 %v354
        %v1851 = vunpack.c.l.b16 %v355
        %v1852 = vunpack.c.h.b16 %v355
        %v1853 = vunpack.c.l.b16 %v356
        %v1854 = vunpack.c.h.b16 %v356
        %v1855 = vunpack.c.l.b16 %v357
        %v1856 = vunpack.c.h.b16 %v357
        %v1857 = vunpack.c.l.b16 %v358
        %v1858 = vunpack.c.h.b16 %v358
        %v1859 = vunpack.c.l.b16 %v359
        %v1860 = vunpack.c.l.b16 %v360
        %v1861 = vunpack.c.h.b16 %v360
        %v1862 = vunpack.c.l.b16 %v361
        %v1863 = vunpack.c.h.b16 %v361
        %v1864 = vunpack.c.l.b16 %v362
        %v1865 = vunpack.c.h.b16 %v362
        %v1866 = vunpack.c.l.b16 %v363
        %v1867 = vunpack.c.h.b16 %v363
        %v1868 = vunpack.c.l.b16 %v364
        %v1869 = vunpack.c.l.b16 %v365
        %v1870 = vunpack.c.h.b16 %v365
        %v1871 = vunpack.c.l.b16 %v366
        %v1872 = vunpack.c.h.b16 %v366
        %v1873 = vunpack.c.l.b16 %v367
        %v1874 = vunpack.c.h.b16 %v367
        %v1875 = vunpack.c.l.b16 %v368
        %v1876 = vunpack.c.h.b16 %v368
        %v1877 = vunpack.c.l.b16 %v369
        %v1878 = vunpack.c.l.b16 %v370
        %v1879 = vunpack.c.h.b16 %v370
        %v1880 = vunpack.c.l.b16 %v371
        %v1881 = vunpack.c.h.b16 %v371
        %v1882 = vunpack.c.l.b16 %v372
        %v1883 = vunpack.c.h.b16 %v372
        %v1884 = vunpack.c.l.b16 %v373
        %v1885 = vunpack.c.h.b16 %v373
        %v1886 = vunpack.c.l.b16 %v374
        %v1887 = vunpack.c.l.b16 %v375
        %v1888 = vunpack.c.h.b16 %v375
        %v1889 = vunpack.c.l.b16 %v376
        %v1890 = vunpack.c.h.b16 %v376
        %v1891 = vunpack.c.l.b16 %v377
        %v1892 = vunpack.c.h.b16 %v377
        %v1893 = vunpack.c.l.b16 %v378
        %v1894 = vunpack.c.h.b16 %v378
        %v1895 = vunpack.c.l.b16 %v379
        %v1896 = vunpack.c.l.b16 %v380
        %v1897 = vunpack.c.h.b16 %v380
        %v1898 = vunpack.c.l.b16 %v381
        %v1899 = vunpack.c.h.b16 %v381
        %v1900 = vunpack.c.l.b16 %v382
        %v1901 = vunpack.c.h.b16 %v382
        %v1902 = vunpack.c.l.b16 %v383
        %v1903 = vunpack.c.h.b16 %v383
        %v1904 = vunpack.c.l.b16 %v384
        %v1905 = vunpack.c.l.b16 %v385
        %v1906 = vunpack.c.h.b16 %v385
        %v1907 = vunpack.c.l.b16 %v386
        %v1908 = vunpack.c.h.b16 %v386
        %v1909 = vunpack.c.l.b16 %v387
        %v1910 = vunpack.c.h.b16 %v387
        %v1911 = vunpack.c.l.b16 %v388
        %v1912 = vunpack.c.h.b16 %v388
        %v1913 = vunpack.c.l.b16 %v389
        %v1914 = vunpack.c.l.b16 %v390
        %v1915 = vunpack.c.h.b16 %v390
        %v1916 = vunpack.c.l.b16 %v391
        %v1917 = vunpack.c.h.b16 %v391
        %v1918 = vunpack.c.l.b16 %v392
        %v1919 = vunpack.c.h.b16 %v392
        %v1920 = vunpack.c.l.b16 %v393
        %v1921 = vunpack.c.h.b16 %v393
        %v1922 = vunpack.c.l.b16 %v394
        %v1923 = vunpack.c.l.b16 %v395
        %v1924 = vunpack.c.h.b16 %v395
        %v1925 = vunpack.c.l.b16 %v396
        %v1926 = vunpack.c.h.b16 %v396
        %v1927 = vunpack.c.l.b16 %v397
        %v1928 = vunpack.c.h.b16 %v397
        %v1929 = vunpack.c.l.b16 %v398
        %v1930 = vunpack.c.h.b16 %v398
        %v1931 = vunpack.c.l.b16 %v399
        %v1932 = vunpack.c.l.b16 %v400
        %v1933 = vunpack.c.h.b16 %v400
        %v1934 = vunpack.c.l.b16 %v401
        %v1935 = vunpack.c.h.b16 %v401
        %v1936 = vunpack.c.l.b16 %v402
        %v1937 = vunpack.c.h.b16 %v402
        %v1938 = vunpack.c.l.b16 %v403
        %v1939 = vunpack.c.h.b16 %v403
        %v1940 = vunpack.c.l.b16 %v404
        %v1941 = vunpack.c.l.b16 %v405
        %v1942 = vunpack.c.h.b16 %v405
        %v1943 = vunpack.c.l.b16 %v406
        %v1944 = vunpack.c.h.b16 %v406
        %v1945 = vunpack.c.l.b16 %v407
        %v1946 = vunpack.c.h.b16 %v407
        %v1947 = vunpack.c.l.b16 %v408
        %v1948 = vunpack.c.h.b16 %v408
        %v1949 = vunpack.c.l.b16 %v409
        %v1950 = vunpack.c.l.b16 %v410
        %v1951 = vunpack.c.h.b16 %v410
        %v1952 = vunpack.c.l.b16 %v411
        %v1953 = vunpack.c.h.b16 %v411
        %v1954 = vunpack.c.l.b16 %v412
        %v1955 = vunpack.c.h.b16 %v412
        %v1956 = vunpack.c.l.b16 %v413
        %v1957 = vunpack.c.h.b16 %v413
        %v1958 = vunpack.c.l.b16 %v414
        %v1959 = vunpack.c.l.b16 %v415
        %v1960 = vunpack.c.h.b16 %v415
        %v1961 = vunpack.c.l.b16 %v416
        %v1962 = vunpack.c.h.b16 %v416
        %v1963 = vunpack.c.l.b16 %v417
        %v1964 = vunpack.c.h.b16 %v417
        %v1965 = vunpack.c.l.b16 %v418
        %v1966 = vunpack.c.h.b16 %v418
        %v1967 = vunpack.c.l.b16 %v419
        %v1968 = vunpack.c.l.b16 %v420
        %v1969 = vunpack.c.h.b16 %v420
        %v1970 = vunpack.c.l.b16 %v421
        %v1971 = vunpack.c.h.b16 %v421
        %v1972 = vunpack.c.l.b16 %v422
        %v1973 = vunpack.c.h.b16 %v422
        %v1974 = vunpack.c.l.b16 %v423
        %v1975 = vunpack.c.h.b16 %v423
        %v1976 = vunpack.c.l.b16 %v424
        %v1977 = vunpack.c.l.b16 %v425
        %v1978 = vunpack.c.h.b16 %v425
        %v1979 = vunpack.c.l.b16 %v426
        %v1980 = vunpack.c.h.b16 %v426
        %v1981 = vunpack.c.l.b16 %v427
        %v1982 = vunpack.c.h.b16 %v427
        %v1983 = vunpack.c.l.b16 %v428
        %v1984 = vunpack.c.h.b16 %v428
        %v1985 = vunpack.c.l.b16 %v429
        %v1986 = vunpack.c.l.b16 %v430
        %v1987 = vunpack.c.h.b16 %v430
        %v1988 = vunpack.c.l.b16 %v431
        %v1989 = vunpack.c.h.b16 %v431
        %v1990 = vunpack.c.l.b16 %v432
        %v1991 = vunpack.c.h.b16 %v432
        %v1992 = vunpack.c.l.b16 %v433
        %v1993 = vunpack.c.h.b16 %v433
        %v1994 = vunpack.c.l.b16 %v434
        %v1995 = vunpack.c.l.b16 %v435
        %v1996 = vunpack.c.h.b16 %v435
        %v1997 = vunpack.c.l.b16 %v436
        %v1998 = vunpack.c.h.b16 %v436
        %v1999 = vunpack.c.l.b16 %v437
        %v2000 = vunpack.c.h.b16 %v437
        %v2001 = vunpack.c.l.b16 %v438
        %v2002 = vunpack.c.h.b16 %v438
        %v2003 = vunpack.c.l.b16 %v439
        %v2004 = vunpack.c.l.b16 %v440
        %v2005 = vunpack.c.h.b16 %v440
        %v2006 = vunpack.c.l.b16 %v441
        %v2007 = vunpack.c.h.b16 %v441
        %v2008 = vunpack.c.l.b16 %v442
        %v2009 = vunpack.c.h.b16 %v442
        %v2010 = vunpack.c.l.b16 %v443
        %v2011 = vunpack.c.h.b16 %v443
        %v2012 = vunpack.c.l.b16 %v444
        %v2013 = vunpack.c.l.b16 %v445
        %v2014 = vunpack.c.h.b16 %v445
        %v2015 = vunpack.c.l.b16 %v446
        %v2016 = vunpack.c.h.b16 %v446
        %v2017 = vunpack.c.l.b16 %v447
        %v2018 = vunpack.c.h.b16 %v447
        %v2019 = vunpack.c.l.b16 %v448
        %v2020 = vunpack.c.h.b16 %v448
        %v2021 = vunpack.c.l.b16 %v449
        %v2022 = vunpack.c.l.b16 %v450
        %v2023 = vunpack.c.h.b16 %v450
        %v2024 = vunpack.c.l.b16 %v451
        %v2025 = vunpack.c.h.b16 %v451
        %v2026 = vunpack.c.l.b16 %v452
        %v2027 = vunpack.c.h.b16 %v452
        %v2028 = vunpack.c.l.b16 %v453
        %v2029 = vunpack.c.h.b16 %v453
        %v2030 = vunpack.c.l.b16 %v454
        %v2031 = vunpack.c.l.b16 %v455
        %v2032 = vunpack.c.h.b16 %v455
        %v2033 = vunpack.c.l.b16 %v456
        %v2034 = vunpack.c.h.b16 %v456
        %v2035 = vunpack.c.l.b16 %v457
        %v2036 = vunpack.c.h.b16 %v457
        %v2037 = vunpack.c.l.b16 %v458
        %v2038 = vunpack.c.h.b16 %v458
        %v2039 = vunpack.c.l.b16 %v459
        %v2040 = vunpack.c.l.b16 %v460
        %v2041 = vunpack.c.h.b16 %v460
        %v2042 = vunpack.c.l.b16 %v461
        %v2043 = vunpack.c.h.b16 %v461
        %v2044 = vunpack.c.l.b16 %v462
        %v2045 = vunpack.c.h.b16 %v462
        %v2046 = vunpack.c.l.b16 %v463
        %v2047 = vunpack.c.h.b16 %v463
        %v2048 = vunpack.c.l.b16 %v464
        %v2049 = vunpack.c.l.b16 %v465
        %v2050 = vunpack.c.h.b16 %v465
        %v2051 = vunpack.c.l.b16 %v466
        %v2052 = vunpack.c.h.b16 %v466
        %v2053 = vunpack.c.l.b16 %v467
        %v2054 = vunpack.c.h.b16 %v467
        %v2055 = vunpack.c.l.b16 %v468
        %v2056 = vunpack.c.h.b16 %v468
        %v2057 = vunpack.c.l.b16 %v469
        %v2058 = vunpack.c.l.b16 %v470
        %v2059 = vunpack.c.h.b16 %v470
        %v2060 = vunpack.c.l.b16 %v471
        %v2061 = vunpack.c.h.b16 %v471
        %v2062 = vunpack.c.l.b16 %v472
        %v2063 = vunpack.c.h.b16 %v472
        %v2064 = vunpack.c.l.b16 %v473
        %v2065 = vunpack.c.h.b16 %v473
        %v2066 = vunpack.c.l.b16 %v474
        %v2067 = vunpack.c.l.b16 %v475
        %v2068 = vunpack.c.h.b16 %v475
        %v2069 = vunpack.c.l.b16 %v476
        %v2070 = vunpack.c.h.b16 %v476
        %v2071 = vunpack.c.l.b16 %v477
        %v2072 = vunpack.c.h.b16 %v477
        %v2073 = vunpack.c.l.b16 %v478
        %v2074 = vunpack.c.h.b16 %v478
        %v2075 = vunpack.c.l.b16 %v479
        %v2076 = vunpack.c.l.b16 %v480
        %v2077 = vunpack.c.h.b16 %v480
        %v2078 = vunpack.c.l.b16 %v481
        %v2079 = vunpack.c.h.b16 %v481
        %v2080 = vunpack.c.l.b16 %v482
        %v2081 = vunpack.c.h.b16 %v482
        %v2082 = vunpack.c.l.b16 %v483
        %v2083 = vunpack.c.h.b16 %v483
        %v2084 = vunpack.c.l.b16 %v484
        %v2085 = vunpack.c.l.b16 %v485
        %v2086 = vunpack.c.h.b16 %v485
        %v2087 = vunpack.c.l.b16 %v486
        %v2088 = vunpack.c.h.b16 %v486
        %v2089 = vunpack.c.l.b16 %v487
        %v2090 = vunpack.c.h.b16 %v487
        %v2091 = vunpack.c.l.b16 %v488
        %v2092 = vunpack.c.h.b16 %v488
        %v2093 = vunpack.c.l.b16 %v489
        %v2094 = vunpack.c.l.b16 %v490
        %v2095 = vunpack.c.h.b16 %v490
        %v2096 = vunpack.c.l.b16 %v491
        %v2097 = vunpack.c.h.b16 %v491
        %v2098 = vunpack.c.l.b16 %v492
        %v2099 = vunpack.c.h.b16 %v492
        %v2100 = vunpack.c.l.b16 %v493
        %v2101 = vunpack.c.h.b16 %v493
        %v2102 = vunpack.c.l.b16 %v494
        %v2103 = vunpack.c.l.b16 %v495
        %v2104 = vunpack.c.h.b16 %v495
        %v2105 = vunpack.c.l.b16 %v496
        %v2106 = vunpack.c.h.b16 %v496
        %v2107 = vunpack.c.l.b16 %v497
        %v2108 = vunpack.c.h.b16 %v497
        %v2109 = vunpack.c.l.b16 %v498
        %v2110 = vunpack.c.h.b16 %v498
        %v2111 = vunpack.c.l.b16 %v499
        %v2112 = vunpack.c.l.b16 %v500
        %v2113 = vunpack.c.h.b16 %v500
        %v2114 = vunpack.c.l.b16 %v501
        %v2115 = vunpack.c.h.b16 %v501
        %v2116 = vunpack.c.l.b16 %v502
        %v2117 = vunpack.c.h.b16 %v502
        %v2118 = vunpack.c.l.b16 %v503
        %v2119 = vunpack.c.h.b16 %v503
        %v2120 = vunpack.c.l.b16 %v504
        %v2121 = vunpack.c.l.b16 %v505
        %v2122 = vunpack.c.h.b16 %v505
        %v2123 = vunpack.c.l.b16 %v506
        %v2124 = vunpack.c.h.b16 %v506
        %v2125 = vunpack.c.l.b16 %v507
        %v2126 = vunpack.c.h.b16 %v507
        %v2127 = vunpack.c.l.b16 %v508
        %v2128 = vunpack.c.h.b16 %v508
        %v2129 = vunpack.c.l.b16 %v509
        %v2130 = vunpack.c.l.b16 %v510
        %v2131 = vunpack.c.h.b16 %v510
        %v2132 = vunpack.c.l.b16 %v511
        %v2133 = vunpack.c.h.b16 %v511
        %v2134 = vunpack.c.l.b16 %v512
        %v2135 = vunpack.c.h.b16 %v512
        %v2136 = vunpack.c.l.b16 %v513
        %v2137 = vunpack.c.h.b16 %v513
        %v2138 = vunpack.c.l.b16 %v514
        %v2139 = vunpack.c.l.b16 %v515
        %v2140 = vunpack.c.h.b16 %v515
        %v2141 = vunpack.c.l.b16 %v516
        %v2142 = vunpack.c.h.b16 %v516
        %v2143 = vunpack.c.l.b16 %v517
        %v2144 = vunpack.c.h.b16 %v517
        %v2145 = vunpack.c.l.b16 %v518
        %v2146 = vunpack.c.h.b16 %v518
        %v2147 = vunpack.c.l.b16 %v519
        %v2148 = vunpack.c.l.b16 %v520
        %v2149 = vunpack.c.h.b16 %v520
        %v2150 = vunpack.c.l.b16 %v521
        %v2151 = vunpack.c.h.b16 %v521
        %v2152 = vunpack.c.l.b16 %v522
        %v2153 = vunpack.c.h.b16 %v522
        %v2154 = vunpack.c.l.b16 %v523
        %v2155 = vunpack.c.h.b16 %v523
        %v2156 = vunpack.c.l.b16 %v524
        %v2157 = vunpack.c.l.b16 %v525
        %v2158 = vunpack.c.h.b16 %v525
        %v2159 = vunpack.c.l.b16 %v526
        %v2160 = vunpack.c.h.b16 %v526
        %v2161 = vunpack.c.l.b16 %v527
        %v2162 = vunpack.c.h.b16 %v527
        %v2163 = vunpack.c.l.b16 %v528
        %v2164 = vunpack.c.h.b16 %v528
        %v2165 = vunpack.c.l.b16 %v529
        %v2166 = vunpack.c.l.b16 %v530
        %v2167 = vunpack.c.h.b16 %v530
        %v2168 = vunpack.c.l.b16 %v531
        %v2169 = vunpack.c.h.b16 %v531
        %v2170 = vunpack.c.l.b16 %v532
        %v2171 = vunpack.c.h.b16 %v532
        %v2172 = vunpack.c.l.b16 %v533
        %v2173 = vunpack.c.h.b16 %v533
        %v2174 = vunpack.c.l.b16 %v534
        %v2175 = vunpack.c.l.b16 %v535
        %v2176 = vunpack.c.h.b16 %v535
        %v2177 = vunpack.c.l.b16 %v536
        %v2178 = vunpack.c.h.b16 %v536
        %v2179 = vunpack.c.l.b16 %v537
        %v2180 = vunpack.c.h.b16 %v537
        %v2181 = vunpack.c.l.b16 %v538
        %v2182 = vunpack.c.h.b16 %v538
        %v2183 = vunpack.c.l.b16 %v539
        %v2184 = vunpack.c.l.b16 %v540
        %v2185 = vunpack.c.h.b16 %v540
        %v2186 = vunpack.c.l.b16 %v541
        %v2187 = vunpack.c.h.b16 %v541
        %v2188 = vunpack.c.l.b16 %v542
        %v2189 = vunpack.c.h.b16 %v542
        %v2190 = vunpack.c.l.b16 %v543
        %v2191 = vunpack.c.h.b16 %v543
        %v2192 = vunpack.c.l.b16 %v544
        %v2193 = vunpack.c.l.b16 %v545
        %v2194 = vunpack.c.h.b16 %v545
        %v2195 = vunpack.c.l.b16 %v546
        %v2196 = vunpack.c.h.b16 %v546
        %v2197 = vunpack.c.l.b16 %v547
        %v2198 = vunpack.c.h.b16 %v547
        %v2199 = vunpack.c.l.b16 %v548
        %v2200 = vunpack.c.h.b16 %v548
        %v2201 = vunpack.c.l.b16 %v549
        %v2202 = vunpack.c.l.b16 %v550
        %v2203 = vunpack.c.h.b16 %v550
        %v2204 = vunpack.c.l.b16 %v551
        %v2205 = vunpack.c.h.b16 %v551
        %v2206 = vunpack.c.l.b16 %v552
        %v2207 = vunpack.c.h.b16 %v552
        %v2208 = vunpack.c.l.b16 %v553
        %v2209 = vunpack.c.h.b16 %v553
        %v2210 = vunpack.c.l.b16 %v554
        %v2211 = vunpack.c.l.b16 %v555
        %v2212 = vunpack.c.h.b16 %v555
        %v2213 = vunpack.c.l.b16 %v556
        %v2214 = vunpack.c.h.b16 %v556
        %v2215 = vunpack.c.l.b16 %v557
        %v2216 = vunpack.c.h.b16 %v557
        %v2217 = vunpack.c.l.b16 %v558
        %v2218 = vunpack.c.h.b16 %v558
        %v2219 = vunpack.c.l.b16 %v559
        %v2220 = vunpack.c.l.b16 %v560
        %v2221 = vunpack.c.h.b16 %v560
        %v2222 = vunpack.c.l.b16 %v561
        %v2223 = vunpack.c.h.b16 %v561
        %v2224 = vunpack.c.l.b16 %v562
        %v2225 = vunpack.c.h.b16 %v562
        %v2226 = vunpack.c.l.b16 %v563
        %v2227 = vunpack.c.h.b16 %v563
        %v2228 = vunpack.c.l.b16 %v564
        %v2229 = vunpack.c.l.b16 %v565
        %v2230 = vunpack.c.h.b16 %v565
        %v2231 = vunpack.c.l.b16 %v566
        %v2232 = vunpack.c.h.b16 %v566
        %v2233 = vunpack.c.l.b16 %v567
        %v2234 = vunpack.c.h.b16 %v567
        %v2235 = vunpack.c.l.b16 %v568
        %v2236 = vunpack.c.h.b16 %v568
        %v2237 = vunpack.c.l.b16 %v569
        %v2238 = vunpack.c.l.b16 %v570
        %v2239 = vunpack.c.h.b16 %v570
        %v2240 = vunpack.c.l.b16 %v571
        %v2241 = vunpack.c.h.b16 %v571
        %v2242 = vunpack.c.l.b16 %v572
        %v2243 = vunpack.c.h.b16 %v572
        %v2244 = vunpack.c.l.b16 %v573
        %v2245 = vunpack.c.h.b16 %v573
        %v2246 = vunpack.c.l.b16 %v574
        %v2247 = vunpack.c.l.b16 %v575
        %v2248 = vunpack.c.h.b16 %v575
        %v2249 = vunpack.c.l.b16 %v576
        %v2250 = vunpack.c.h.b16 %v576
        %v2251 = vunpack.c.l.b16 %v577
        %v2252 = vunpack.c.h.b16 %v577
        %v2253 = vunpack.c.l.b16 %v578
        %v2254 = vunpack.c.h.b16 %v578
        %v2255 = vunpack.c.l.b16 %v579
        %v2256 = vunpack.c.l.b16 %v580
        %v2257 = vunpack.c.h.b16 %v580
        %v2258 = vunpack.c.l.b16 %v581
        %v2259 = vunpack.c.h.b16 %v581
        %v2260 = vunpack.c.l.b16 %v582
        %v2261 = vunpack.c.h.b16 %v582
        %v2262 = vunpack.c.l.b16 %v583
        %v2263 = vunpack.c.h.b16 %v583
        %v2264 = vunpack.c.l.b16 %v584
        %v2265 = vunpack.c.l.b16 %v585
        %v2266 = vunpack.c.h.b16 %v585
        %v2267 = vunpack.c.l.b16 %v586
        %v2268 = vunpack.c.h.b16 %v586
        %v2269 = vunpack.c.l.b16 %v587
        %v2270 = vunpack.c.h.b16 %v587
        %v2271 = vunpack.c.l.b16 %v588
        %v2272 = vunpack.c.h.b16 %v588
        %v2273 = vunpack.c.l.b16 %v589
        %v2274 = vunpack.c.l.b16 %v590
        %v2275 = vunpack.c.h.b16 %v590
        %v2276 = vunpack.c.l.b16 %v591
        %v2277 = vunpack.c.h.b16 %v591
        %v2278 = vunpack.c.l.b16 %v592
        %v2279 = vunpack.c.h.b16 %v592
        %v2280 = vunpack.c.l.b16 %v593
        %v2281 = vunpack.c.h.b16 %v593
        %v2282 = vunpack.c.l.b16 %v594
        %v2283 = vunpack.c.l.b16 %v595
        %v2284 = vunpack.c.h.b16 %v595
        %v2285 = vunpack.c.l.b16 %v596
        %v2286 = vunpack.c.h.b16 %v596
        %v2287 = vunpack.c.l.b16 %v597
        %v2288 = vunpack.c.h.b16 %v597
        %v2289 = vunpack.c.l.b16 %v598
        %v2290 = vunpack.c.h.b16 %v598
        %v2291 = vunpack.c.l.b16 %v599
        %v2292 = vunpack.c.l.b16 %v600
        %v2293 = vunpack.c.h.b16 %v600
        %v2294 = vunpack.c.l.b16 %v601
        %v2295 = vunpack.c.h.b16 %v601
        %v2296 = vunpack.c.l.b16 %v602
        %v2297 = vunpack.c.h.b16 %v602
        %v2298 = vunpack.c.l.b16 %v603
        %v2299 = vunpack.c.h.b16 %v603
        %v2300 = vunpack.c.l.b16 %v604
        %v2301 = vunpack.c.l.b16 %v605
        %v2302 = vunpack.c.h.b16 %v605
        %v2303 = vunpack.c.l.b16 %v606
        %v2304 = vunpack.c.h.b16 %v606
        %v2305 = vunpack.c.l.b16 %v607
        %v2306 = vunpack.c.h.b16 %v607
        %v2307 = vunpack.c.l.b16 %v608
        %v2308 = vunpack.c.h.b16 %v608
        %v2309 = vunpack.c.l.b16 %v609
        %v2310 = vunpack.c.l.b16 %v610
        %v2311 = vunpack.c.h.b16 %v610
        %v2312 = vunpack.c.l.b16 %v611
        %v2313 = vunpack.c.h.b16 %v611
        %v2314 = vunpack.c.l.b16 %v612
        %v2315 = vunpack.c.h.b16 %v612
        %v2316 = vunpack.c.l.b16 %v613
        %v2317 = vunpack.c.h.b16 %v613
        %v2318 = vunpack.c.l.b16 %v614
        %v2319 = vunpack.c.l.b16 %v615
        %v2320 = vunpack.c.h.b16 %v615
        %v2321 = vunpack.c.l.b16 %v616
        %v2322 = vunpack.c.h.b16 %v616
        %v2323 = vunpack.c.l.b16 %v617
        %v2324 = vunpack.c.h.b16 %v617
        %v2325 = vunpack.c.l.b16 %v618
        %v2326 = vunpack.c.h.b16 %v618
        %v2327 = vunpack.c.l.b16 %v619
        %v2328 = vunpack.c.l.b16 %v620
        %v2329 = vunpack.c.h.b16 %v620
        %v2330 = vunpack.c.l.b16 %v621
        %v2331 = vunpack.c.h.b16 %v621
        %v2332 = vunpack.c.l.b16 %v622
        %v2333 = vunpack.c.h.b16 %v622
        %v2334 = vunpack.c.l.b16 %v623
        %v2335 = vunpack.c.h.b16 %v623
        %v2336 = vunpack.c.l.b16 %v624
        %v2337 = vunpack.c.l.b16 %v625
        %v2338 = vunpack.c.h.b16 %v625
        %v2339 = vunpack.c.l.b16 %v626
        %v2340 = vunpack.c.h.b16 %v626
        %v2341 = vunpack.c.l.b16 %v627
        %v2342 = vunpack.c.h.b16 %v627
        %v2343 = vunpack.c.l.b16 %v628
        %v2344 = vunpack.c.h.b16 %v628
        %v2345 = vunpack.c.l.b16 %v629
        %v2346 = vunpack.c.l.b16 %v630
        %v2347 = vunpack.c.h.b16 %v630
        %v2348 = vunpack.c.l.b16 %v631
        %v2349 = vunpack.c.h.b16 %v631
        %v2350 = vunpack.c.l.b16 %v632
        %v2351 = vunpack.c.h.b16 %v632
        %v2352 = vunpack.c.l.b16 %v633
        %v2353 = vunpack.c.h.b16 %v633
        %v2354 = vunpack.c.l.b16 %v634
        %v2355 = vunpack.c.l.b16 %v635
        %v2356 = vunpack.c.h.b16 %v635
        %v2357 = vunpack.c.l.b16 %v636
        %v2358 = vunpack.c.h.b16 %v636
        %v2359 = vunpack.c.l.b16 %v637
        %v2360 = vunpack.c.h.b16 %v637
        %v2361 = vunpack.c.l.b16 %v638
        %v2362 = vunpack.c.h.b16 %v638
        %v2363 = vunpack.c.l.b16 %v639
        %v2364 = vunpack.c.l.b16 %v640
        %v2365 = vunpack.c.h.b16 %v640
        %v2366 = vunpack.c.l.b16 %v641
        %v2367 = vunpack.c.h.b16 %v641
        %v2368 = vunpack.c.l.b16 %v642
        %v2369 = vunpack.c.h.b16 %v642
        %v2370 = vunpack.c.l.b16 %v643
        %v2371 = vunpack.c.h.b16 %v643
        %v2372 = vunpack.c.l.b16 %v644
        %v2373 = vunpack.c.l.b16 %v645
        %v2374 = vunpack.c.h.b16 %v645
        %v2375 = vunpack.c.l.b16 %v646
        %v2376 = vunpack.c.h.b16 %v646
        %v2377 = vunpack.c.l.b16 %v647
        %v2378 = vunpack.c.h.b16 %v647
        %v2379 = vunpack.c.l.b16 %v648
        %v2380 = vunpack.c.h.b16 %v648
        %v2381 = vunpack.c.l.b16 %v649
        %v2382 = vunpack.c.l.b16 %v650
        %v2383 = vunpack.c.h.b16 %v650
        %v2384 = vunpack.c.l.b16 %v651
        %v2385 = vunpack.c.h.b16 %v651
        %v2386 = vunpack.c.l.b16 %v652
        %v2387 = vunpack.c.h.b16 %v652
        %v2388 = vunpack.c.l.b16 %v653
        %v2389 = vunpack.c.h.b16 %v653
        %v2390 = vunpack.c.l.b16 %v654
        %v2391 = vunpack.c.l.b16 %v655
        %v2392 = vunpack.c.h.b16 %v655
        %v2393 = vunpack.c.l.b16 %v656
        %v2394 = vunpack.c.h.b16 %v656
        %v2395 = vunpack.c.l.b16 %v657
        %v2396 = vunpack.c.h.b16 %v657
        %v2397 = vunpack.c.l.b16 %v658
        %v2398 = vunpack.c.h.b16 %v658
        %v2399 = vunpack.c.l.b16 %v659
        %v2400 = vunpack.c.l.b16 %v660
        %v2401 = vunpack.c.h.b16 %v660
        %v2402 = vunpack.c.l.b16 %v661
        %v2403 = vunpack.c.h.b16 %v661
        %v2404 = vunpack.c.l.b16 %v662
        %v2405 = vunpack.c.h.b16 %v662
        %v2406 = vunpack.c.l.b16 %v663
        %v2407 = vunpack.c.h.b16 %v663
        %v2408 = vunpack.c.l.b16 %v664
        %v2409 = vunpack.c.l.b16 %v665
        %v2410 = vunpack.c.h.b16 %v665
        %v2411 = vunpack.c.l.b16 %v666
        %v2412 = vunpack.c.h.b16 %v666
        %v2413 = vunpack.c.l.b16 %v667
        %v2414 = vunpack.c.h.b16 %v667
        %v2415 = vunpack.c.l.b16 %v668
        %v2416 = vunpack.c.h.b16 %v668
        %v2417 = vunpack.c.l.b16 %v669
        %v2418 = vunpack.c.l.b16 %v670
        %v2419 = vunpack.c.h.b16 %v670
        %v2420 = vunpack.c.l.b16 %v671
        %v2421 = vunpack.c.h.b16 %v671
        %v2422 = vunpack.c.l.b16 %v672
        %v2423 = vunpack.c.h.b16 %v672
        %v2424 = vunpack.c.l.b16 %v673
        %v2425 = vunpack.c.h.b16 %v673
        %v2426 = vunpack.c.l.b16 %v674
        %v2427 = vunpack.c.l.b16 %v675
        %v2428 = vunpack.c.h.b16 %v675
        %v2429 = vunpack.c.l.b16 %v676
        %v2430 = vunpack.c.h.b16 %v676
        %v2431 = vunpack.c.l.b16 %v677
        %v2432 = vunpack.c.h.b16 %v677
        %v2433 = vunpack.c.l.b16 %v678
        %v2434 = vunpack.c.h.b16 %v678
        %v2435 = vunpack.c.l.b16 %v679
        %v2436 = vunpack.c.l.b16 %v680
        %v2437 = vunpack.c.h.b16 %v680
        %v2438 = vunpack.c.l.b16 %v681
        %v2439 = vunpack.c.h.b16 %v681
        %v2440 = vunpack.c.l.b16 %v682
        %v2441 = vunpack.c.h.b16 %v682
        %v2442 = vunpack.c.l.b16 %v683
        %v2443 = vunpack.c.h.b16 %v683
        %v2444 = vunpack.c.l.b16 %v684
        %v2445 = vunpack.c.l.b16 %v685
        %v2446 = vunpack.c.h.b16 %v685
        %v2447 = vunpack.c.l.b16 %v686
        %v2448 = vunpack.c.h.b16 %v686
        %v2449 = vunpack.c.l.b16 %v687
        %v2450 = vunpack.c.h.b16 %v687
        %v2451 = vunpack.c.l.b16 %v688
        %v2452 = vunpack.c.h.b16 %v688
        %v2453 = vunpack.c.l.b16 %v689
        %v2454 = vunpack.c.l.b16 %v690
        %v2455 = vunpack.c.h.b16 %v690
        %v2456 = vunpack.c.l.b16 %v691
        %v2457 = vunpack.c.h.b16 %v691
        %v2458 = vunpack.c.l.b16 %v692
        %v2459 = vunpack.c.h.b16 %v692
        %v2460 = vunpack.c.l.b16 %v693
        %v2461 = vunpack.c.h.b16 %v693
        %v2462 = vunpack.c.l.b16 %v694
        %v2463 = vunpack.c.l.b16 %v695
        %v2464 = vunpack.c.h.b16 %v695
        %v2465 = vunpack.c.l.b16 %v696
        %v2466 = vunpack.c.h.b16 %v696
        %v2467 = vunpack.c.l.b16 %v697
        %v2468 = vunpack.c.h.b16 %v697
        %v2469 = vunpack.c.l.b16 %v698
        %v2470 = vunpack.c.h.b16 %v698
        %v2471 = vunpack.c.l.b16 %v699
        %v2472 = vunpack.c.l.b16 %v700
        %v2473 = vunpack.c.h.b16 %v700
        %v2474 = vunpack.c.l.b16 %v701
        %v2475 = vunpack.c.h.b16 %v701
        %v2476 = vunpack.c.l.b16 %v702
        %v2477 = vunpack.c.h.b16 %v702
        %v2478 = vunpack.c.l.b16 %v703
        %v2479 = vunpack.c.h.b16 %v703
        %v2480 = vunpack.c.l.b16 %v704
        %v2481 = vunpack.c.l.b16 %v705
        %v2482 = vunpack.c.h.b16 %v705
        %v2483 = vunpack.c.l.b16 %v706
        %v2484 = vunpack.c.h.b16 %v706
        %v2485 = vunpack.c.l.b16 %v707
        %v2486 = vunpack.c.h.b16 %v707
        %v2487 = vunpack.c.l.b16 %v708
        %v2488 = vunpack.c.h.b16 %v708
        %v2489 = vunpack.c.l.b16 %v709
        %v2490 = vunpack.c.l.b16 %v710
        %v2491 = vunpack.c.h.b16 %v710
        %v2492 = vunpack.c.l.b16 %v711
        %v2493 = vunpack.c.h.b16 %v711
        %v2494 = vunpack.c.l.b16 %v712
        %v2495 = vunpack.c.h.b16 %v712
        %v2496 = vunpack.c.l.b16 %v713
        %v2497 = vunpack.c.h.b16 %v713
        %v2498 = vunpack.c.l.b16 %v714
        %v2499 = vunpack.c.l.b16 %v715
        %v2500 = vunpack.c.h.b16 %v715
        %v2501 = vunpack.c.l.b16 %v716
        %v2502 = vunpack.c.h.b16 %v716
        %v2503 = vunpack.c.l.b16 %v717
        %v2504 = vunpack.c.h.b16 %v717
        %v2505 = vunpack.c.l.b16 %v718
        %v2506 = vunpack.c.h.b16 %v718
        %v2507 = vunpack.c.l.b16 %v719
        %v2508 = vunpack.c.l.b16 %v720
        %v2509 = vunpack.c.h.b16 %v720
        %v2510 = vunpack.c.l.b16 %v721
        %v2511 = vunpack.c.h.b16 %v721
        %v2512 = vunpack.c.l.b16 %v722
        %v2513 = vunpack.c.h.b16 %v722
        %v2514 = vunpack.c.l.b16 %v723
        %v2515 = vunpack.c.h.b16 %v723
        %v2516 = vunpack.c.l.b16 %v724
        %v2517 = vunpack.c.l.b16 %v725
        %v2518 = vunpack.c.h.b16 %v725
        %v2519 = vunpack.c.l.b16 %v726
        %v2520 = vunpack.c.h.b16 %v726
        %v2521 = vunpack.c.l.b16 %v727
        %v2522 = vunpack.c.h.b16 %v727
        %v2523 = vunpack.c.l.b16 %v728
        %v2524 = vunpack.c.h.b16 %v728
        %v2525 = vunpack.c.l.b16 %v729
        %v2526 = vunpack.c.l.b16 %v730
        %v2527 = vunpack.c.h.b16 %v730
        %v2528 = vunpack.c.l.b16 %v731
        %v2529 = vunpack.c.h.b16 %v731
        %v2530 = vunpack.c.l.b16 %v732
        %v2531 = vunpack.c.h.b16 %v732
        %v2532 = vunpack.c.l.b16 %v733
        %v2533 = vunpack.c.h.b16 %v733
        %v2534 = vunpack.c.l.b16 %v734
        %v2535 = vunpack.c.l.b16 %v735
        %v2536 = vunpack.c.h.b16 %v735
        %v2537 = vunpack.c.l.b16 %v736
        %v2538 = vunpack.c.h.b16 %v736
        %v2539 = vunpack.c.l.b16 %v737
        %v2540 = vunpack.c.h.b16 %v737
        %v2541 = vunpack.c.l.b16 %v738
        %v2542 = vunpack.c.h.b16 %v738
        %v2543 = vunpack.c.l.b16 %v739
        %v2544 = vunpack.c.l.b16 %v740
        %v2545 = vunpack.c.h.b16 %v740
        %v2546 = vunpack.c.l.b16 %v741
        %v2547 = vunpack.c.h.b16 %v741
        %v2548 = vunpack.c.l.b16 %v742
        %v2549 = vunpack.c.h.b16 %v742
        %v2550 = vunpack.c.l.b16 %v743
        %v2551 = vunpack.c.h.b16 %v743
        %v2552 = vunpack.c.l.b16 %v744
        %v2553 = vunpack.c.l.b16 %v745
        %v2554 = vunpack.c.h.b16 %v745
        %v2555 = vunpack.c.l.b16 %v746
        %v2556 = vunpack.c.h.b16 %v746
        %v2557 = vunpack.c.l.b16 %v747
        %v2558 = vunpack.c.h.b16 %v747
        %v2559 = vunpack.c.l.b16 %v748
        %v2560 = vunpack.c.h.b16 %v748
        %v2561 = vunpack.c.l.b16 %v749
        %v2562 = vunpack.c.l.b16 %v750
        %v2563 = vunpack.c.h.b16 %v750
        %v2564 = vunpack.c.l.b16 %v751
        %v2565 = vunpack.c.h.b16 %v751
        %v2566 = vunpack.c.l.b16 %v752
        %v2567 = vunpack.c.h.b16 %v752
        %v2568 = vunpack.c.l.b16 %v753
        %v2569 = vunpack.c.h.b16 %v753
        %v2570 = vunpack.c.l.b16 %v754
        %v2571 = vunpack.c.l.b16 %v755
        %v2572 = vunpack.c.h.b16 %v755
        %v2573 = vunpack.c.l.b16 %v756
        %v2574 = vunpack.c.h.b16 %v756
        %v2575 = vunpack.c.l.b16 %v757
        %v2576 = vunpack.c.h.b16 %v757
        %v2577 = vunpack.c.l.b16 %v758
        %v2578 = vunpack.c.h.b16 %v758
        %v2579 = vunpack.c.l.b16 %v759
        %v2580 = vunpack.c.l.b16 %v760
        %v2581 = vunpack.c.h.b16 %v760
        %v2582 = vunpack.c.l.b16 %v761
        %v2583 = vunpack.c.h.b16 %v761
        %v2584 = vunpack.c.l.b16 %v762
        %v2585 = vunpack.c.h.b16 %v762
        %v2586 = vunpack.c.l.b16 %v763
        %v2587 = vunpack.c.h.b16 %v763
        %v2588 = vunpack.c.l.b16 %v764
        %v2589 = vunpack.c.l.b16 %v765
        %v2590 = vunpack.c.h.b16 %v765
        %v2591 = vunpack.c.l.b16 %v766
        %v2592 = vunpack.c.h.b16 %v766
        %v2593 = vunpack.c.l.b16 %v767
        %v2594 = vunpack.c.h.b16 %v767
        %v2595 = vunpack.c.l.b16 %v768
        %v2596 = vunpack.c.h.b16 %v768
        %v2597 = vunpack.c.l.b16 %v769
        %v2598 = vunpack.c.l.b16 %v770
        %v2599 = vunpack.c.h.b16 %v770
        %v2600 = vunpack.c.l.b16 %v771
        %v2601 = vunpack.c.h.b16 %v771
        %v2602 = vunpack.c.l.b16 %v772
        %v2603 = vunpack.c.h.b16 %v772
        %v2604 = vunpack.c.l.b16 %v773
        %v2605 = vunpack.c.h.b16 %v773
        %v2606 = vunpack.c.l.b16 %v774
        %v2607 = vunpack.c.l.b16 %v775
        %v2608 = vunpack.c.h.b16 %v775
        %v2609 = vunpack.c.l.b16 %v776
        %v2610 = vunpack.c.h.b16 %v776
        %v2611 = vunpack.c.l.b16 %v777
        %v2612 = vunpack.c.h.b16 %v777
        %v2613 = vunpack.c.l.b16 %v778
        %v2614 = vunpack.c.h.b16 %v778
        %v2615 = vunpack.c.l.b16 %v779
        %v2616 = vunpack.c.l.b16 %v780
        %v2617 = vunpack.c.h.b16 %v780
        %v2618 = vunpack.c.l.b16 %v781
        %v2619 = vunpack.c.h.b16 %v781
        %v2620 = vunpack.c.l.b16 %v782
        %v2621 = vunpack.c.h.b16 %v782
        %v2622 = vunpack.c.l.b16 %v783
        %v2623 = vunpack.c.h.b16 %v783
        %v2624 = vunpack.c.l.b16 %v784
        %v2625 = vunpack.c.l.b16 %v785
        %v2626 = vunpack.c.h.b16 %v785
        %v2627 = vunpack.c.l.b16 %v786
        %v2628 = vunpack.c.h.b16 %v786
        %v2629 = vunpack.c.l.b16 %v787
        %v2630 = vunpack.c.h.b16 %v787
        %v2631 = vunpack.c.l.b16 %v788
        %v2632 = vunpack.c.h.b16 %v788
        %v2633 = vunpack.c.l.b16 %v789
        %v2634 = vunpack.c.l.b16 %v790
        %v2635 = vunpack.c.h.b16 %v790
        %v2636 = vunpack.c.l.b16 %v791
        %v2637 = vunpack.c.h.b16 %v791
        %v2638 = vunpack.c.l.b16 %v792
        %v2639 = vunpack.c.h.b16 %v792
        %v2640 = vunpack.c.l.b16 %v793
        %v2641 = vunpack.c.h.b16 %v793
        %v2642 = vunpack.c.l.b16 %v794
        %v2643 = vunpack.c.l.b16 %v795
        %v2644 = vunpack.c.h.b16 %v795
        %v2645 = vunpack.c.l.b16 %v796
        %v2646 = vunpack.c.h.b16 %v796
        %v2647 = vunpack.c.l.b16 %v797
        %v2648 = vunpack.c.h.b16 %v797
        %v2649 = vunpack.c.l.b16 %v798
        %v2650 = vunpack.c.h.b16 %v798
        %v2651 = vunpack.c.l.b16 %v799
        %v2652 = vunpack.c.l.b16 %v800
        %v2653 = vunpack.c.h.b16 %v800
        %v2654 = vunpack.c.l.b16 %v801
        %v2655 = vunpack.c.h.b16 %v801
        %v2656 = vunpack.c.l.b16 %v802
        %v2657 = vunpack.c.h.b16 %v802
        %v2658 = vunpack.c.l.b16 %v803
        %v2659 = vunpack.c.h.b16 %v803
        %v2660 = vunpack.c.l.b16 %v804
        %v2661 = vunpack.c.l.b16 %v805
        %v2662 = vunpack.c.h.b16 %v805
        %v2663 = vunpack.c.l.b16 %v806
        %v2664 = vunpack.c.h.b16 %v806
        %v2665 = vunpack.c.l.b16 %v807
        %v2666 = vunpack.c.h.b16 %v807
        %v2667 = vunpack.c.l.b16 %v808
        %v2668 = vunpack.c.h.b16 %v808
        %v2669 = vunpack.c.l.b16 %v809
        %v2670 = vunpack.c.l.b16 %v810
        %v2671 = vunpack.c.h.b16 %v810
        %v2672 = vunpack.c.l.b16 %v811
        %v2673 = vunpack.c.h.b16 %v811
        %v2674 = vunpack.c.l.b16 %v812
        %v2675 = vunpack.c.h.b16 %v812
        %v2676 = vunpack.c.l.b16 %v813
        %v2677 = vunpack.c.h.b16 %v813
        %v2678 = vunpack.c.l.b16 %v814
        %v2679 = vunpack.c.l.b16 %v815
        %v2680 = vunpack.c.h.b16 %v815
        %v2681 = vunpack.c.l.b16 %v816
        %v2682 = vunpack.c.h.b16 %v816
        %v2683 = vunpack.c.l.b16 %v817
        %v2684 = vunpack.c.h.b16 %v817
        %v2685 = vunpack.c.l.b16 %v818
        %v2686 = vunpack.c.h.b16 %v818
        %v2687 = vunpack.c.l.b16 %v819
        %v2688 = vunpack.c.l.b16 %v820
        %v2689 = vunpack.c.h.b16 %v820
        %v2690 = vunpack.c.l.b16 %v821
        %v2691 = vunpack.c.h.b16 %v821
        %v2692 = vunpack.c.l.b16 %v822
        %v2693 = vunpack.c.h.b16 %v822
        %v2694 = vunpack.c.l.b16 %v823
        %v2695 = vunpack.c.h.b16 %v823
        %v2696 = vunpack.c.l.b16 %v824
        %v2697 = vunpack.c.l.b16 %v825
        %v2698 = vunpack.c.h.b16 %v825
        %v2699 = vunpack.c.l.b16 %v826
        %v2700 = vunpack.c.h.b16 %v826
        %v2701 = vunpack.c.l.b16 %v827
        %v2702 = vunpack.c.h.b16 %v827
        %v2703 = vunpack.c.l.b16 %v828
        %v2704 = vunpack.c.h.b16 %v828
        %v2705 = vunpack.c.l.b16 %v829
        %v2706 = vunpack.c.l.b16 %v830
        %v2707 = vunpack.c.h.b16 %v830
        %v2708 = vunpack.c.l.b16 %v831
        %v2709 = vunpack.c.h.b16 %v831
        %v2710 = vunpack.c.l.b16 %v832
        %v2711 = vunpack.c.h.b16 %v832
        %v2712 = vunpack.c.l.b16 %v833
        %v2713 = vunpack.c.h.b16 %v833
        %v2714 = vunpack.c.l.b16 %v834
        %v2715 = vunpack.c.l.b16 %v835
        %v2716 = vunpack.c.h.b16 %v835
        %v2717 = vunpack.c.l.b16 %v836
        %v2718 = vunpack.c.h.b16 %v836
        %v2719 = vunpack.c.l.b16 %v837
        %v2720 = vunpack.c.h.b16 %v837
        %v2721 = vunpack.c.l.b16 %v838
        %v2722 = vunpack.c.h.b16 %v838
        %v2723 = vunpack.c.l.b16 %v839
        %v2724 = vunpack.c.l.b16 %v840
        %v2725 = vunpack.c.h.b16 %v840
        %v2726 = vunpack.c.l.b16 %v841
        %v2727 = vunpack.c.h.b16 %v841
        %v2728 = vunpack.c.l.b16 %v842
        %v2729 = vunpack.c.h.b16 %v842
        %v2730 = vunpack.c.l.b16 %v843
        %v2731 = vunpack.c.h.b16 %v843
        %v2732 = vunpack.c.l.b16 %v844
        %v2733 = vunpack.c.l.b16 %v845
        %v2734 = vunpack.c.h.b16 %v845
        %v2735 = vunpack.c.l.b16 %v846
        %v2736 = vunpack.c.h.b16 %v846
        %v2737 = vunpack.c.l.b16 %v847
        %v2738 = vunpack.c.h.b16 %v847
        %v2739 = vunpack.c.l.b16 %v848
        %v2740 = vunpack.c.h.b16 %v848
        %v2741 = vunpack.c.l.b16 %v849
        %v2742 = vunpack.c.l.b16 %v850
        %v2743 = vunpack.c.h.b16 %v850
        %v2744 = vunpack.c.l.b16 %v851
        %v2745 = vunpack.c.h.b16 %v851
        %v2746 = vunpack.c.l.b16 %v852
        %v2747 = vunpack.c.h.b16 %v852
        %v2748 = vunpack.c.l.b16 %v853
        %v2749 = vunpack.c.h.b16 %v853
        %v2750 = vunpack.c.l.b16 %v854
        %v2751 = vunpack.c.l.b16 %v855
        %v2752 = vunpack.c.h.b16 %v855
        %v2753 = vunpack.c.l.b16 %v856
        %v2754 = vunpack.c.h.b16 %v856
        %v2755 = vunpack.c.l.b16 %v857
        %v2756 = vunpack.c.h.b16 %v857
        %v2757 = vunpack.c.l.b16 %v858
        %v2758 = vunpack.c.h.b16 %v858
        %v2759 = vunpack.c.l.b16 %v859
        %v2760 = vunpack.c.l.b16 %v860
        %v2761 = vunpack.c.h.b16 %v860
        %v2762 = vunpack.c.l.b16 %v861
        %v2763 = vunpack.c.h.b16 %v861
        %v2764 = vunpack.c.l.b16 %v862
        %v2765 = vunpack.c.h.b16 %v862
        %v2766 = vunpack.c.l.b16 %v863
        %v2767 = vunpack.c.h.b16 %v863
        %v2768 = vunpack.c.l.b16 %v864
        %v2769 = vunpack.c.l.b16 %v865
        %v2770 = vunpack.c.h.b16 %v865
        %v2771 = vunpack.c.l.b16 %v866
        %v2772 = vunpack.c.h.b16 %v866
        %v2773 = vunpack.c.l.b16 %v867
        %v2774 = vunpack.c.h.b16 %v867
        %v2775 = vunpack.c.l.b16 %v868
        %v2776 = vunpack.c.h.b16 %v868
        %v2777 = vunpack.c.l.b16 %v869
        %v2778 = vunpack.c.l.b16 %v870
        %v2779 = vunpack.c.h.b16 %v870
        %v2780 = vunpack.c.l.b16 %v871
        %v2781 = vunpack.c.h.b16 %v871
        %v2782 = vunpack.c.l.b16 %v872
        %v2783 = vunpack.c.h.b16 %v872
        %v2784 = vunpack.c.l.b16 %v873
        %v2785 = vunpack.c.h.b16 %v873
        %v2786 = vunpack.c.l.b16 %v874
        %v2787 = vpack.c.b16 %v1644, %v1635
        %v2788 = vpack.c.b16 %v1645, %v1636
        %v2789 = vpack.c.b16 %v1646, %v1637
        %v2790 = vpack.c.b16 %v1647, %v1638
        %v2791 = vpack.c.b16 %v1648, %v1639
        %v2792 = vpack.c.b16 %v1649, %v1640
        %v2793 = vpack.c.b16 %v1650, %v1641
        %v2794 = vpack.c.b16 %v1651, %v1642
        %v2795 = vpack.c.b16 %v1652, %v1643
        %v2796 = vpack.c.b16 %v1662, %v1653
        %v2797 = vpack.c.b16 %v1663, %v1654
        %v2798 = vpack.c.b16 %v1664, %v1655
        %v2799 = vpack.c.b16 %v1665, %v1656
        %v2800 = vpack.c.b16 %v1666, %v1657
        %v2801 = vpack.c.b16 %v1667, %v1658
        %v2802 = vpack.c.b16 %v1668, %v1659
        %v2803 = vpack.c.b16 %v1669, %v1660
        %v2804 = vpack.c.b16 %v1670, %v1661
        %v2805 = vpack.c.b16 %v1680, %v1671
        %v2806 = vpack.c.b16 %v1681, %v1672
        %v2807 = vpack.c.b16 %v1682, %v1673
        %v2808 = vpack.c.b16 %v1683, %v1674
        %v2809 = vpack.c.b16 %v1684, %v1675
        %v2810 = vpack.c.b16 %v1685, %v1676
        %v2811 = vpack.c.b16 %v1686, %v1677
        %v2812 = vpack.c.b16 %v1687, %v1678
        %v2813 = vpack.c.b16 %v1688, %v1679
        %v2814 = vpack.c.b16 %v1698, %v1689
        %v2815 = vpack.c.b16 %v1699, %v1690
        %v2816 = vpack.c.b16 %v1700, %v1691
        %v2817 = vpack.c.b16 %v1701, %v1692
        %v2818 = vpack.c.b16 %v1702, %v1693
        %v2819 = vpack.c.b16 %v1703, %v1694
        %v2820 = vpack.c.b16 %v1704, %v1695
        %v2821 = vpack.c.b16 %v1705, %v1696
        %v2822 = vpack.c.b16 %v1706, %v1697
        %v2823 = vpack.c.b16 %v1716, %v1707
        %v2824 = vpack.c.b16 %v1717, %v1708
        %v2825 = vpack.c.b16 %v1718, %v1709
        %v2826 = vpack.c.b16 %v1719, %v1710
        %v2827 = vpack.c.b16 %v1720, %v1711
        %v2828 = vpack.c.b16 %v1721, %v1712
        %v2829 = vpack.c.b16 %v1722, %v1713
        %v2830 = vpack.c.b16 %v1723, %v1714
        %v2831 = vpack.c.b16 %v1724, %v1715
        %v2832 = vpack.c.b16 %v1734, %v1725
        %v2833 = vpack.c.b16 %v1735, %v1726
        %v2834 = vpack.c.b16 %v1736, %v1727
        %v2835 = vpack.c.b16 %v1737, %v1728
        %v2836 = vpack.c.b16 %v1738, %v1729
        %v2837 = vpack.c.b16 %v1739, %v1730
        %v2838 = vpack.c.b16 %v1740, %v1731
        %v2839 = vpack.c.b16 %v1741, %v1732
        %v2840 = vpack.c.b16 %v1742, %v1733
        %v2841 = vpack.c.b16 %v1752, %v1743
        %v2842 = vpack.c.b16 %v1753, %v1744
        %v2843 = vpack.c.b16 %v1754, %v1745
        %v2844 = vpack.c.b16 %v1755, %v1746
        %v2845 = vpack.c.b16 %v1756, %v1747
        %v2846 = vpack.c.b16 %v1757, %v1748
        %v2847 = vpack.c.b16 %v1758, %v1749
        %v2848 = vpack.c.b16 %v1759, %v1750
        %v2849 = vpack.c.b16 %v1760, %v1751
        %v2850 = vpack.c.b16 %v1770, %v1761
        %v2851 = vpack.c.b16 %v1771, %v1762
        %v2852 = vpack.c.b16 %v1772, %v1763
        %v2853 = vpack.c.b16 %v1773, %v1764
        %v2854 = vpack.c.b16 %v1774, %v1765
        %v2855 = vpack.c.b16 %v1775, %v1766
        %v2856 = vpack.c.b16 %v1776, %v1767
        %v2857 = vpack.c.b16 %v1777, %v1768
        %v2858 = vpack.c.b16 %v1778, %v1769
        %v2859 = vpack.c.b16 %v1788, %v1779
        %v2860 = vpack.c.b16 %v1789, %v1780
        %v2861 = vpack.c.b16 %v1790, %v1781
        %v2862 = vpack.c.b16 %v1791, %v1782
        %v2863 = vpack.c.b16 %v1792, %v1783
        %v2864 = vpack.c.b16 %v1793, %v1784
        %v2865 = vpack.c.b16 %v1794, %v1785
        %v2866 = vpack.c.b16 %v1795, %v1786
        %v2867 = vpack.c.b16 %v1796, %v1787
        %v2868 = vpack.c.b16 %v1806, %v1797
        %v2869 = vpack.c.b16 %v1807, %v1798
        %v2870 = vpack.c.b16 %v1808, %v1799
        %v2871 = vpack.c.b16 %v1809, %v1800
        %v2872 = vpack.c.b16 %v1810, %v1801
        %v2873 = vpack.c.b16 %v1811, %v1802
        %v2874 = vpack.c.b16 %v1812, %v1803
        %v2875 = vpack.c.b16 %v1813, %v1804
        %v2876 = vpack.c.b16 %v1814, %v1805
        %v2877 = vpack.c.b16 %v1824, %v1815
        %v2878 = vpack.c.b16 %v1825, %v1816
        %v2879 = vpack.c.b16 %v1826, %v1817
        %v2880 = vpack.c.b16 %v1827, %v1818
        %v2881 = vpack.c.b16 %v1828, %v1819
        %v2882 = vpack.c.b16 %v1829, %v1820
        %v2883 = vpack.c.b16 %v1830, %v1821
        %v2884 = vpack.c.b16 %v1831, %v1822
        %v2885 = vpack.c.b16 %v1832, %v1823
        %v2886 = vpack.c.b16 %v1842, %v1833
        %v2887 = vpack.c.b16 %v1843, %v1834
        %v2888 = vpack.c.b16 %v1844, %v1835
        %v2889 = vpack.c.b16 %v1845, %v1836
        %v2890 = vpack.c.b16 %v1846, %v1837
        %v2891 = vpack.c.b16 %v1847, %v1838
        %v2892 = vpack.c.b16 %v1848, %v1839
        %v2893 = vpack.c.b16 %v1849, %v1840
        %v2894 = vpack.c.b16 %v1850, %v1841
        %v2895 = vpack.c.b16 %v1860, %v1851
        %v2896 = vpack.c.b16 %v1861, %v1852
        %v2897 = vpack.c.b16 %v1862, %v1853
        %v2898 = vpack.c.b16 %v1863, %v1854
        %v2899 = vpack.c.b16 %v1864, %v1855
        %v2900 = vpack.c.b16 %v1865, %v1856
        %v2901 = vpack.c.b16 %v1866, %v1857
        %v2902 = vpack.c.b16 %v1867, %v1858
        %v2903 = vpack.c.b16 %v1868, %v1859
        %v2904 = vpack.c.b16 %v1878, %v1869
        %v2905 = vpack.c.b16 %v1879, %v1870
        %v2906 = vpack.c.b16 %v1880, %v1871
        %v2907 = vpack.c.b16 %v1881, %v1872
        %v2908 = vpack.c.b16 %v1882, %v1873
        %v2909 = vpack.c.b16 %v1883, %v1874
        %v2910 = vpack.c.b16 %v1884, %v1875
        %v2911 = vpack.c.b16 %v1885, %v1876
        %v2912 = vpack.c.b16 %v1886, %v1877
        %v2913 = vpack.c.b16 %v1896, %v1887
        %v2914 = vpack.c.b16 %v1897, %v1888
        %v2915 = vpack.c.b16 %v1898, %v1889
        %v2916 = vpack.c.b16 %v1899, %v1890
        %v2917 = vpack.c.b16 %v1900, %v1891
        %v2918 = vpack.c.b16 %v1901, %v1892
        %v2919 = vpack.c.b16 %v1902, %v1893
        %v2920 = vpack.c.b16 %v1903, %v1894
        %v2921 = vpack.c.b16 %v1904, %v1895
        %v2922 = vpack.c.b16 %v1914, %v1905
        %v2923 = vpack.c.b16 %v1915, %v1906
        %v2924 = vpack.c.b16 %v1916, %v1907
        %v2925 = vpack.c.b16 %v1917, %v1908
        %v2926 = vpack.c.b16 %v1918, %v1909
        %v2927 = vpack.c.b16 %v1919, %v1910
        %v2928 = vpack.c.b16 %v1920, %v1911
        %v2929 = vpack.c.b16 %v1921, %v1912
        %v2930 = vpack.c.b16 %v1922, %v1913
        %v2931 = vpack.c.b16 %v1932, %v1923
        %v2932 = vpack.c.b16 %v1933, %v1924
        %v2933 = vpack.c.b16 %v1934, %v1925
        %v2934 = vpack.c.b16 %v1935, %v1926
        %v2935 = vpack.c.b16 %v1936, %v1927
        %v2936 = vpack.c.b16 %v1937, %v1928
        %v2937 = vpack.c.b16 %v1938, %v1929
        %v2938 = vpack.c.b16 %v1939, %v1930
        %v2939 = vpack.c.b16 %v1940, %v1931
        %v2940 = vpack.c.b16 %v1950, %v1941
        %v2941 = vpack.c.b16 %v1951, %v1942
        %v2942 = vpack.c.b16 %v1952, %v1943
        %v2943 = vpack.c.b16 %v1953, %v1944
        %v2944 = vpack.c.b16 %v1954, %v1945
        %v2945 = vpack.c.b16 %v1955, %v1946
        %v2946 = vpack.c.b16 %v1956, %v1947
        %v2947 = vpack.c.b16 %v1957, %v1948
        %v2948 = vpack.c.b16 %v1958, %v1949
        %v2949 = vpack.c.b16 %v1968, %v1959
        %v2950 = vpack.c.b16 %v1969, %v1960
        %v2951 = vpack.c.b16 %v1970, %v1961
        %v2952 = vpack.c.b16 %v1971, %v1962
        %v2953 = vpack.c.b16 %v1972, %v1963
        %v2954 = vpack.c.b16 %v1973, %v1964
        %v2955 = vpack.c.b16 %v1974, %v1965
        %v2956 = vpack.c.b16 %v1975, %v1966
        %v2957 = vpack.c.b16 %v1976, %v1967
        %v2958 = vpack.c.b16 %v1986, %v1977
        %v2959 = vpack.c.b16 %v1987, %v1978
        %v2960 = vpack.c.b16 %v1988, %v1979
        %v2961 = vpack.c.b16 %v1989, %v1980
        %v2962 = vpack.c.b16 %v1990, %v1981
        %v2963 = vpack.c.b16 %v1991, %v1982
        %v2964 = vpack.c.b16 %v1992, %v1983
        %v2965 = vpack.c.b16 %v1993, %v1984
        %v2966 = vpack.c.b16 %v1994, %v1985
        %v2967 = vpack.c.b16 %v2004, %v1995
        %v2968 = vpack.c.b16 %v2005, %v1996
        %v2969 = vpack.c.b16 %v2006, %v1997
        %v2970 = vpack.c.b16 %v2007, %v1998
        %v2971 = vpack.c.b16 %v2008, %v1999
        %v2972 = vpack.c.b16 %v2009, %v2000
        %v2973 = vpack.c.b16 %v2010, %v2001
        %v2974 = vpack.c.b16 %v2011, %v2002
        %v2975 = vpack.c.b16 %v2012, %v2003
        %v2976 = vpack.c.b16 %v2022, %v2013
        %v2977 = vpack.c.b16 %v2023, %v2014
        %v2978 = vpack.c.b16 %v2024, %v2015
        %v2979 = vpack.c.b16 %v2025, %v2016
        %v2980 = vpack.c.b16 %v2026, %v2017
        %v2981 = vpack.c.b16 %v2027, %v2018
        %v2982 = vpack.c.b16 %v2028, %v2019
        %v2983 = vpack.c.b16 %v2029, %v2020
        %v2984 = vpack.c.b16 %v2030, %v2021
        %v2985 = vpack.c.b16 %v2040, %v2031
        %v2986 = vpack.c.b16 %v2041, %v2032
        %v2987 = vpack.c.b16 %v2042, %v2033
        %v2988 = vpack.c.b16 %v2043, %v2034
        %v2989 = vpack.c.b16 %v2044, %v2035
        %v2990 = vpack.c.b16 %v2045, %v2036
        %v2991 = vpack.c.b16 %v2046, %v2037
        %v2992 = vpack.c.b16 %v2047, %v2038
        %v2993 = vpack.c.b16 %v2048, %v2039
        %v2994 = vpack.c.b16 %v2058, %v2049
        %v2995 = vpack.c.b16 %v2059, %v2050
        %v2996 = vpack.c.b16 %v2060, %v2051
        %v2997 = vpack.c.b16 %v2061, %v2052
        %v2998 = vpack.c.b16 %v2062, %v2053
        %v2999 = vpack.c.b16 %v2063, %v2054
        %v3000 = vpack.c.b16 %v2064, %v2055
        %v3001 = vpack.c.b16 %v2065, %v2056
        %v3002 = vpack.c.b16 %v2066, %v2057
        %v3003 = vpack.c.b16 %v2076, %v2067
        %v3004 = vpack.c.b16 %v2077, %v2068
        %v3005 = vpack.c.b16 %v2078, %v2069
        %v3006 = vpack.c.b16 %v2079, %v2070
        %v3007 = vpack.c.b16 %v2080, %v2071
        %v3008 = vpack.c.b16 %v2081, %v2072
        %v3009 = vpack.c.b16 %v2082, %v2073
        %v3010 = vpack.c.b16 %v2083, %v2074
        %v3011 = vpack.c.b16 %v2084, %v2075
        %v3012 = vpack.c.b16 %v2094, %v2085
        %v3013 = vpack.c.b16 %v2095, %v2086
        %v3014 = vpack.c.b16 %v2096, %v2087
        %v3015 = vpack.c.b16 %v2097, %v2088
        %v3016 = vpack.c.b16 %v2098, %v2089
        %v3017 = vpack.c.b16 %v2099, %v2090
        %v3018 = vpack.c.b16 %v2100, %v2091
        %v3019 = vpack.c.b16 %v2101, %v2092
        %v3020 = vpack.c.b16 %v2102, %v2093
        %v3021 = vpack.c.b16 %v2112, %v2103
        %v3022 = vpack.c.b16 %v2113, %v2104
        %v3023 = vpack.c.b16 %v2114, %v2105
        %v3024 = vpack.c.b16 %v2115, %v2106
        %v3025 = vpack.c.b16 %v2116, %v2107
        %v3026 = vpack.c.b16 %v2117, %v2108
        %v3027 = vpack.c.b16 %v2118, %v2109
        %v3028 = vpack.c.b16 %v2119, %v2110
        %v3029 = vpack.c.b16 %v2120, %v2111
        %v3030 = vpack.c.b16 %v2130, %v2121
        %v3031 = vpack.c.b16 %v2131, %v2122
        %v3032 = vpack.c.b16 %v2132, %v2123
        %v3033 = vpack.c.b16 %v2133, %v2124
        %v3034 = vpack.c.b16 %v2134, %v2125
        %v3035 = vpack.c.b16 %v2135, %v2126
        %v3036 = vpack.c.b16 %v2136, %v2127
        %v3037 = vpack.c.b16 %v2137, %v2128
        %v3038 = vpack.c.b16 %v2138, %v2129
        %v3039 = vpack.c.b16 %v2148, %v2139
        %v3040 = vpack.c.b16 %v2149, %v2140
        %v3041 = vpack.c.b16 %v2150, %v2141
        %v3042 = vpack.c.b16 %v2151, %v2142
        %v3043 = vpack.c.b16 %v2152, %v2143
        %v3044 = vpack.c.b16 %v2153, %v2144
        %v3045 = vpack.c.b16 %v2154, %v2145
        %v3046 = vpack.c.b16 %v2155, %v2146
        %v3047 = vpack.c.b16 %v2156, %v2147
        %v3048 = vpack.c.b16 %v2166, %v2157
        %v3049 = vpack.c.b16 %v2167, %v2158
        %v3050 = vpack.c.b16 %v2168, %v2159
        %v3051 = vpack.c.b16 %v2169, %v2160
        %v3052 = vpack.c.b16 %v2170, %v2161
        %v3053 = vpack.c.b16 %v2171, %v2162
        %v3054 = vpack.c.b16 %v2172, %v2163
        %v3055 = vpack.c.b16 %v2173, %v2164
        %v3056 = vpack.c.b16 %v2174, %v2165
        %v3057 = vpack.c.b16 %v2184, %v2175
        %v3058 = vpack.c.b16 %v2185, %v2176
        %v3059 = vpack.c.b16 %v2186, %v2177
        %v3060 = vpack.c.b16 %v2187, %v2178
        %v3061 = vpack.c.b16 %v2188, %v2179
        %v3062 = vpack.c.b16 %v2189, %v2180
        %v3063 = vpack.c.b16 %v2190, %v2181
        %v3064 = vpack.c.b16 %v2191, %v2182
        %v3065 = vpack.c.b16 %v2192, %v2183
        %v3066 = vpack.c.b16 %v2202, %v2193
        %v3067 = vpack.c.b16 %v2203, %v2194
        %v3068 = vpack.c.b16 %v2204, %v2195
        %v3069 = vpack.c.b16 %v2205, %v2196
        %v3070 = vpack.c.b16 %v2206, %v2197
        %v3071 = vpack.c.b16 %v2207, %v2198
        %v3072 = vpack.c.b16 %v2208, %v2199
        %v3073 = vpack.c.b16 %v2209, %v2200
        %v3074 = vpack.c.b16 %v2210, %v2201
        %v3075 = vpack.c.b16 %v2220, %v2211
        %v3076 = vpack.c.b16 %v2221, %v2212
        %v3077 = vpack.c.b16 %v2222, %v2213
        %v3078 = vpack.c.b16 %v2223, %v2214
        %v3079 = vpack.c.b16 %v2224, %v2215
        %v3080 = vpack.c.b16 %v2225, %v2216
        %v3081 = vpack.c.b16 %v2226, %v2217
        %v3082 = vpack.c.b16 %v2227, %v2218
        %v3083 = vpack.c.b16 %v2228, %v2219
        %v3084 = vpack.c.b16 %v2238, %v2229
        %v3085 = vpack.c.b16 %v2239, %v2230
        %v3086 = vpack.c.b16 %v2240, %v2231
        %v3087 = vpack.c.b16 %v2241, %v2232
        %v3088 = vpack.c.b16 %v2242, %v2233
        %v3089 = vpack.c.b16 %v2243, %v2234
        %v3090 = vpack.c.b16 %v2244, %v2235
        %v3091 = vpack.c.b16 %v2245, %v2236
        %v3092 = vpack.c.b16 %v2246, %v2237
        %v3093 = vpack.c.b16 %v2256, %v2247
        %v3094 = vpack.c.b16 %v2257, %v2248
        %v3095 = vpack.c.b16 %v2258, %v2249
        %v3096 = vpack.c.b16 %v2259, %v2250
        %v3097 = vpack.c.b16 %v2260, %v2251
        %v3098 = vpack.c.b16 %v2261, %v2252
        %v3099 = vpack.c.b16 %v2262, %v2253
        %v3100 = vpack.c.b16 %v2263, %v2254
        %v3101 = vpack.c.b16 %v2264, %v2255
        %v3102 = vpack.c.b16 %v2274, %v2265
        %v3103 = vpack.c.b16 %v2275, %v2266
        %v3104 = vpack.c.b16 %v2276, %v2267
        %v3105 = vpack.c.b16 %v2277, %v2268
        %v3106 = vpack.c.b16 %v2278, %v2269
        %v3107 = vpack.c.b16 %v2279, %v2270
        %v3108 = vpack.c.b16 %v2280, %v2271
        %v3109 = vpack.c.b16 %v2281, %v2272
        %v3110 = vpack.c.b16 %v2282, %v2273
        %v3111 = vpack.c.b16 %v2292, %v2283
        %v3112 = vpack.c.b16 %v2293, %v2284
        %v3113 = vpack.c.b16 %v2294, %v2285
        %v3114 = vpack.c.b16 %v2295, %v2286
        %v3115 = vpack.c.b16 %v2296, %v2287
        %v3116 = vpack.c.b16 %v2297, %v2288
        %v3117 = vpack.c.b16 %v2298, %v2289
        %v3118 = vpack.c.b16 %v2299, %v2290
        %v3119 = vpack.c.b16 %v2300, %v2291
        %v3120 = vpack.c.b16 %v2310, %v2301
        %v3121 = vpack.c.b16 %v2311, %v2302
        %v3122 = vpack.c.b16 %v2312, %v2303
        %v3123 = vpack.c.b16 %v2313, %v2304
        %v3124 = vpack.c.b16 %v2314, %v2305
        %v3125 = vpack.c.b16 %v2315, %v2306
        %v3126 = vpack.c.b16 %v2316, %v2307
        %v3127 = vpack.c.b16 %v2317, %v2308
        %v3128 = vpack.c.b16 %v2318, %v2309
        %v3129 = vpack.c.b16 %v2328, %v2319
        %v3130 = vpack.c.b16 %v2329, %v2320
        %v3131 = vpack.c.b16 %v2330, %v2321
        %v3132 = vpack.c.b16 %v2331, %v2322
        %v3133 = vpack.c.b16 %v2332, %v2323
        %v3134 = vpack.c.b16 %v2333, %v2324
        %v3135 = vpack.c.b16 %v2334, %v2325
        %v3136 = vpack.c.b16 %v2335, %v2326
        %v3137 = vpack.c.b16 %v2336, %v2327
        %v3138 = vpack.c.b16 %v2346, %v2337
        %v3139 = vpack.c.b16 %v2347, %v2338
        %v3140 = vpack.c.b16 %v2348, %v2339
        %v3141 = vpack.c.b16 %v2349, %v2340
        %v3142 = vpack.c.b16 %v2350, %v2341
        %v3143 = vpack.c.b16 %v2351, %v2342
        %v3144 = vpack.c.b16 %v2352, %v2343
        %v3145 = vpack.c.b16 %v2353, %v2344
        %v3146 = vpack.c.b16 %v2354, %v2345
        %v3147 = vpack.c.b16 %v2364, %v2355
        %v3148 = vpack.c.b16 %v2365, %v2356
        %v3149 = vpack.c.b16 %v2366, %v2357
        %v3150 = vpack.c.b16 %v2367, %v2358
        %v3151 = vpack.c.b16 %v2368, %v2359
        %v3152 = vpack.c.b16 %v2369, %v2360
        %v3153 = vpack.c.b16 %v2370, %v2361
        %v3154 = vpack.c.b16 %v2371, %v2362
        %v3155 = vpack.c.b16 %v2372, %v2363
        %v3156 = vpack.c.b16 %v2382, %v2373
        %v3157 = vpack.c.b16 %v2383, %v2374
        %v3158 = vpack.c.b16 %v2384, %v2375
        %v3159 = vpack.c.b16 %v2385, %v2376
        %v3160 = vpack.c.b16 %v2386, %v2377
        %v3161 = vpack.c.b16 %v2387, %v2378
        %v3162 = vpack.c.b16 %v2388, %v2379
        %v3163 = vpack.c.b16 %v2389, %v2380
        %v3164 = vpack.c.b16 %v2390, %v2381
        %v3165 = vpack.c.b16 %v2400, %v2391
        %v3166 = vpack.c.b16 %v2401, %v2392
        %v3167 = vpack.c.b16 %v2402, %v2393
        %v3168 = vpack.c.b16 %v2403, %v2394
        %v3169 = vpack.c.b16 %v2404, %v2395
        %v3170 = vpack.c.b16 %v2405, %v2396
        %v3171 = vpack.c.b16 %v2406, %v2397
        %v3172 = vpack.c.b16 %v2407, %v2398
        %v3173 = vpack.c.b16 %v2408, %v2399
        %v3174 = vpack.c.b16 %v2418, %v2409
        %v3175 = vpack.c.b16 %v2419, %v2410
        %v3176 = vpack.c.b16 %v2420, %v2411
        %v3177 = vpack.c.b16 %v2421, %v2412
        %v3178 = vpack.c.b16 %v2422, %v2413
        %v3179 = vpack.c.b16 %v2423, %v2414
        %v3180 = vpack.c.b16 %v2424, %v2415
        %v3181 = vpack.c.b16 %v2425, %v2416
        %v3182 = vpack.c.b16 %v2426, %v2417
        %v3183 = vpack.c.b16 %v2436, %v2427
        %v3184 = vpack.c.b16 %v2437, %v2428
        %v3185 = vpack.c.b16 %v2438, %v2429
        %v3186 = vpack.c.b16 %v2439, %v2430
        %v3187 = vpack.c.b16 %v2440, %v2431
        %v3188 = vpack.c.b16 %v2441, %v2432
        %v3189 = vpack.c.b16 %v2442, %v2433
        %v3190 = vpack.c.b16 %v2443, %v2434
        %v3191 = vpack.c.b16 %v2444, %v2435
        %v3192 = vpack.c.b16 %v2454, %v2445
        %v3193 = vpack.c.b16 %v2455, %v2446
        %v3194 = vpack.c.b16 %v2456, %v2447
        %v3195 = vpack.c.b16 %v2457, %v2448
        %v3196 = vpack.c.b16 %v2458, %v2449
        %v3197 = vpack.c.b16 %v2459, %v2450
        %v3198 = vpack.c.b16 %v2460, %v2451
        %v3199 = vpack.c.b16 %v2461, %v2452
        %v3200 = vpack.c.b16 %v2462, %v2453
        %v3201 = vpack.c.b16 %v2472, %v2463
        %v3202 = vpack.c.b16 %v2473, %v2464
        %v3203 = vpack.c.b16 %v2474, %v2465
        %v3204 = vpack.c.b16 %v2475, %v2466
        %v3205 = vpack.c.b16 %v2476, %v2467
        %v3206 = vpack.c.b16 %v2477, %v2468
        %v3207 = vpack.c.b16 %v2478, %v2469
        %v3208 = vpack.c.b16 %v2479, %v2470
        %v3209 = vpack.c.b16 %v2480, %v2471
        %v3210 = vpack.c.b16 %v2490, %v2481
        %v3211 = vpack.c.b16 %v2491, %v2482
        %v3212 = vpack.c.b16 %v2492, %v2483
        %v3213 = vpack.c.b16 %v2493, %v2484
        %v3214 = vpack.c.b16 %v2494, %v2485
        %v3215 = vpack.c.b16 %v2495, %v2486
        %v3216 = vpack.c.b16 %v2496, %v2487
        %v3217 = vpack.c.b16 %v2497, %v2488
        %v3218 = vpack.c.b16 %v2498, %v2489
        %v3219 = vpack.c.b16 %v2508, %v2499
        %v3220 = vpack.c.b16 %v2509, %v2500
        %v3221 = vpack.c.b16 %v2510, %v2501
        %v3222 = vpack.c.b16 %v2511, %v2502
        %v3223 = vpack.c.b16 %v2512, %v2503
        %v3224 = vpack.c.b16 %v2513, %v2504
        %v3225 = vpack.c.b16 %v2514, %v2505
        %v3226 = vpack.c.b16 %v2515, %v2506
        %v3227 = vpack.c.b16 %v2516, %v2507
        %v3228 = vpack.c.b16 %v2526, %v2517
        %v3229 = vpack.c.b16 %v2527, %v2518
        %v3230 = vpack.c.b16 %v2528, %v2519
        %v3231 = vpack.c.b16 %v2529, %v2520
        %v3232 = vpack.c.b16 %v2530, %v2521
        %v3233 = vpack.c.b16 %v2531, %v2522
        %v3234 = vpack.c.b16 %v2532, %v2523
        %v3235 = vpack.c.b16 %v2533, %v2524
        %v3236 = vpack.c.b16 %v2534, %v2525
        %v3237 = vpack.c.b16 %v2544, %v2535
        %v3238 = vpack.c.b16 %v2545, %v2536
        %v3239 = vpack.c.b16 %v2546, %v2537
        %v3240 = vpack.c.b16 %v2547, %v2538
        %v3241 = vpack.c.b16 %v2548, %v2539
        %v3242 = vpack.c.b16 %v2549, %v2540
        %v3243 = vpack.c.b16 %v2550, %v2541
        %v3244 = vpack.c.b16 %v2551, %v2542
        %v3245 = vpack.c.b16 %v2552, %v2543
        %v3246 = vpack.c.b16 %v2562, %v2553
        %v3247 = vpack.c.b16 %v2563, %v2554
        %v3248 = vpack.c.b16 %v2564, %v2555
        %v3249 = vpack.c.b16 %v2565, %v2556
        %v3250 = vpack.c.b16 %v2566, %v2557
        %v3251 = vpack.c.b16 %v2567, %v2558
        %v3252 = vpack.c.b16 %v2568, %v2559
        %v3253 = vpack.c.b16 %v2569, %v2560
        %v3254 = vpack.c.b16 %v2570, %v2561
        %v3255 = vpack.c.b16 %v2580, %v2571
        %v3256 = vpack.c.b16 %v2581, %v2572
        %v3257 = vpack.c.b16 %v2582, %v2573
        %v3258 = vpack.c.b16 %v2583, %v2574
        %v3259 = vpack.c.b16 %v2584, %v2575
        %v3260 = vpack.c.b16 %v2585, %v2576
        %v3261 = vpack.c.b16 %v2586, %v2577
        %v3262 = vpack.c.b16 %v2587, %v2578
        %v3263 = vpack.c.b16 %v2588, %v2579
        %v3264 = vpack.c.b16 %v2598, %v2589
        %v3265 = vpack.c.b16 %v2599, %v2590
        %v3266 = vpack.c.b16 %v2600, %v2591
        %v3267 = vpack.c.b16 %v2601, %v2592
        %v3268 = vpack.c.b16 %v2602, %v2593
        %v3269 = vpack.c.b16 %v2603, %v2594
        %v3270 = vpack.c.b16 %v2604, %v2595
        %v3271 = vpack.c.b16 %v2605, %v2596
        %v3272 = vpack.c.b16 %v2606, %v2597
        %v3273 = vpack.c.b16 %v2616, %v2607
        %v3274 = vpack.c.b16 %v2617, %v2608
        %v3275 = vpack.c.b16 %v2618, %v2609
        %v3276 = vpack.c.b16 %v2619, %v2610
        %v3277 = vpack.c.b16 %v2620, %v2611
        %v3278 = vpack.c.b16 %v2621, %v2612
        %v3279 = vpack.c.b16 %v2622, %v2613
        %v3280 = vpack.c.b16 %v2623, %v2614
        %v3281 = vpack.c.b16 %v2624, %v2615
        %v3282 = vpack.c.b16 %v2634, %v2625
        %v3283 = vpack.c.b16 %v2635, %v2626
        %v3284 = vpack.c.b16 %v2636, %v2627
        %v3285 = vpack.c.b16 %v2637, %v2628
        %v3286 = vpack.c.b16 %v2638, %v2629
        %v3287 = vpack.c.b16 %v2639, %v2630
        %v3288 = vpack.c.b16 %v2640, %v2631
        %v3289 = vpack.c.b16 %v2641, %v2632
        %v3290 = vpack.c.b16 %v2642, %v2633
        %v3291 = vpack.c.b16 %v2652, %v2643
        %v3292 = vpack.c.b16 %v2653, %v2644
        %v3293 = vpack.c.b16 %v2654, %v2645
        %v3294 = vpack.c.b16 %v2655, %v2646
        %v3295 = vpack.c.b16 %v2656, %v2647
        %v3296 = vpack.c.b16 %v2657, %v2648
        %v3297 = vpack.c.b16 %v2658, %v2649
        %v3298 = vpack.c.b16 %v2659, %v2650
        %v3299 = vpack.c.b16 %v2660, %v2651
        %v3300 = vpack.c.b16 %v2670, %v2661
        %v3301 = vpack.c.b16 %v2671, %v2662
        %v3302 = vpack.c.b16 %v2672, %v2663
        %v3303 = vpack.c.b16 %v2673, %v2664
        %v3304 = vpack.c.b16 %v2674, %v2665
        %v3305 = vpack.c.b16 %v2675, %v2666
        %v3306 = vpack.c.b16 %v2676, %v2667
        %v3307 = vpack.c.b16 %v2677, %v2668
        %v3308 = vpack.c.b16 %v2678, %v2669
        %v3309 = vpack.c.b16 %v2688, %v2679
        %v3310 = vpack.c.b16 %v2689, %v2680
        %v3311 = vpack.c.b16 %v2690, %v2681
        %v3312 = vpack.c.b16 %v2691, %v2682
        %v3313 = vpack.c.b16 %v2692, %v2683
        %v3314 = vpack.c.b16 %v2693, %v2684
        %v3315 = vpack.c.b16 %v2694, %v2685
        %v3316 = vpack.c.b16 %v2695, %v2686
        %v3317 = vpack.c.b16 %v2696, %v2687
        %v3318 = vpack.c.b16 %v2706, %v2697
        %v3319 = vpack.c.b16 %v2707, %v2698
        %v3320 = vpack.c.b16 %v2708, %v2699
        %v3321 = vpack.c.b16 %v2709, %v2700
        %v3322 = vpack.c.b16 %v2710, %v2701
        %v3323 = vpack.c.b16 %v2711, %v2702
        %v3324 = vpack.c.b16 %v2712, %v2703
        %v3325 = vpack.c.b16 %v2713, %v2704
        %v3326 = vpack.c.b16 %v2714, %v2705
        %v3327 = vpack.c.b16 %v2724, %v2715
        %v3328 = vpack.c.b16 %v2725, %v2716
        %v3329 = vpack.c.b16 %v2726, %v2717
        %v3330 = vpack.c.b16 %v2727, %v2718
        %v3331 = vpack.c.b16 %v2728, %v2719
        %v3332 = vpack.c.b16 %v2729, %v2720
        %v3333 = vpack.c.b16 %v2730, %v2721
        %v3334 = vpack.c.b16 %v2731, %v2722
        %v3335 = vpack.c.b16 %v2732, %v2723
        %v3336 = vpack.c.b16 %v2742, %v2733
        %v3337 = vpack.c.b16 %v2743, %v2734
        %v3338 = vpack.c.b16 %v2744, %v2735
        %v3339 = vpack.c.b16 %v2745, %v2736
        %v3340 = vpack.c.b16 %v2746, %v2737
        %v3341 = vpack.c.b16 %v2747, %v2738
        %v3342 = vpack.c.b16 %v2748, %v2739
        %v3343 = vpack.c.b16 %v2749, %v2740
        %v3344 = vpack.c.b16 %v2750, %v2741
        %v3345 = vpack.c.b16 %v2760, %v2751
        %v3346 = vpack.c.b16 %v2761, %v2752
        %v3347 = vpack.c.b16 %v2762, %v2753
        %v3348 = vpack.c.b16 %v2763, %v2754
        %v3349 = vpack.c.b16 %v2764, %v2755
        %v3350 = vpack.c.b16 %v2765, %v2756
        %v3351 = vpack.c.b16 %v2766, %v2757
        %v3352 = vpack.c.b16 %v2767, %v2758
        %v3353 = vpack.c.b16 %v2768, %v2759
        %v3354 = vpack.c.b16 %v2778, %v2769
        %v3355 = vpack.c.b16 %v2779, %v2770
        %v3356 = vpack.c.b16 %v2780, %v2771
        %v3357 = vpack.c.b16 %v2781, %v2772
        %v3358 = vpack.c.b16 %v2782, %v2773
        %v3359 = vpack.c.b16 %v2783, %v2774
        %v3360 = vpack.c.b16 %v2784, %v2775
        %v3361 = vpack.c.b16 %v2785, %v2776
        %v3362 = vpack.c.b16 %v2786, %v2777
        %3939 = vmatprep.subr.bf16.mxu0 %v2788
        %3940 = vmatpush1.bf16.msra.mxu0 %v2787
        %3941 = vmatprep.subr.bf16.mxu0 %v2797
        %3942 = vmatpush1.bf16.msra.mxu0 %v2796
        %3943 = vmatprep.subr.bf16.mxu0 %v2806
        %3944 = vmatpush1.bf16.msra.mxu0 %v2805
        %3945 = vmatprep.subr.bf16.mxu0 %v2815
        %3946 = vmatpush1.bf16.msra.mxu0 %v2814
        %3947 = vmatprep.subr.bf16.mxu0 %v2824
        %3948 = vmatpush1.bf16.msra.mxu0 %v2823
        %3949 = vmatprep.subr.bf16.mxu0 %v2833
        %3950 = vmatpush1.bf16.msra.mxu0 %v2832
        %3951 = vmatprep.subr.bf16.mxu0 %v2842
        %3952 = vmatpush1.bf16.msra.mxu0 %v2841
        %3953 = vmatprep.subr.bf16.mxu0 %v2851
        %3954 = vmatpush1.bf16.msra.mxu0 %v2850
        %3955 = vmatprep.subr.bf16.mxu0 %v2860
        %3956 = vmatpush1.bf16.msra.mxu0 %v2859
        %3957 = vmatprep.subr.bf16.mxu0 %v2869
        %3958 = vmatpush1.bf16.msra.mxu0 %v2868
        %3959 = vmatprep.subr.bf16.mxu0 %v2878
        %3960 = vmatpush1.bf16.msra.mxu0 %v2877
        %3961 = vmatprep.subr.bf16.mxu0 %v2887
        %3962 = vmatpush1.bf16.msra.mxu0 %v2886
        %3963 = vmatprep.subr.bf16.mxu0 %v2896
        %3964 = vmatpush1.bf16.msra.mxu0 %v2895
        %3965 = vmatprep.subr.bf16.mxu0 %v2905
        %3966 = vmatpush1.bf16.msra.mxu0 %v2904
        %3967 = vmatprep.subr.bf16.mxu0 %v2914
        %3968 = vmatpush1.bf16.msra.mxu0 %v2913
        %3969 = vmatprep.subr.bf16.mxu0 %v2923
        %3970 = vmatpush1.bf16.msra.mxu0 %v2922
        %3971 = vmatprep.mubr.bf16.mxu0 %v948
        %3972 = vmatmul.mubr.bf16.gmra.mrb[0].mxu0 %v947
        %v3973 = vpop.f32.mrb[0].mxu0
        %v3974 = vadd.f32 0.0, %v3973
        %v3975 = vpop.f32.mrb[0].mxu0
        %v3976 = vadd.f32 0.0, %v3975
        %v3977 = vpop.f32.mrb[0].mxu0
        %v3978 = vadd.f32 0.0, %v3977
        %v3979 = vpop.f32.mrb[0].mxu0
        %v3980 = vadd.f32 0.0, %v3979
        %3981 = vmatprep.mubr.bf16.mxu0 %v956
        %3982 = vmatmul.mubr.bf16.gmra.mrb[0].mxu0 %v955
        %v3983 = vpop.f32.mrb[0].mxu0
        %v3984 = vadd.f32 0.0, %v3983
        %v3985 = vpop.f32.mrb[0].mxu0
        %v3986 = vadd.f32 0.0, %v3985
        %v3987 = vpop.f32.mrb[0].mxu0
        %v3988 = vadd.f32 0.0, %v3987
        %v3989 = vpop.f32.mrb[0].mxu0
        %v3990 = vadd.f32 0.0, %v3989
        %3991 = vmatprep.mubr.bf16.mxu0 %v964
        %3992 = vmatmul.mubr.bf16.gmra.mrb[0].mxu0 %v963
        %v3993 = vpop.f32.mrb[0].mxu0
        %v3994 = vadd.f32 0.0, %v3993
        %v3995 = vpop.f32.mrb[0].mxu0
        %v3996 = vadd.f32 0.0, %v3995
        %v3997 = vpop.f32.mrb[0].mxu0
        %v3998 = vadd.f32 0.0, %v3997
        %v3999 = vpop.f32.mrb[0].mxu0
        %v4000 = vadd.f32 0.0, %v3999
        %4001 = vdwg.mxu0
        %4002 = vmatprep.subr.bf16.mxu0 %v2932
        %4003 = vmatpush1.bf16.msra.mxu0 %v2931
        %4004 = vmatprep.subr.bf16.mxu0 %v2941
        %4005 = vmatpush1.bf16.msra.mxu0 %v2940
        %4006 = vmatprep.subr.bf16.mxu0 %v2950
        %4007 = vmatpush1.bf16.msra.mxu0 %v2949
        %4008 = vmatprep.subr.bf16.mxu0 %v2959
        %4009 = vmatpush1.bf16.msra.mxu0 %v2958
        %4010 = vmatprep.subr.bf16.mxu0 %v2968
        %4011 = vmatpush1.bf16.msra.mxu0 %v2967
        %4012 = vmatprep.subr.bf16.mxu0 %v2977
        %4013 = vmatpush1.bf16.msra.mxu0 %v2976
        %4014 = vmatprep.subr.bf16.mxu0 %v2986
        %4015 = vmatpush1.bf16.msra.mxu0 %v2985
        %4016 = vmatprep.subr.bf16.mxu0 %v2995
        %4017 = vmatpush1.bf16.msra.mxu0 %v2994
        %4018 = vmatprep.subr.bf16.mxu0 %v3004
        %4019 = vmatpush1.bf16.msra.mxu0 %v3003
        %4020 = vmatprep.subr.bf16.mxu0 %v3013
        %4021 = vmatpush1.bf16.msra.mxu0 %v3012
        %4022 = vmatprep.subr.bf16.mxu0 %v3022
        %4023 = vmatpush1.bf16.msra.mxu0 %v3021
        %4024 = vmatprep.subr.bf16.mxu0 %v3031
        %4025 = vmatpush1.bf16.msra.mxu0 %v3030
        %4026 = vmatprep.subr.bf16.mxu0 %v3040
        %4027 = vmatpush1.bf16.msra.mxu0 %v3039
        %4028 = vmatprep.subr.bf16.mxu0 %v3049
        %4029 = vmatpush1.bf16.msra.mxu0 %v3048
        %4030 = vmatprep.subr.bf16.mxu0 %v3058
        %4031 = vmatpush1.bf16.msra.mxu0 %v3057
        %4032 = vmatprep.subr.bf16.mxu0 %v3067
        %4033 = vmatpush1.bf16.msra.mxu0 %v3066
        %4034 = vmatprep.mubr.bf16.mxu0 %v950
        %4035 = vmatmul.mubr.bf16.gmra.mrb[0].mxu0 %v949
        %v4036 = vpop.f32.mrb[0].mxu0
        %v4037 = vadd.f32 %v3974, %v4036
        %v4038 = vpop.f32.mrb[0].mxu0
        %v4039 = vadd.f32 %v3976, %v4038
        %v4040 = vpop.f32.mrb[0].mxu0
        %v4041 = vadd.f32 %v3978, %v4040
        %v4042 = vpop.f32.mrb[0].mxu0
        %v4043 = vadd.f32 %v3980, %v4042
        %4044 = vmatprep.mubr.bf16.mxu0 %v958
        %4045 = vmatmul.mubr.bf16.gmra.mrb[0].mxu0 %v957
        %v4046 = vpop.f32.mrb[0].mxu0
        %v4047 = vadd.f32 %v3984, %v4046
        %v4048 = vpop.f32.mrb[0].mxu0
        %v4049 = vadd.f32 %v3986, %v4048
        %v4050 = vpop.f32.mrb[0].mxu0
        %v4051 = vadd.f32 %v3988, %v4050
        %v4052 = vpop.f32.mrb[0].mxu0
        %v4053 = vadd.f32 %v3990, %v4052
        %4054 = vmatprep.mubr.bf16.mxu0 %v966
        %4055 = vmatmul.mubr.bf16.gmra.mrb[0].mxu0 %v965
        %v4056 = vpop.f32.mrb[0].mxu0
        %v4057 = vadd.f32 %v3994, %v4056
        %v4058 = vpop.f32.mrb[0].mxu0
        %v4059 = vadd.f32 %v3996, %v4058
        %v4060 = vpop.f32.mrb[0].mxu0
        %v4061 = vadd.f32 %v3998, %v4060
        %v4062 = vpop.f32.mrb[0].mxu0
        %v4063 = vadd.f32 %v4000, %v4062
        %4064 = vdwg.mxu0
        %4065 = vmatprep.subr.bf16.mxu0 %v3076
        %4066 = vmatpush1.bf16.msra.mxu0 %v3075
        %4067 = vmatprep.subr.bf16.mxu0 %v3085
        %4068 = vmatpush1.bf16.msra.mxu0 %v3084
        %4069 = vmatprep.subr.bf16.mxu0 %v3094
        %4070 = vmatpush1.bf16.msra.mxu0 %v3093
        %4071 = vmatprep.subr.bf16.mxu0 %v3103
        %4072 = vmatpush1.bf16.msra.mxu0 %v3102
        %4073 = vmatprep.subr.bf16.mxu0 %v3112
        %4074 = vmatpush1.bf16.msra.mxu0 %v3111
        %4075 = vmatprep.subr.bf16.mxu0 %v3121
        %4076 = vmatpush1.bf16.msra.mxu0 %v3120
        %4077 = vmatprep.subr.bf16.mxu0 %v3130
        %4078 = vmatpush1.bf16.msra.mxu0 %v3129
        %4079 = vmatprep.subr.bf16.mxu0 %v3139
        %4080 = vmatpush1.bf16.msra.mxu0 %v3138
        %4081 = vmatprep.subr.bf16.mxu0 %v3148
        %4082 = vmatpush1.bf16.msra.mxu0 %v3147
        %4083 = vmatprep.subr.bf16.mxu0 %v3157
        %4084 = vmatpush1.bf16.msra.mxu0 %v3156
        %4085 = vmatprep.subr.bf16.mxu0 %v3166
        %4086 = vmatpush1.bf16.msra.mxu0 %v3165
        %4087 = vmatprep.subr.bf16.mxu0 %v3175
        %4088 = vmatpush1.bf16.msra.mxu0 %v3174
        %4089 = vmatprep.subr.bf16.mxu0 %v3184
        %4090 = vmatpush1.bf16.msra.mxu0 %v3183
        %4091 = vmatprep.subr.bf16.mxu0 %v3193
        %4092 = vmatpush1.bf16.msra.mxu0 %v3192
        %4093 = vmatprep.subr.bf16.mxu0 %v3202
        %4094 = vmatpush1.bf16.msra.mxu0 %v3201
        %4095 = vmatprep.subr.bf16.mxu0 %v3211
        %4096 = vmatpush1.bf16.msra.mxu0 %v3210
        %4097 = vmatprep.mubr.bf16.mxu0 %v952
        %4098 = vmatmul.mubr.bf16.gmra.mrb[0].mxu0 %v951
        %v4099 = vpop.f32.mrb[0].mxu0
        %v4100 = vadd.f32 %v4037, %v4099
        %v4101 = vpop.f32.mrb[0].mxu0
        %v4102 = vadd.f32 %v4039, %v4101
        %v4103 = vpop.f32.mrb[0].mxu0
        %v4104 = vadd.f32 %v4041, %v4103
        %v4105 = vpop.f32.mrb[0].mxu0
        %v4106 = vadd.f32 %v4043, %v4105
        %4107 = vmatprep.mubr.bf16.mxu0 %v960
        %4108 = vmatmul.mubr.bf16.gmra.mrb[0].mxu0 %v959
        %v4109 = vpop.f32.mrb[0].mxu0
        %v4110 = vadd.f32 %v4047, %v4109
        %v4111 = vpop.f32.mrb[0].mxu0
        %v4112 = vadd.f32 %v4049, %v4111
        %v4113 = vpop.f32.mrb[0].mxu0
        %v4114 = vadd.f32 %v4051, %v4113
        %v4115 = vpop.f32.mrb[0].mxu0
        %v4116 = vadd.f32 %v4053, %v4115
        %4117 = vmatprep.mubr.bf16.mxu0 %v968
        %4118 = vmatmul.mubr.bf16.gmra.mrb[0].mxu0 %v967
        %v4119 = vpop.f32.mrb[0].mxu0
        %v4120 = vadd.f32 %v4057, %v4119
        %v4121 = vpop.f32.mrb[0].mxu0
        %v4122 = vadd.f32 %v4059, %v4121
        %v4123 = vpop.f32.mrb[0].mxu0
        %v4124 = vadd.f32 %v4061, %v4123
        %v4125 = vpop.f32.mrb[0].mxu0
        %v4126 = vadd.f32 %v4063, %v4125
        %4127 = vdwg.mxu0
        %4128 = vmatprep.subr.bf16.mxu0 %v3220
        %4129 = vmatpush1.bf16.msra.mxu0 %v3219
        %4130 = vmatprep.subr.bf16.mxu0 %v3229
        %4131 = vmatpush1.bf16.msra.mxu0 %v3228
        %4132 = vmatprep.subr.bf16.mxu0 %v3238
        %4133 = vmatpush1.bf16.msra.mxu0 %v3237
        %4134 = vmatprep.subr.bf16.mxu0 %v3247
        %4135 = vmatpush1.bf16.msra.mxu0 %v3246
        %4136 = vmatprep.subr.bf16.mxu0 %v3256
        %4137 = vmatpush1.bf16.msra.mxu0 %v3255
        %4138 = vmatprep.subr.bf16.mxu0 %v3265
        %4139 = vmatpush1.bf16.msra.mxu0 %v3264
        %4140 = vmatprep.subr.bf16.mxu0 %v3274
        %4141 = vmatpush1.bf16.msra.mxu0 %v3273
        %4142 = vmatprep.subr.bf16.mxu0 %v3283
        %4143 = vmatpush1.bf16.msra.mxu0 %v3282
        %4144 = vmatprep.subr.bf16.mxu0 %v3292
        %4145 = vmatpush1.bf16.msra.mxu0 %v3291
        %4146 = vmatprep.subr.bf16.mxu0 %v3301
        %4147 = vmatpush1.bf16.msra.mxu0 %v3300
        %4148 = vmatprep.subr.bf16.mxu0 %v3310
        %4149 = vmatpush1.bf16.msra.mxu0 %v3309
        %4150 = vmatprep.subr.bf16.mxu0 %v3319
        %4151 = vmatpush1.bf16.msra.mxu0 %v3318
        %4152 = vmatprep.subr.bf16.mxu0 %v3328
        %4153 = vmatpush1.bf16.msra.mxu0 %v3327
        %4154 = vmatprep.subr.bf16.mxu0 %v3337
        %4155 = vmatpush1.bf16.msra.mxu0 %v3336
        %4156 = vmatprep.subr.bf16.mxu0 %v3346
        %4157 = vmatpush1.bf16.msra.mxu0 %v3345
        %4158 = vmatprep.subr.bf16.mxu0 %v3355
        %4159 = vmatpush1.bf16.msra.mxu0 %v3354
        %4160 = vmatprep.mubr.bf16.mxu0 %v954
        %4161 = vmatmul.mubr.bf16.gmra.mrb[0].mxu0 %v953
        %v4162 = vpop.f32.mrb[0].mxu0
        %v4163 = vadd.f32 %v4100, %v4162
        %v4164 = vpop.f32.mrb[0].mxu0
        %v4165 = vadd.f32 %v4102, %v4164
        %v4166 = vpop.f32.mrb[0].mxu0
        %v4167 = vadd.f32 %v4104, %v4166
        %v4168 = vpop.f32.mrb[0].mxu0
        %v4169 = vadd.f32 %v4106, %v4168
        %4170 = vmatprep.mubr.bf16.mxu0 %v962
        %4171 = vmatmul.mubr.bf16.gmra.mrb[0].mxu0 %v961
        %v4172 = vpop.f32.mrb[0].mxu0
        %v4173 = vadd.f32 %v4110, %v4172
        %v4174 = vpop.f32.mrb[0].mxu0
        %v4175 = vadd.f32 %v4112, %v4174
        %v4176 = vpop.f32.mrb[0].mxu0
        %v4177 = vadd.f32 %v4114, %v4176
        %v4178 = vpop.f32.mrb[0].mxu0
        %v4179 = vadd.f32 %v4116, %v4178
        %4180 = vmatprep.mubr.bf16.mxu0 %v970
        %4181 = vmatmul.mubr.bf16.gmra.mrb[0].mxu0 %v969
        %v4182 = vpop.f32.mrb[0].mxu0
        %v4183 = vadd.f32 %v4120, %v4182
        %v4184 = vpop.f32.mrb[0].mxu0
        %v4185 = vadd.f32 %v4122, %v4184
        %v4186 = vpop.f32.mrb[0].mxu0
        %v4187 = vadd.f32 %v4124, %v4186
        %v4188 = vpop.f32.mrb[0].mxu0
        %v4189 = vadd.f32 %v4126, %v4188
        %4190 = vdwg.mxu0
        %4191 = vmatprep.subr.bf16.mxu0 %v2790
        %4192 = vmatpush1.bf16.msra.mxu0 %v2789
        %4193 = vmatprep.subr.bf16.mxu0 %v2799
        %4194 = vmatpush1.bf16.msra.mxu0 %v2798
        %4195 = vmatprep.subr.bf16.mxu0 %v2808
        %4196 = vmatpush1.bf16.msra.mxu0 %v2807
        %4197 = vmatprep.subr.bf16.mxu0 %v2817
        %4198 = vmatpush1.bf16.msra.mxu0 %v2816
        %4199 = vmatprep.subr.bf16.mxu0 %v2826
        %4200 = vmatpush1.bf16.msra.mxu0 %v2825
        %4201 = vmatprep.subr.bf16.mxu0 %v2835
        %4202 = vmatpush1.bf16.msra.mxu0 %v2834
        %4203 = vmatprep.subr.bf16.mxu0 %v2844
        %4204 = vmatpush1.bf16.msra.mxu0 %v2843
        %4205 = vmatprep.subr.bf16.mxu0 %v2853
        %4206 = vmatpush1.bf16.msra.mxu0 %v2852
        %4207 = vmatprep.subr.bf16.mxu0 %v2862
        %4208 = vmatpush1.bf16.msra.mxu0 %v2861
        %4209 = vmatprep.subr.bf16.mxu0 %v2871
        %4210 = vmatpush1.bf16.msra.mxu0 %v2870
        %4211 = vmatprep.subr.bf16.mxu0 %v2880
        %4212 = vmatpush1.bf16.msra.mxu0 %v2879
        %4213 = vmatprep.subr.bf16.mxu0 %v2889
        %4214 = vmatpush1.bf16.msra.mxu0 %v2888
        %4215 = vmatprep.subr.bf16.mxu0 %v2898
        %4216 = vmatpush1.bf16.msra.mxu0 %v2897
        %4217 = vmatprep.subr.bf16.mxu0 %v2907
        %4218 = vmatpush1.bf16.msra.mxu0 %v2906
        %4219 = vmatprep.subr.bf16.mxu0 %v2916
        %4220 = vmatpush1.bf16.msra.mxu0 %v2915
        %4221 = vmatprep.subr.bf16.mxu0 %v2925
        %4222 = vmatpush1.bf16.msra.mxu0 %v2924
        %4223 = vmatprep.mubr.bf16.mxu0 %v948
        %4224 = vmatmul.mubr.bf16.gmra.mrb[0].mxu0 %v947
        %v4225 = vpop.f32.mrb[0].mxu0
        %v4226 = vadd.f32 0.0, %v4225
        %v4227 = vpop.f32.mrb[0].mxu0
        %v4228 = vadd.f32 0.0, %v4227
        %v4229 = vpop.f32.mrb[0].mxu0
        %v4230 = vadd.f32 0.0, %v4229
        %v4231 = vpop.f32.mrb[0].mxu0
        %v4232 = vadd.f32 0.0, %v4231
        %4233 = vmatprep.mubr.bf16.mxu0 %v956
        %4234 = vmatmul.mubr.bf16.gmra.mrb[0].mxu0 %v955
        %v4235 = vpop.f32.mrb[0].mxu0
        %v4236 = vadd.f32 0.0, %v4235
        %v4237 = vpop.f32.mrb[0].mxu0
        %v4238 = vadd.f32 0.0, %v4237
        %v4239 = vpop.f32.mrb[0].mxu0
        %v4240 = vadd.f32 0.0, %v4239
        %v4241 = vpop.f32.mrb[0].mxu0
        %v4242 = vadd.f32 0.0, %v4241
        %4243 = vmatprep.mubr.bf16.mxu0 %v964
        %4244 = vmatmul.mubr.bf16.gmra.mrb[0].mxu0 %v963
        %v4245 = vpop.f32.mrb[0].mxu0
        %v4246 = vadd.f32 0.0, %v4245
        %v4247 = vpop.f32.mrb[0].mxu0
        %v4248 = vadd.f32 0.0, %v4247
        %v4249 = vpop.f32.mrb[0].mxu0
        %v4250 = vadd.f32 0.0, %v4249
        %v4251 = vpop.f32.mrb[0].mxu0
        %v4252 = vadd.f32 0.0, %v4251
        %4253 = vdwg.mxu0
        %4254 = vmatprep.subr.bf16.mxu0 %v2934
        %4255 = vmatpush1.bf16.msra.mxu0 %v2933
        %4256 = vmatprep.subr.bf16.mxu0 %v2943
        %4257 = vmatpush1.bf16.msra.mxu0 %v2942
        %4258 = vmatprep.subr.bf16.mxu0 %v2952
        %4259 = vmatpush1.bf16.msra.mxu0 %v2951
        %4260 = vmatprep.subr.bf16.mxu0 %v2961
        %4261 = vmatpush1.bf16.msra.mxu0 %v2960
        %4262 = vmatprep.subr.bf16.mxu0 %v2970
        %4263 = vmatpush1.bf16.msra.mxu0 %v2969
        %4264 = vmatprep.subr.bf16.mxu0 %v2979
        %4265 = vmatpush1.bf16.msra.mxu0 %v2978
        %4266 = vmatprep.subr.bf16.mxu0 %v2988
        %4267 = vmatpush1.bf16.msra.mxu0 %v2987
        %4268 = vmatprep.subr.bf16.mxu0 %v2997
        %4269 = vmatpush1.bf16.msra.mxu0 %v2996
        %4270 = vmatprep.subr.bf16.mxu0 %v3006
        %4271 = vmatpush1.bf16.msra.mxu0 %v3005
        %4272 = vmatprep.subr.bf16.mxu0 %v3015
        %4273 = vmatpush1.bf16.msra.mxu0 %v3014
        %4274 = vmatprep.subr.bf16.mxu0 %v3024
        %4275 = vmatpush1.bf16.msra.mxu0 %v3023
        %4276 = vmatprep.subr.bf16.mxu0 %v3033
        %4277 = vmatpush1.bf16.msra.mxu0 %v3032
        %4278 = vmatprep.subr.bf16.mxu0 %v3042
        %4279 = vmatpush1.bf16.msra.mxu0 %v3041
        %4280 = vmatprep.subr.bf16.mxu0 %v3051
        %4281 = vmatpush1.bf16.msra.mxu0 %v3050
        %4282 = vmatprep.subr.bf16.mxu0 %v3060
        %4283 = vmatpush1.bf16.msra.mxu0 %v3059
        %4284 = vmatprep.subr.bf16.mxu0 %v3069
        %4285 = vmatpush1.bf16.msra.mxu0 %v3068
        %4286 = vmatprep.mubr.bf16.mxu0 %v950
        %4287 = vmatmul.mubr.bf16.gmra.mrb[0].mxu0 %v949
        %v4288 = vpop.f32.mrb[0].mxu0
        %v4289 = vadd.f32 %v4226, %v4288
        %v4290 = vpop.f32.mrb[0].mxu0
        %v4291 = vadd.f32 %v4228, %v4290
        %v4292 = vpop.f32.mrb[0].mxu0
        %v4293 = vadd.f32 %v4230, %v4292
        %v4294 = vpop.f32.mrb[0].mxu0
        %v4295 = vadd.f32 %v4232, %v4294
        %4296 = vmatprep.mubr.bf16.mxu0 %v958
        %4297 = vmatmul.mubr.bf16.gmra.mrb[0].mxu0 %v957
        %v4298 = vpop.f32.mrb[0].mxu0
        %v4299 = vadd.f32 %v4236, %v4298
        %v4300 = vpop.f32.mrb[0].mxu0
        %v4301 = vadd.f32 %v4238, %v4300
        %v4302 = vpop.f32.mrb[0].mxu0
        %v4303 = vadd.f32 %v4240, %v4302
        %v4304 = vpop.f32.mrb[0].mxu0
        %v4305 = vadd.f32 %v4242, %v4304
        %4306 = vmatprep.mubr.bf16.mxu0 %v966
        %4307 = vmatmul.mubr.bf16.gmra.mrb[0].mxu0 %v965
        %v4308 = vpop.f32.mrb[0].mxu0
        %v4309 = vadd.f32 %v4246, %v4308
        %v4310 = vpop.f32.mrb[0].mxu0
        %v4311 = vadd.f32 %v4248, %v4310
        %v4312 = vpop.f32.mrb[0].mxu0
        %v4313 = vadd.f32 %v4250, %v4312
        %v4314 = vpop.f32.mrb[0].mxu0
        %v4315 = vadd.f32 %v4252, %v4314
        %4316 = vdwg.mxu0
        %4317 = vmatprep.subr.bf16.mxu0 %v3078
        %4318 = vmatpush1.bf16.msra.mxu0 %v3077
        %4319 = vmatprep.subr.bf16.mxu0 %v3087
        %4320 = vmatpush1.bf16.msra.mxu0 %v3086
        %4321 = vmatprep.subr.bf16.mxu0 %v3096
        %4322 = vmatpush1.bf16.msra.mxu0 %v3095
        %4323 = vmatprep.subr.bf16.mxu0 %v3105
        %4324 = vmatpush1.bf16.msra.mxu0 %v3104
        %4325 = vmatprep.subr.bf16.mxu0 %v3114
        %4326 = vmatpush1.bf16.msra.mxu0 %v3113
        %4327 = vmatprep.subr.bf16.mxu0 %v3123
        %4328 = vmatpush1.bf16.msra.mxu0 %v3122
        %4329 = vmatprep.subr.bf16.mxu0 %v3132
        %4330 = vmatpush1.bf16.msra.mxu0 %v3131
        %4331 = vmatprep.subr.bf16.mxu0 %v3141
        %4332 = vmatpush1.bf16.msra.mxu0 %v3140
        %4333 = vmatprep.subr.bf16.mxu0 %v3150
        %4334 = vmatpush1.bf16.msra.mxu0 %v3149
        %4335 = vmatprep.subr.bf16.mxu0 %v3159
        %4336 = vmatpush1.bf16.msra.mxu0 %v3158
        %4337 = vmatprep.subr.bf16.mxu0 %v3168
        %4338 = vmatpush1.bf16.msra.mxu0 %v3167
        %4339 = vmatprep.subr.bf16.mxu0 %v3177
        %4340 = vmatpush1.bf16.msra.mxu0 %v3176
        %4341 = vmatprep.subr.bf16.mxu0 %v3186
        %4342 = vmatpush1.bf16.msra.mxu0 %v3185
        %4343 = vmatprep.subr.bf16.mxu0 %v3195
        %4344 = vmatpush1.bf16.msra.mxu0 %v3194
        %4345 = vmatprep.subr.bf16.mxu0 %v3204
        %4346 = vmatpush1.bf16.msra.mxu0 %v3203
        %4347 = vmatprep.subr.bf16.mxu0 %v3213
        %4348 = vmatpush1.bf16.msra.mxu0 %v3212
        %4349 = vmatprep.mubr.bf16.mxu0 %v952
        %4350 = vmatmul.mubr.bf16.gmra.mrb[0].mxu0 %v951
        %v4351 = vpop.f32.mrb[0].mxu0
        %v4352 = vadd.f32 %v4289, %v4351
        %v4353 = vpop.f32.mrb[0].mxu0
        %v4354 = vadd.f32 %v4291, %v4353
        %v4355 = vpop.f32.mrb[0].mxu0
        %v4356 = vadd.f32 %v4293, %v4355
        %v4357 = vpop.f32.mrb[0].mxu0
        %v4358 = vadd.f32 %v4295, %v4357
        %4359 = vmatprep.mubr.bf16.mxu0 %v960
        %4360 = vmatmul.mubr.bf16.gmra.mrb[0].mxu0 %v959
        %v4361 = vpop.f32.mrb[0].mxu0
        %v4362 = vadd.f32 %v4299, %v4361
        %v4363 = vpop.f32.mrb[0].mxu0
        %v4364 = vadd.f32 %v4301, %v4363
        %v4365 = vpop.f32.mrb[0].mxu0
        %v4366 = vadd.f32 %v4303, %v4365
        %v4367 = vpop.f32.mrb[0].mxu0
        %v4368 = vadd.f32 %v4305, %v4367
        %4369 = vmatprep.mubr.bf16.mxu0 %v968
        %4370 = vmatmul.mubr.bf16.gmra.mrb[0].mxu0 %v967
        %v4371 = vpop.f32.mrb[0].mxu0
        %v4372 = vadd.f32 %v4309, %v4371
        %v4373 = vpop.f32.mrb[0].mxu0
        %v4374 = vadd.f32 %v4311, %v4373
        %v4375 = vpop.f32.mrb[0].mxu0
        %v4376 = vadd.f32 %v4313, %v4375
        %v4377 = vpop.f32.mrb[0].mxu0
        %v4378 = vadd.f32 %v4315, %v4377
        %4379 = vdwg.mxu0
        %4380 = vmatprep.subr.bf16.mxu0 %v3222
        %4381 = vmatpush1.bf16.msra.mxu0 %v3221
        %4382 = vmatprep.subr.bf16.mxu0 %v3231
        %4383 = vmatpush1.bf16.msra.mxu0 %v3230
        %4384 = vmatprep.subr.bf16.mxu0 %v3240
        %4385 = vmatpush1.bf16.msra.mxu0 %v3239
        %4386 = vmatprep.subr.bf16.mxu0 %v3249
        %4387 = vmatpush1.bf16.msra.mxu0 %v3248
        %4388 = vmatprep.subr.bf16.mxu0 %v3258
        %4389 = vmatpush1.bf16.msra.mxu0 %v3257
        %4390 = vmatprep.subr.bf16.mxu0 %v3267
        %4391 = vmatpush1.bf16.msra.mxu0 %v3266
        %4392 = vmatprep.subr.bf16.mxu0 %v3276
        %4393 = vmatpush1.bf16.msra.mxu0 %v3275
        %4394 = vmatprep.subr.bf16.mxu0 %v3285
        %4395 = vmatpush1.bf16.msra.mxu0 %v3284
        %4396 = vmatprep.subr.bf16.mxu0 %v3294
        %4397 = vmatpush1.bf16.msra.mxu0 %v3293
        %4398 = vmatprep.subr.bf16.mxu0 %v3303
        %4399 = vmatpush1.bf16.msra.mxu0 %v3302
        %4400 = vmatprep.subr.bf16.mxu0 %v3312
        %4401 = vmatpush1.bf16.msra.mxu0 %v3311
        %4402 = vmatprep.subr.bf16.mxu0 %v3321
        %4403 = vmatpush1.bf16.msra.mxu0 %v3320
        %4404 = vmatprep.subr.bf16.mxu0 %v3330
        %4405 = vmatpush1.bf16.msra.mxu0 %v3329
        %4406 = vmatprep.subr.bf16.mxu0 %v3339
        %4407 = vmatpush1.bf16.msra.mxu0 %v3338
        %4408 = vmatprep.subr.bf16.mxu0 %v3348
        %4409 = vmatpush1.bf16.msra.mxu0 %v3347
        %4410 = vmatprep.subr.bf16.mxu0 %v3357
        %4411 = vmatpush1.bf16.msra.mxu0 %v3356
        %4412 = vmatprep.mubr.bf16.mxu0 %v954
        %4413 = vmatmul.mubr.bf16.gmra.mrb[0].mxu0 %v953
        %v4414 = vpop.f32.mrb[0].mxu0
        %v4415 = vadd.f32 %v4352, %v4414
        %v4416 = vpop.f32.mrb[0].mxu0
        %v4417 = vadd.f32 %v4354, %v4416
        %v4418 = vpop.f32.mrb[0].mxu0
        %v4419 = vadd.f32 %v4356, %v4418
        %v4420 = vpop.f32.mrb[0].mxu0
        %v4421 = vadd.f32 %v4358, %v4420
        %4422 = vmatprep.mubr.bf16.mxu0 %v962
        %4423 = vmatmul.mubr.bf16.gmra.mrb[0].mxu0 %v961
        %v4424 = vpop.f32.mrb[0].mxu0
        %v4425 = vadd.f32 %v4362, %v4424
        %v4426 = vpop.f32.mrb[0].mxu0
        %v4427 = vadd.f32 %v4364, %v4426
        %v4428 = vpop.f32.mrb[0].mxu0
        %v4429 = vadd.f32 %v4366, %v4428
        %v4430 = vpop.f32.mrb[0].mxu0
        %v4431 = vadd.f32 %v4368, %v4430
        %4432 = vmatprep.mubr.bf16.mxu0 %v970
        %4433 = vmatmul.mubr.bf16.gmra.mrb[0].mxu0 %v969
        %v4434 = vpop.f32.mrb[0].mxu0
        %v4435 = vadd.f32 %v4372, %v4434
        %v4436 = vpop.f32.mrb[0].mxu0
        %v4437 = vadd.f32 %v4374, %v4436
        %v4438 = vpop.f32.mrb[0].mxu0
        %v4439 = vadd.f32 %v4376, %v4438
        %v4440 = vpop.f32.mrb[0].mxu0
        %v4441 = vadd.f32 %v4378, %v4440
        %4442 = vdwg.mxu0
        %4443 = vmatprep.subr.bf16.mxu0 %v2792
        %4444 = vmatpush1.bf16.msra.mxu0 %v2791
        %4445 = vmatprep.subr.bf16.mxu0 %v2801
        %4446 = vmatpush1.bf16.msra.mxu0 %v2800
        %4447 = vmatprep.subr.bf16.mxu0 %v2810
        %4448 = vmatpush1.bf16.msra.mxu0 %v2809
        %4449 = vmatprep.subr.bf16.mxu0 %v2819
        %4450 = vmatpush1.bf16.msra.mxu0 %v2818
        %4451 = vmatprep.subr.bf16.mxu0 %v2828
        %4452 = vmatpush1.bf16.msra.mxu0 %v2827
        %4453 = vmatprep.subr.bf16.mxu0 %v2837
        %4454 = vmatpush1.bf16.msra.mxu0 %v2836
        %4455 = vmatprep.subr.bf16.mxu0 %v2846
        %4456 = vmatpush1.bf16.msra.mxu0 %v2845
        %4457 = vmatprep.subr.bf16.mxu0 %v2855
        %4458 = vmatpush1.bf16.msra.mxu0 %v2854
        %4459 = vmatprep.subr.bf16.mxu0 %v2864
        %4460 = vmatpush1.bf16.msra.mxu0 %v2863
        %4461 = vmatprep.subr.bf16.mxu0 %v2873
        %4462 = vmatpush1.bf16.msra.mxu0 %v2872
        %4463 = vmatprep.subr.bf16.mxu0 %v2882
        %4464 = vmatpush1.bf16.msra.mxu0 %v2881
        %4465 = vmatprep.subr.bf16.mxu0 %v2891
        %4466 = vmatpush1.bf16.msra.mxu0 %v2890
        %4467 = vmatprep.subr.bf16.mxu0 %v2900
        %4468 = vmatpush1.bf16.msra.mxu0 %v2899
        %4469 = vmatprep.subr.bf16.mxu0 %v2909
        %4470 = vmatpush1.bf16.msra.mxu0 %v2908
        %4471 = vmatprep.subr.bf16.mxu0 %v2918
        %4472 = vmatpush1.bf16.msra.mxu0 %v2917
        %4473 = vmatprep.subr.bf16.mxu0 %v2927
        %4474 = vmatpush1.bf16.msra.mxu0 %v2926
        %4475 = vmatprep.mubr.bf16.mxu0 %v948
        %4476 = vmatmul.mubr.bf16.gmra.mrb[0].mxu0 %v947
        %v4477 = vpop.f32.mrb[0].mxu0
        %v4478 = vadd.f32 0.0, %v4477
        %v4479 = vpop.f32.mrb[0].mxu0
        %v4480 = vadd.f32 0.0, %v4479
        %v4481 = vpop.f32.mrb[0].mxu0
        %v4482 = vadd.f32 0.0, %v4481
        %v4483 = vpop.f32.mrb[0].mxu0
        %v4484 = vadd.f32 0.0, %v4483
        %4485 = vmatprep.mubr.bf16.mxu0 %v956
        %4486 = vmatmul.mubr.bf16.gmra.mrb[0].mxu0 %v955
        %v4487 = vpop.f32.mrb[0].mxu0
        %v4488 = vadd.f32 0.0, %v4487
        %v4489 = vpop.f32.mrb[0].mxu0
        %v4490 = vadd.f32 0.0, %v4489
        %v4491 = vpop.f32.mrb[0].mxu0
        %v4492 = vadd.f32 0.0, %v4491
        %v4493 = vpop.f32.mrb[0].mxu0
        %v4494 = vadd.f32 0.0, %v4493
        %4495 = vmatprep.mubr.bf16.mxu0 %v964
        %4496 = vmatmul.mubr.bf16.gmra.mrb[0].mxu0 %v963
        %v4497 = vpop.f32.mrb[0].mxu0
        %v4498 = vadd.f32 0.0, %v4497
        %v4499 = vpop.f32.mrb[0].mxu0
        %v4500 = vadd.f32 0.0, %v4499
        %v4501 = vpop.f32.mrb[0].mxu0
        %v4502 = vadd.f32 0.0, %v4501
        %v4503 = vpop.f32.mrb[0].mxu0
        %v4504 = vadd.f32 0.0, %v4503
        %4505 = vdwg.mxu0
        %4506 = vmatprep.subr.bf16.mxu0 %v2936
        %4507 = vmatpush1.bf16.msra.mxu0 %v2935
        %4508 = vmatprep.subr.bf16.mxu0 %v2945
        %4509 = vmatpush1.bf16.msra.mxu0 %v2944
        %4510 = vmatprep.subr.bf16.mxu0 %v2954
        %4511 = vmatpush1.bf16.msra.mxu0 %v2953
        %4512 = vmatprep.subr.bf16.mxu0 %v2963
        %4513 = vmatpush1.bf16.msra.mxu0 %v2962
        %4514 = vmatprep.subr.bf16.mxu0 %v2972
        %4515 = vmatpush1.bf16.msra.mxu0 %v2971
        %4516 = vmatprep.subr.bf16.mxu0 %v2981
        %4517 = vmatpush1.bf16.msra.mxu0 %v2980
        %4518 = vmatprep.subr.bf16.mxu0 %v2990
        %4519 = vmatpush1.bf16.msra.mxu0 %v2989
        %4520 = vmatprep.subr.bf16.mxu0 %v2999
        %4521 = vmatpush1.bf16.msra.mxu0 %v2998
        %4522 = vmatprep.subr.bf16.mxu0 %v3008
        %4523 = vmatpush1.bf16.msra.mxu0 %v3007
        %4524 = vmatprep.subr.bf16.mxu0 %v3017
        %4525 = vmatpush1.bf16.msra.mxu0 %v3016
        %4526 = vmatprep.subr.bf16.mxu0 %v3026
        %4527 = vmatpush1.bf16.msra.mxu0 %v3025
        %4528 = vmatprep.subr.bf16.mxu0 %v3035
        %4529 = vmatpush1.bf16.msra.mxu0 %v3034
        %4530 = vmatprep.subr.bf16.mxu0 %v3044
        %4531 = vmatpush1.bf16.msra.mxu0 %v3043
        %4532 = vmatprep.subr.bf16.mxu0 %v3053
        %4533 = vmatpush1.bf16.msra.mxu0 %v3052
        %4534 = vmatprep.subr.bf16.mxu0 %v3062
        %4535 = vmatpush1.bf16.msra.mxu0 %v3061
        %4536 = vmatprep.subr.bf16.mxu0 %v3071
        %4537 = vmatpush1.bf16.msra.mxu0 %v3070
        %4538 = vmatprep.mubr.bf16.mxu0 %v950
        %4539 = vmatmul.mubr.bf16.gmra.mrb[0].mxu0 %v949
        %v4540 = vpop.f32.mrb[0].mxu0
        %v4541 = vadd.f32 %v4478, %v4540
        %v4542 = vpop.f32.mrb[0].mxu0
        %v4543 = vadd.f32 %v4480, %v4542
        %v4544 = vpop.f32.mrb[0].mxu0
        %v4545 = vadd.f32 %v4482, %v4544
        %v4546 = vpop.f32.mrb[0].mxu0
        %v4547 = vadd.f32 %v4484, %v4546
        %4548 = vmatprep.mubr.bf16.mxu0 %v958
        %4549 = vmatmul.mubr.bf16.gmra.mrb[0].mxu0 %v957
        %v4550 = vpop.f32.mrb[0].mxu0
        %v4551 = vadd.f32 %v4488, %v4550
        %v4552 = vpop.f32.mrb[0].mxu0
        %v4553 = vadd.f32 %v4490, %v4552
        %v4554 = vpop.f32.mrb[0].mxu0
        %v4555 = vadd.f32 %v4492, %v4554
        %v4556 = vpop.f32.mrb[0].mxu0
        %v4557 = vadd.f32 %v4494, %v4556
        %4558 = vmatprep.mubr.bf16.mxu0 %v966
        %4559 = vmatmul.mubr.bf16.gmra.mrb[0].mxu0 %v965
        %v4560 = vpop.f32.mrb[0].mxu0
        %v4561 = vadd.f32 %v4498, %v4560
        %v4562 = vpop.f32.mrb[0].mxu0
        %v4563 = vadd.f32 %v4500, %v4562
        %v4564 = vpop.f32.mrb[0].mxu0
        %v4565 = vadd.f32 %v4502, %v4564
        %v4566 = vpop.f32.mrb[0].mxu0
        %v4567 = vadd.f32 %v4504, %v4566
        %4568 = vdwg.mxu0
        %4569 = vmatprep.subr.bf16.mxu0 %v3080
        %4570 = vmatpush1.bf16.msra.mxu0 %v3079
        %4571 = vmatprep.subr.bf16.mxu0 %v3089
        %4572 = vmatpush1.bf16.msra.mxu0 %v3088
        %4573 = vmatprep.subr.bf16.mxu0 %v3098
        %4574 = vmatpush1.bf16.msra.mxu0 %v3097
        %4575 = vmatprep.subr.bf16.mxu0 %v3107
        %4576 = vmatpush1.bf16.msra.mxu0 %v3106
        %4577 = vmatprep.subr.bf16.mxu0 %v3116
        %4578 = vmatpush1.bf16.msra.mxu0 %v3115
        %4579 = vmatprep.subr.bf16.mxu0 %v3125
        %4580 = vmatpush1.bf16.msra.mxu0 %v3124
        %4581 = vmatprep.subr.bf16.mxu0 %v3134
        %4582 = vmatpush1.bf16.msra.mxu0 %v3133
        %4583 = vmatprep.subr.bf16.mxu0 %v3143
        %4584 = vmatpush1.bf16.msra.mxu0 %v3142
        %4585 = vmatprep.subr.bf16.mxu0 %v3152
        %4586 = vmatpush1.bf16.msra.mxu0 %v3151
        %4587 = vmatprep.subr.bf16.mxu0 %v3161
        %4588 = vmatpush1.bf16.msra.mxu0 %v3160
        %4589 = vmatprep.subr.bf16.mxu0 %v3170
        %4590 = vmatpush1.bf16.msra.mxu0 %v3169
        %4591 = vmatprep.subr.bf16.mxu0 %v3179
        %4592 = vmatpush1.bf16.msra.mxu0 %v3178
        %4593 = vmatprep.subr.bf16.mxu0 %v3188
        %4594 = vmatpush1.bf16.msra.mxu0 %v3187
        %4595 = vmatprep.subr.bf16.mxu0 %v3197
        %4596 = vmatpush1.bf16.msra.mxu0 %v3196
        %4597 = vmatprep.subr.bf16.mxu0 %v3206
        %4598 = vmatpush1.bf16.msra.mxu0 %v3205
        %4599 = vmatprep.subr.bf16.mxu0 %v3215
        %4600 = vmatpush1.bf16.msra.mxu0 %v3214
        %4601 = vmatprep.mubr.bf16.mxu0 %v952
        %4602 = vmatmul.mubr.bf16.gmra.mrb[0].mxu0 %v951
        %v4603 = vpop.f32.mrb[0].mxu0
        %v4604 = vadd.f32 %v4541, %v4603
        %v4605 = vpop.f32.mrb[0].mxu0
        %v4606 = vadd.f32 %v4543, %v4605
        %v4607 = vpop.f32.mrb[0].mxu0
        %v4608 = vadd.f32 %v4545, %v4607
        %v4609 = vpop.f32.mrb[0].mxu0
        %v4610 = vadd.f32 %v4547, %v4609
        %4611 = vmatprep.mubr.bf16.mxu0 %v960
        %4612 = vmatmul.mubr.bf16.gmra.mrb[0].mxu0 %v959
        %v4613 = vpop.f32.mrb[0].mxu0
        %v4614 = vadd.f32 %v4551, %v4613
        %v4615 = vpop.f32.mrb[0].mxu0
        %v4616 = vadd.f32 %v4553, %v4615
        %v4617 = vpop.f32.mrb[0].mxu0
        %v4618 = vadd.f32 %v4555, %v4617
        %v4619 = vpop.f32.mrb[0].mxu0
        %v4620 = vadd.f32 %v4557, %v4619
        %4621 = vmatprep.mubr.bf16.mxu0 %v968
        %4622 = vmatmul.mubr.bf16.gmra.mrb[0].mxu0 %v967
        %v4623 = vpop.f32.mrb[0].mxu0
        %v4624 = vadd.f32 %v4561, %v4623
        %v4625 = vpop.f32.mrb[0].mxu0
        %v4626 = vadd.f32 %v4563, %v4625
        %v4627 = vpop.f32.mrb[0].mxu0
        %v4628 = vadd.f32 %v4565, %v4627
        %v4629 = vpop.f32.mrb[0].mxu0
        %v4630 = vadd.f32 %v4567, %v4629
        %4631 = vdwg.mxu0
        %4632 = vmatprep.subr.bf16.mxu0 %v3224
        %4633 = vmatpush1.bf16.msra.mxu0 %v3223
        %4634 = vmatprep.subr.bf16.mxu0 %v3233
        %4635 = vmatpush1.bf16.msra.mxu0 %v3232
        %4636 = vmatprep.subr.bf16.mxu0 %v3242
        %4637 = vmatpush1.bf16.msra.mxu0 %v3241
        %4638 = vmatprep.subr.bf16.mxu0 %v3251
        %4639 = vmatpush1.bf16.msra.mxu0 %v3250
        %4640 = vmatprep.subr.bf16.mxu0 %v3260
        %4641 = vmatpush1.bf16.msra.mxu0 %v3259
        %4642 = vmatprep.subr.bf16.mxu0 %v3269
        %4643 = vmatpush1.bf16.msra.mxu0 %v3268
        %4644 = vmatprep.subr.bf16.mxu0 %v3278
        %4645 = vmatpush1.bf16.msra.mxu0 %v3277
        %4646 = vmatprep.subr.bf16.mxu0 %v3287
        %4647 = vmatpush1.bf16.msra.mxu0 %v3286
        %4648 = vmatprep.subr.bf16.mxu0 %v3296
        %4649 = vmatpush1.bf16.msra.mxu0 %v3295
        %4650 = vmatprep.subr.bf16.mxu0 %v3305
        %4651 = vmatpush1.bf16.msra.mxu0 %v3304
        %4652 = vmatprep.subr.bf16.mxu0 %v3314
        %4653 = vmatpush1.bf16.msra.mxu0 %v3313
        %4654 = vmatprep.subr.bf16.mxu0 %v3323
        %4655 = vmatpush1.bf16.msra.mxu0 %v3322
        %4656 = vmatprep.subr.bf16.mxu0 %v3332
        %4657 = vmatpush1.bf16.msra.mxu0 %v3331
        %4658 = vmatprep.subr.bf16.mxu0 %v3341
        %4659 = vmatpush1.bf16.msra.mxu0 %v3340
        %4660 = vmatprep.subr.bf16.mxu0 %v3350
        %4661 = vmatpush1.bf16.msra.mxu0 %v3349
        %4662 = vmatprep.subr.bf16.mxu0 %v3359
        %4663 = vmatpush1.bf16.msra.mxu0 %v3358
        %4664 = vmatprep.mubr.bf16.mxu0 %v954
        %4665 = vmatmul.mubr.bf16.gmra.mrb[0].mxu0 %v953
        %v4666 = vpop.f32.mrb[0].mxu0
        %v4667 = vadd.f32 %v4604, %v4666
        %v4668 = vpop.f32.mrb[0].mxu0
        %v4669 = vadd.f32 %v4606, %v4668
        %v4670 = vpop.f32.mrb[0].mxu0
        %v4671 = vadd.f32 %v4608, %v4670
        %v4672 = vpop.f32.mrb[0].mxu0
        %v4673 = vadd.f32 %v4610, %v4672
        %4674 = vmatprep.mubr.bf16.mxu0 %v962
        %4675 = vmatmul.mubr.bf16.gmra.mrb[0].mxu0 %v961
        %v4676 = vpop.f32.mrb[0].mxu0
        %v4677 = vadd.f32 %v4614, %v4676
        %v4678 = vpop.f32.mrb[0].mxu0
        %v4679 = vadd.f32 %v4616, %v4678
        %v4680 = vpop.f32.mrb[0].mxu0
        %v4681 = vadd.f32 %v4618, %v4680
        %v4682 = vpop.f32.mrb[0].mxu0
        %v4683 = vadd.f32 %v4620, %v4682
        %4684 = vmatprep.mubr.bf16.mxu0 %v970
        %4685 = vmatmul.mubr.bf16.gmra.mrb[0].mxu0 %v969
        %v4686 = vpop.f32.mrb[0].mxu0
        %v4687 = vadd.f32 %v4624, %v4686
        %v4688 = vpop.f32.mrb[0].mxu0
        %v4689 = vadd.f32 %v4626, %v4688
        %v4690 = vpop.f32.mrb[0].mxu0
        %v4691 = vadd.f32 %v4628, %v4690
        %v4692 = vpop.f32.mrb[0].mxu0
        %v4693 = vadd.f32 %v4630, %v4692
        %4694 = vdwg.mxu0
        %4695 = vmatprep.subr.bf16.mxu0 %v2794
        %4696 = vmatpush1.bf16.msra.mxu0 %v2793
        %4697 = vmatprep.subr.bf16.mxu0 %v2803
        %4698 = vmatpush1.bf16.msra.mxu0 %v2802
        %4699 = vmatprep.subr.bf16.mxu0 %v2812
        %4700 = vmatpush1.bf16.msra.mxu0 %v2811
        %4701 = vmatprep.subr.bf16.mxu0 %v2821
        %4702 = vmatpush1.bf16.msra.mxu0 %v2820
        %4703 = vmatprep.subr.bf16.mxu0 %v2830
        %4704 = vmatpush1.bf16.msra.mxu0 %v2829
        %4705 = vmatprep.subr.bf16.mxu0 %v2839
        %4706 = vmatpush1.bf16.msra.mxu0 %v2838
        %4707 = vmatprep.subr.bf16.mxu0 %v2848
        %4708 = vmatpush1.bf16.msra.mxu0 %v2847
        %4709 = vmatprep.subr.bf16.mxu0 %v2857
        %4710 = vmatpush1.bf16.msra.mxu0 %v2856
        %4711 = vmatprep.subr.bf16.mxu0 %v2866
        %4712 = vmatpush1.bf16.msra.mxu0 %v2865
        %4713 = vmatprep.subr.bf16.mxu0 %v2875
        %4714 = vmatpush1.bf16.msra.mxu0 %v2874
        %4715 = vmatprep.subr.bf16.mxu0 %v2884
        %4716 = vmatpush1.bf16.msra.mxu0 %v2883
        %4717 = vmatprep.subr.bf16.mxu0 %v2893
        %4718 = vmatpush1.bf16.msra.mxu0 %v2892
        %4719 = vmatprep.subr.bf16.mxu0 %v2902
        %4720 = vmatpush1.bf16.msra.mxu0 %v2901
        %4721 = vmatprep.subr.bf16.mxu0 %v2911
        %4722 = vmatpush1.bf16.msra.mxu0 %v2910
        %4723 = vmatprep.subr.bf16.mxu0 %v2920
        %4724 = vmatpush1.bf16.msra.mxu0 %v2919
        %4725 = vmatprep.subr.bf16.mxu0 %v2929
        %4726 = vmatpush1.bf16.msra.mxu0 %v2928
        %4727 = vmatprep.mubr.bf16.mxu0 %v948
        %4728 = vmatmul.mubr.bf16.gmra.mrb[0].mxu0 %v947
        %v4729 = vpop.f32.mrb[0].mxu0
        %v4730 = vadd.f32 0.0, %v4729
        %v4731 = vpop.f32.mrb[0].mxu0
        %v4732 = vadd.f32 0.0, %v4731
        %v4733 = vpop.f32.mrb[0].mxu0
        %v4734 = vadd.f32 0.0, %v4733
        %v4735 = vpop.f32.mrb[0].mxu0
        %v4736 = vadd.f32 0.0, %v4735
        %4737 = vmatprep.mubr.bf16.mxu0 %v956
        %4738 = vmatmul.mubr.bf16.gmra.mrb[0].mxu0 %v955
        %v4739 = vpop.f32.mrb[0].mxu0
        %v4740 = vadd.f32 0.0, %v4739
        %v4741 = vpop.f32.mrb[0].mxu0
        %v4742 = vadd.f32 0.0, %v4741
        %v4743 = vpop.f32.mrb[0].mxu0
        %v4744 = vadd.f32 0.0, %v4743
        %v4745 = vpop.f32.mrb[0].mxu0
        %v4746 = vadd.f32 0.0, %v4745
        %4747 = vmatprep.mubr.bf16.mxu0 %v964
        %4748 = vmatmul.mubr.bf16.gmra.mrb[0].mxu0 %v963
        %v4749 = vpop.f32.mrb[0].mxu0
        %v4750 = vadd.f32 0.0, %v4749
        %v4751 = vpop.f32.mrb[0].mxu0
        %v4752 = vadd.f32 0.0, %v4751
        %v4753 = vpop.f32.mrb[0].mxu0
        %v4754 = vadd.f32 0.0, %v4753
        %v4755 = vpop.f32.mrb[0].mxu0
        %v4756 = vadd.f32 0.0, %v4755
        %4757 = vdwg.mxu0
        %4758 = vmatprep.subr.bf16.mxu0 %v2938
        %4759 = vmatpush1.bf16.msra.mxu0 %v2937
        %4760 = vmatprep.subr.bf16.mxu0 %v2947
        %4761 = vmatpush1.bf16.msra.mxu0 %v2946
        %4762 = vmatprep.subr.bf16.mxu0 %v2956
        %4763 = vmatpush1.bf16.msra.mxu0 %v2955
        %4764 = vmatprep.subr.bf16.mxu0 %v2965
        %4765 = vmatpush1.bf16.msra.mxu0 %v2964
        %4766 = vmatprep.subr.bf16.mxu0 %v2974
        %4767 = vmatpush1.bf16.msra.mxu0 %v2973
        %4768 = vmatprep.subr.bf16.mxu0 %v2983
        %4769 = vmatpush1.bf16.msra.mxu0 %v2982
        %4770 = vmatprep.subr.bf16.mxu0 %v2992
        %4771 = vmatpush1.bf16.msra.mxu0 %v2991
        %4772 = vmatprep.subr.bf16.mxu0 %v3001
        %4773 = vmatpush1.bf16.msra.mxu0 %v3000
        %4774 = vmatprep.subr.bf16.mxu0 %v3010
        %4775 = vmatpush1.bf16.msra.mxu0 %v3009
        %4776 = vmatprep.subr.bf16.mxu0 %v3019
        %4777 = vmatpush1.bf16.msra.mxu0 %v3018
        %4778 = vmatprep.subr.bf16.mxu0 %v3028
        %4779 = vmatpush1.bf16.msra.mxu0 %v3027
        %4780 = vmatprep.subr.bf16.mxu0 %v3037
        %4781 = vmatpush1.bf16.msra.mxu0 %v3036
        %4782 = vmatprep.subr.bf16.mxu0 %v3046
        %4783 = vmatpush1.bf16.msra.mxu0 %v3045
        %4784 = vmatprep.subr.bf16.mxu0 %v3055
        %4785 = vmatpush1.bf16.msra.mxu0 %v3054
        %4786 = vmatprep.subr.bf16.mxu0 %v3064
        %4787 = vmatpush1.bf16.msra.mxu0 %v3063
        %4788 = vmatprep.subr.bf16.mxu0 %v3073
        %4789 = vmatpush1.bf16.msra.mxu0 %v3072
        %4790 = vmatprep.mubr.bf16.mxu0 %v950
        %4791 = vmatmul.mubr.bf16.gmra.mrb[0].mxu0 %v949
        %v4792 = vpop.f32.mrb[0].mxu0
        %v4793 = vadd.f32 %v4730, %v4792
        %v4794 = vpop.f32.mrb[0].mxu0
        %v4795 = vadd.f32 %v4732, %v4794
        %v4796 = vpop.f32.mrb[0].mxu0
        %v4797 = vadd.f32 %v4734, %v4796
        %v4798 = vpop.f32.mrb[0].mxu0
        %v4799 = vadd.f32 %v4736, %v4798
        %4800 = vmatprep.mubr.bf16.mxu0 %v958
        %4801 = vmatmul.mubr.bf16.gmra.mrb[0].mxu0 %v957
        %v4802 = vpop.f32.mrb[0].mxu0
        %v4803 = vadd.f32 %v4740, %v4802
        %v4804 = vpop.f32.mrb[0].mxu0
        %v4805 = vadd.f32 %v4742, %v4804
        %v4806 = vpop.f32.mrb[0].mxu0
        %v4807 = vadd.f32 %v4744, %v4806
        %v4808 = vpop.f32.mrb[0].mxu0
        %v4809 = vadd.f32 %v4746, %v4808
        %4810 = vmatprep.mubr.bf16.mxu0 %v966
        %4811 = vmatmul.mubr.bf16.gmra.mrb[0].mxu0 %v965
        %v4812 = vpop.f32.mrb[0].mxu0
        %v4813 = vadd.f32 %v4750, %v4812
        %v4814 = vpop.f32.mrb[0].mxu0
        %v4815 = vadd.f32 %v4752, %v4814
        %v4816 = vpop.f32.mrb[0].mxu0
        %v4817 = vadd.f32 %v4754, %v4816
        %v4818 = vpop.f32.mrb[0].mxu0
        %v4819 = vadd.f32 %v4756, %v4818
        %4820 = vdwg.mxu0
        %4821 = vmatprep.subr.bf16.mxu0 %v3082
        %4822 = vmatpush1.bf16.msra.mxu0 %v3081
        %4823 = vmatprep.subr.bf16.mxu0 %v3091
        %4824 = vmatpush1.bf16.msra.mxu0 %v3090
        %4825 = vmatprep.subr.bf16.mxu0 %v3100
        %4826 = vmatpush1.bf16.msra.mxu0 %v3099
        %4827 = vmatprep.subr.bf16.mxu0 %v3109
        %4828 = vmatpush1.bf16.msra.mxu0 %v3108
        %4829 = vmatprep.subr.bf16.mxu0 %v3118
        %4830 = vmatpush1.bf16.msra.mxu0 %v3117
        %4831 = vmatprep.subr.bf16.mxu0 %v3127
        %4832 = vmatpush1.bf16.msra.mxu0 %v3126
        %4833 = vmatprep.subr.bf16.mxu0 %v3136
        %4834 = vmatpush1.bf16.msra.mxu0 %v3135
        %4835 = vmatprep.subr.bf16.mxu0 %v3145
        %4836 = vmatpush1.bf16.msra.mxu0 %v3144
        %4837 = vmatprep.subr.bf16.mxu0 %v3154
        %4838 = vmatpush1.bf16.msra.mxu0 %v3153
        %4839 = vmatprep.subr.bf16.mxu0 %v3163
        %4840 = vmatpush1.bf16.msra.mxu0 %v3162
        %4841 = vmatprep.subr.bf16.mxu0 %v3172
        %4842 = vmatpush1.bf16.msra.mxu0 %v3171
        %4843 = vmatprep.subr.bf16.mxu0 %v3181
        %4844 = vmatpush1.bf16.msra.mxu0 %v3180
        %4845 = vmatprep.subr.bf16.mxu0 %v3190
        %4846 = vmatpush1.bf16.msra.mxu0 %v3189
        %4847 = vmatprep.subr.bf16.mxu0 %v3199
        %4848 = vmatpush1.bf16.msra.mxu0 %v3198
        %4849 = vmatprep.subr.bf16.mxu0 %v3208
        %4850 = vmatpush1.bf16.msra.mxu0 %v3207
        %4851 = vmatprep.subr.bf16.mxu0 %v3217
        %4852 = vmatpush1.bf16.msra.mxu0 %v3216
        %4853 = vmatprep.mubr.bf16.mxu0 %v952
        %4854 = vmatmul.mubr.bf16.gmra.mrb[0].mxu0 %v951
        %v4855 = vpop.f32.mrb[0].mxu0
        %v4856 = vadd.f32 %v4793, %v4855
        %v4857 = vpop.f32.mrb[0].mxu0
        %v4858 = vadd.f32 %v4795, %v4857
        %v4859 = vpop.f32.mrb[0].mxu0
        %v4860 = vadd.f32 %v4797, %v4859
        %v4861 = vpop.f32.mrb[0].mxu0
        %v4862 = vadd.f32 %v4799, %v4861
        %4863 = vmatprep.mubr.bf16.mxu0 %v960
        %4864 = vmatmul.mubr.bf16.gmra.mrb[0].mxu0 %v959
        %v4865 = vpop.f32.mrb[0].mxu0
        %v4866 = vadd.f32 %v4803, %v4865
        %v4867 = vpop.f32.mrb[0].mxu0
        %v4868 = vadd.f32 %v4805, %v4867
        %v4869 = vpop.f32.mrb[0].mxu0
        %v4870 = vadd.f32 %v4807, %v4869
        %v4871 = vpop.f32.mrb[0].mxu0
        %v4872 = vadd.f32 %v4809, %v4871
        %4873 = vmatprep.mubr.bf16.mxu0 %v968
        %4874 = vmatmul.mubr.bf16.gmra.mrb[0].mxu0 %v967
        %v4875 = vpop.f32.mrb[0].mxu0
        %v4876 = vadd.f32 %v4813, %v4875
        %v4877 = vpop.f32.mrb[0].mxu0
        %v4878 = vadd.f32 %v4815, %v4877
        %v4879 = vpop.f32.mrb[0].mxu0
        %v4880 = vadd.f32 %v4817, %v4879
        %v4881 = vpop.f32.mrb[0].mxu0
        %v4882 = vadd.f32 %v4819, %v4881
        %4883 = vdwg.mxu0
        %4884 = vmatprep.subr.bf16.mxu0 %v3226
        %4885 = vmatpush1.bf16.msra.mxu0 %v3225
        %4886 = vmatprep.subr.bf16.mxu0 %v3235
        %4887 = vmatpush1.bf16.msra.mxu0 %v3234
        %4888 = vmatprep.subr.bf16.mxu0 %v3244
        %4889 = vmatpush1.bf16.msra.mxu0 %v3243
        %4890 = vmatprep.subr.bf16.mxu0 %v3253
        %4891 = vmatpush1.bf16.msra.mxu0 %v3252
        %4892 = vmatprep.subr.bf16.mxu0 %v3262
        %4893 = vmatpush1.bf16.msra.mxu0 %v3261
        %4894 = vmatprep.subr.bf16.mxu0 %v3271
        %4895 = vmatpush1.bf16.msra.mxu0 %v3270
        %4896 = vmatprep.subr.bf16.mxu0 %v3280
        %4897 = vmatpush1.bf16.msra.mxu0 %v3279
        %4898 = vmatprep.subr.bf16.mxu0 %v3289
        %4899 = vmatpush1.bf16.msra.mxu0 %v3288
        %4900 = vmatprep.subr.bf16.mxu0 %v3298
        %4901 = vmatpush1.bf16.msra.mxu0 %v3297
        %4902 = vmatprep.subr.bf16.mxu0 %v3307
        %4903 = vmatpush1.bf16.msra.mxu0 %v3306
        %4904 = vmatprep.subr.bf16.mxu0 %v3316
        %4905 = vmatpush1.bf16.msra.mxu0 %v3315
        %4906 = vmatprep.subr.bf16.mxu0 %v3325
        %4907 = vmatpush1.bf16.msra.mxu0 %v3324
        %4908 = vmatprep.subr.bf16.mxu0 %v3334
        %4909 = vmatpush1.bf16.msra.mxu0 %v3333
        %4910 = vmatprep.subr.bf16.mxu0 %v3343
        %4911 = vmatpush1.bf16.msra.mxu0 %v3342
        %4912 = vmatprep.subr.bf16.mxu0 %v3352
        %4913 = vmatpush1.bf16.msra.mxu0 %v3351
        %4914 = vmatprep.subr.bf16.mxu0 %v3361
        %4915 = vmatpush1.bf16.msra.mxu0 %v3360
        %4916 = vmatprep.mubr.bf16.mxu0 %v954
        %4917 = vmatmul.mubr.bf16.gmra.mrb[0].mxu0 %v953
        %v4918 = vpop.f32.mrb[0].mxu0
        %v4919 = vadd.f32 %v4856, %v4918
        %v4920 = vpop.f32.mrb[0].mxu0
        %v4921 = vadd.f32 %v4858, %v4920
        %v4922 = vpop.f32.mrb[0].mxu0
        %v4923 = vadd.f32 %v4860, %v4922
        %v4924 = vpop.f32.mrb[0].mxu0
        %v4925 = vadd.f32 %v4862, %v4924
        %4926 = vmatprep.mubr.bf16.mxu0 %v962
        %4927 = vmatmul.mubr.bf16.gmra.mrb[0].mxu0 %v961
        %v4928 = vpop.f32.mrb[0].mxu0
        %v4929 = vadd.f32 %v4866, %v4928
        %v4930 = vpop.f32.mrb[0].mxu0
        %v4931 = vadd.f32 %v4868, %v4930
        %v4932 = vpop.f32.mrb[0].mxu0
        %v4933 = vadd.f32 %v4870, %v4932
        %v4934 = vpop.f32.mrb[0].mxu0
        %v4935 = vadd.f32 %v4872, %v4934
        %4936 = vmatprep.mubr.bf16.mxu0 %v970
        %4937 = vmatmul.mubr.bf16.gmra.mrb[0].mxu0 %v969
        %v4938 = vpop.f32.mrb[0].mxu0
        %v4939 = vadd.f32 %v4876, %v4938
        %v4940 = vpop.f32.mrb[0].mxu0
        %v4941 = vadd.f32 %v4878, %v4940
        %v4942 = vpop.f32.mrb[0].mxu0
        %v4943 = vadd.f32 %v4880, %v4942
        %v4944 = vpop.f32.mrb[0].mxu0
        %v4945 = vadd.f32 %v4882, %v4944
        %4946 = vdwg.mxu0
        %4947 = vmatprep.subr.bf16.mxu0 0
        %4948 = vmatpush1.bf16.msra.mxu0 %v2795
        %4949 = vmatprep.subr.bf16.mxu0 0
        %4950 = vmatpush1.bf16.msra.mxu0 %v2804
        %4951 = vmatprep.subr.bf16.mxu0 0
        %4952 = vmatpush1.bf16.msra.mxu0 %v2813
        %4953 = vmatprep.subr.bf16.mxu0 0
        %4954 = vmatpush1.bf16.msra.mxu0 %v2822
        %4955 = vmatprep.subr.bf16.mxu0 0
        %4956 = vmatpush1.bf16.msra.mxu0 %v2831
        %4957 = vmatprep.subr.bf16.mxu0 0
        %4958 = vmatpush1.bf16.msra.mxu0 %v2840
        %4959 = vmatprep.subr.bf16.mxu0 0
        %4960 = vmatpush1.bf16.msra.mxu0 %v2849
        %4961 = vmatprep.subr.bf16.mxu0 0
        %4962 = vmatpush1.bf16.msra.mxu0 %v2858
        %4963 = vmatprep.subr.bf16.mxu0 0
        %4964 = vmatpush1.bf16.msra.mxu0 %v2867
        %4965 = vmatprep.subr.bf16.mxu0 0
        %4966 = vmatpush1.bf16.msra.mxu0 %v2876
        %4967 = vmatprep.subr.bf16.mxu0 0
        %4968 = vmatpush1.bf16.msra.mxu0 %v2885
        %4969 = vmatprep.subr.bf16.mxu0 0
        %4970 = vmatpush1.bf16.msra.mxu0 %v2894
        %4971 = vmatprep.subr.bf16.mxu0 0
        %4972 = vmatpush1.bf16.msra.mxu0 %v2903
        %4973 = vmatprep.subr.bf16.mxu0 0
        %4974 = vmatpush1.bf16.msra.mxu0 %v2912
        %4975 = vmatprep.subr.bf16.mxu0 0
        %4976 = vmatpush1.bf16.msra.mxu0 %v2921
        %4977 = vmatprep.subr.bf16.mxu0 0
        %4978 = vmatpush1.bf16.msra.mxu0 %v2930
        %4979 = vmatprep.mubr.bf16.mxu0 %v948
        %4980 = vmatmul.mubr.bf16.gmra.mrb[0].mxu0 %v947
        %v4981 = vpop.f32.mrb[0].mxu0
        %v4982 = vadd.f32 0.0, %v4981
        %v4983 = vpop.f32.mrb[0].mxu0
        %v4984 = vpop.f32.mrb[0].mxu0
        %v4985 = vadd.f32 0.0, %v4984
        %v4986 = vpop.f32.mrb[0].mxu0
        %4987 = vmatprep.mubr.bf16.mxu0 %v956
        %4988 = vmatmul.mubr.bf16.gmra.mrb[0].mxu0 %v955
        %v4989 = vpop.f32.mrb[0].mxu0
        %v4990 = vadd.f32 0.0, %v4989
        %v4991 = vpop.f32.mrb[0].mxu0
        %v4992 = vpop.f32.mrb[0].mxu0
        %v4993 = vadd.f32 0.0, %v4992
        %v4994 = vpop.f32.mrb[0].mxu0
        %4995 = vmatprep.mubr.bf16.mxu0 %v964
        %4996 = vmatmul.mubr.bf16.gmra.mrb[0].mxu0 %v963
        %v4997 = vpop.f32.mrb[0].mxu0
        %v4998 = vadd.f32 0.0, %v4997
        %v4999 = vpop.f32.mrb[0].mxu0
        %v5000 = vpop.f32.mrb[0].mxu0
        %v5001 = vadd.f32 0.0, %v5000
        %v5002 = vpop.f32.mrb[0].mxu0
        %5003 = vdwg.mxu0
        %5004 = vmatprep.subr.bf16.mxu0 0
        %5005 = vmatpush1.bf16.msra.mxu0 %v2939
        %5006 = vmatprep.subr.bf16.mxu0 0
        %5007 = vmatpush1.bf16.msra.mxu0 %v2948
        %5008 = vmatprep.subr.bf16.mxu0 0
        %5009 = vmatpush1.bf16.msra.mxu0 %v2957
        %5010 = vmatprep.subr.bf16.mxu0 0
        %5011 = vmatpush1.bf16.msra.mxu0 %v2966
        %5012 = vmatprep.subr.bf16.mxu0 0
        %5013 = vmatpush1.bf16.msra.mxu0 %v2975
        %5014 = vmatprep.subr.bf16.mxu0 0
        %5015 = vmatpush1.bf16.msra.mxu0 %v2984
        %5016 = vmatprep.subr.bf16.mxu0 0
        %5017 = vmatpush1.bf16.msra.mxu0 %v2993
        %5018 = vmatprep.subr.bf16.mxu0 0
        %5019 = vmatpush1.bf16.msra.mxu0 %v3002
        %5020 = vmatprep.subr.bf16.mxu0 0
        %5021 = vmatpush1.bf16.msra.mxu0 %v3011
        %5022 = vmatprep.subr.bf16.mxu0 0
        %5023 = vmatpush1.bf16.msra.mxu0 %v3020
        %5024 = vmatprep.subr.bf16.mxu0 0
        %5025 = vmatpush1.bf16.msra.mxu0 %v3029
        %5026 = vmatprep.subr.bf16.mxu0 0
        %5027 = vmatpush1.bf16.msra.mxu0 %v3038
        %5028 = vmatprep.subr.bf16.mxu0 0
        %5029 = vmatpush1.bf16.msra.mxu0 %v3047
        %5030 = vmatprep.subr.bf16.mxu0 0
        %5031 = vmatpush1.bf16.msra.mxu0 %v3056
        %5032 = vmatprep.subr.bf16.mxu0 0
        %5033 = vmatpush1.bf16.msra.mxu0 %v3065
        %5034 = vmatprep.subr.bf16.mxu0 0
        %5035 = vmatpush1.bf16.msra.mxu0 %v3074
        %5036 = vmatprep.mubr.bf16.mxu0 %v950
        %5037 = vmatmul.mubr.bf16.gmra.mrb[0].mxu0 %v949
        %v5038 = vpop.f32.mrb[0].mxu0
        %v5039 = vadd.f32 %v4982, %v5038
        %v5040 = vpop.f32.mrb[0].mxu0
        %v5041 = vpop.f32.mrb[0].mxu0
        %v5042 = vadd.f32 %v4985, %v5041
        %v5043 = vpop.f32.mrb[0].mxu0
        %5044 = vmatprep.mubr.bf16.mxu0 %v958
        %5045 = vmatmul.mubr.bf16.gmra.mrb[0].mxu0 %v957
        %v5046 = vpop.f32.mrb[0].mxu0
        %v5047 = vadd.f32 %v4990, %v5046
        %v5048 = vpop.f32.mrb[0].mxu0
        %v5049 = vpop.f32.mrb[0].mxu0
        %v5050 = vadd.f32 %v4993, %v5049
        %v5051 = vpop.f32.mrb[0].mxu0
        %5052 = vmatprep.mubr.bf16.mxu0 %v966
        %5053 = vmatmul.mubr.bf16.gmra.mrb[0].mxu0 %v965
        %v5054 = vpop.f32.mrb[0].mxu0
        %v5055 = vadd.f32 %v4998, %v5054
        %v5056 = vpop.f32.mrb[0].mxu0
        %v5057 = vpop.f32.mrb[0].mxu0
        %v5058 = vadd.f32 %v5001, %v5057
        %v5059 = vpop.f32.mrb[0].mxu0
        %5060 = vdwg.mxu0
        %5061 = vmatprep.subr.bf16.mxu0 0
        %5062 = vmatpush1.bf16.msra.mxu0 %v3083
        %5063 = vmatprep.subr.bf16.mxu0 0
        %5064 = vmatpush1.bf16.msra.mxu0 %v3092
        %5065 = vmatprep.subr.bf16.mxu0 0
        %5066 = vmatpush1.bf16.msra.mxu0 %v3101
        %5067 = vmatprep.subr.bf16.mxu0 0
        %5068 = vmatpush1.bf16.msra.mxu0 %v3110
        %5069 = vmatprep.subr.bf16.mxu0 0
        %5070 = vmatpush1.bf16.msra.mxu0 %v3119
        %5071 = vmatprep.subr.bf16.mxu0 0
        %5072 = vmatpush1.bf16.msra.mxu0 %v3128
        %5073 = vmatprep.subr.bf16.mxu0 0
        %5074 = vmatpush1.bf16.msra.mxu0 %v3137
        %5075 = vmatprep.subr.bf16.mxu0 0
        %5076 = vmatpush1.bf16.msra.mxu0 %v3146
        %5077 = vmatprep.subr.bf16.mxu0 0
        %5078 = vmatpush1.bf16.msra.mxu0 %v3155
        %5079 = vmatprep.subr.bf16.mxu0 0
        %5080 = vmatpush1.bf16.msra.mxu0 %v3164
        %5081 = vmatprep.subr.bf16.mxu0 0
        %5082 = vmatpush1.bf16.msra.mxu0 %v3173
        %5083 = vmatprep.subr.bf16.mxu0 0
        %5084 = vmatpush1.bf16.msra.mxu0 %v3182
        %5085 = vmatprep.subr.bf16.mxu0 0
        %5086 = vmatpush1.bf16.msra.mxu0 %v3191
        %5087 = vmatprep.subr.bf16.mxu0 0
        %5088 = vmatpush1.bf16.msra.mxu0 %v3200
        %5089 = vmatprep.subr.bf16.mxu0 0
        %5090 = vmatpush1.bf16.msra.mxu0 %v3209
        %5091 = vmatprep.subr.bf16.mxu0 0
        %5092 = vmatpush1.bf16.msra.mxu0 %v3218
        %5093 = vmatprep.mubr.bf16.mxu0 %v952
        %5094 = vmatmul.mubr.bf16.gmra.mrb[0].mxu0 %v951
        %v5095 = vpop.f32.mrb[0].mxu0
        %v5096 = vadd.f32 %v5039, %v5095
        %v5097 = vpop.f32.mrb[0].mxu0
        %v5098 = vpop.f32.mrb[0].mxu0
        %v5099 = vadd.f32 %v5042, %v5098
        %v5100 = vpop.f32.mrb[0].mxu0
        %5101 = vmatprep.mubr.bf16.mxu0 %v960
        %5102 = vmatmul.mubr.bf16.gmra.mrb[0].mxu0 %v959
        %v5103 = vpop.f32.mrb[0].mxu0
        %v5104 = vadd.f32 %v5047, %v5103
        %v5105 = vpop.f32.mrb[0].mxu0
        %v5106 = vpop.f32.mrb[0].mxu0
        %v5107 = vadd.f32 %v5050, %v5106
        %v5108 = vpop.f32.mrb[0].mxu0
        %5109 = vmatprep.mubr.bf16.mxu0 %v968
        %5110 = vmatmul.mubr.bf16.gmra.mrb[0].mxu0 %v967
        %v5111 = vpop.f32.mrb[0].mxu0
        %v5112 = vadd.f32 %v5055, %v5111
        %v5113 = vpop.f32.mrb[0].mxu0
        %v5114 = vpop.f32.mrb[0].mxu0
        %v5115 = vadd.f32 %v5058, %v5114
        %v5116 = vpop.f32.mrb[0].mxu0
        %5117 = vdwg.mxu0
        %5118 = vmatprep.subr.bf16.mxu0 0
        %5119 = vmatpush1.bf16.msra.mxu0 %v3227
        %5120 = vmatprep.subr.bf16.mxu0 0
        %5121 = vmatpush1.bf16.msra.mxu0 %v3236
        %5122 = vmatprep.subr.bf16.mxu0 0
        %5123 = vmatpush1.bf16.msra.mxu0 %v3245
        %5124 = vmatprep.subr.bf16.mxu0 0
        %5125 = vmatpush1.bf16.msra.mxu0 %v3254
        %5126 = vmatprep.subr.bf16.mxu0 0
        %5127 = vmatpush1.bf16.msra.mxu0 %v3263
        %5128 = vmatprep.subr.bf16.mxu0 0
        %5129 = vmatpush1.bf16.msra.mxu0 %v3272
        %5130 = vmatprep.subr.bf16.mxu0 0
        %5131 = vmatpush1.bf16.msra.mxu0 %v3281
        %5132 = vmatprep.subr.bf16.mxu0 0
        %5133 = vmatpush1.bf16.msra.mxu0 %v3290
        %5134 = vmatprep.subr.bf16.mxu0 0
        %5135 = vmatpush1.bf16.msra.mxu0 %v3299
        %5136 = vmatprep.subr.bf16.mxu0 0
        %5137 = vmatpush1.bf16.msra.mxu0 %v3308
        %5138 = vmatprep.subr.bf16.mxu0 0
        %5139 = vmatpush1.bf16.msra.mxu0 %v3317
        %5140 = vmatprep.subr.bf16.mxu0 0
        %5141 = vmatpush1.bf16.msra.mxu0 %v3326
        %5142 = vmatprep.subr.bf16.mxu0 0
        %5143 = vmatpush1.bf16.msra.mxu0 %v3335
        %5144 = vmatprep.subr.bf16.mxu0 0
        %5145 = vmatpush1.bf16.msra.mxu0 %v3344
        %5146 = vmatprep.subr.bf16.mxu0 0
        %5147 = vmatpush1.bf16.msra.mxu0 %v3353
        %5148 = vmatprep.subr.bf16.mxu0 0
        %5149 = vmatpush1.bf16.msra.mxu0 %v3362
        %5150 = vmatprep.mubr.bf16.mxu0 %v954
        %5151 = vmatmul.mubr.bf16.gmra.mrb[0].mxu0 %v953
        %v5152 = vpop.f32.mrb[0].mxu0
        %v5153 = vadd.f32 %v5096, %v5152
        %v5154 = vpop.f32.mrb[0].mxu0
        %v5155 = vpop.f32.mrb[0].mxu0
        %v5156 = vadd.f32 %v5099, %v5155
        %v5157 = vpop.f32.mrb[0].mxu0
        %5158 = vmatprep.mubr.bf16.mxu0 %v962
        %5159 = vmatmul.mubr.bf16.gmra.mrb[0].mxu0 %v961
        %v5160 = vpop.f32.mrb[0].mxu0
        %v5161 = vadd.f32 %v5104, %v5160
        %v5162 = vpop.f32.mrb[0].mxu0
        %v5163 = vpop.f32.mrb[0].mxu0
        %v5164 = vadd.f32 %v5107, %v5163
        %v5165 = vpop.f32.mrb[0].mxu0
        %5166 = vmatprep.mubr.bf16.mxu0 %v970
        %5167 = vmatmul.mubr.bf16.gmra.mrb[0].mxu0 %v969
        %v5168 = vpop.f32.mrb[0].mxu0
        %v5169 = vadd.f32 %v5112, %v5168
        %v5170 = vpop.f32.mrb[0].mxu0
        %v5171 = vpop.f32.mrb[0].mxu0
        %v5172 = vadd.f32 %v5115, %v5171
        %v5173 = vpop.f32.mrb[0].mxu0
        %5174 = vdwg.mxu0
        %v5175 = vmul.f32 %v4163, %v4163
        %v5176 = vmul.f32 %v4165, %v4165
        %v5177 = vmul.f32 %v4415, %v4415
        %v5178 = vmul.f32 %v4417, %v4417
        %v5179 = vmul.f32 %v4167, %v4167
        %v5180 = vmul.f32 %v4169, %v4169
        %v5181 = vmul.f32 %v4419, %v4419
        %v5182 = vmul.f32 %v4421, %v4421
        %v5183 = vmul.f32 %v4173, %v4173
        %v5184 = vmul.f32 %v4175, %v4175
        %v5185 = vmul.f32 %v4425, %v4425
        %v5186 = vmul.f32 %v4427, %v4427
        %v5187 = vmul.f32 %v4669, %v4669
        %v5188 = vmul.f32 %v4919, %v4919
        %v5189 = vmul.f32 %v4921, %v4921
        %v5190 = vmul.f32 %v5153, %v5153
        %v5191 = vmul.f32 %v4673, %v4673
        %v5192 = vmul.f32 %v4923, %v4923
        %v5193 = vmul.f32 %v4925, %v4925
        %v5194 = vmul.f32 %v5156, %v5156
        %v5195 = vmul.f32 %v4679, %v4679
        %v5196 = vmul.f32 %v4929, %v4929
        %v5197 = vmul.f32 %v4931, %v4931
        %v5198 = vmul.f32 %v5161, %v5161
        %v5199 = vadd.f32 %v5175, %v5187
        %v5200 = vadd.f32 %v5176, %v5188
        %v5201 = vadd.f32 %v5177, %v5189
        %v5202 = vadd.f32 %v5178, %v5190
        %v5203 = vadd.f32 %v5179, %v5191
        %v5204 = vadd.f32 %v5180, %v5192
        %v5205 = vadd.f32 %v5181, %v5193
        %v5206 = vadd.f32 %v5182, %v5194
        %v5207 = vadd.f32 %v5183, %v5195
        %v5208 = vadd.f32 %v5184, %v5196
        %v5209 = vadd.f32 %v5185, %v5197
        %v5210 = vadd.f32 %v5186, %v5198
        %v5211 = vmax.f32 %v5199, 1e-07
        %v5212 = vmax.f32 %v5200, 1e-07
        %v5213 = vmax.f32 %v5201, 1e-07
        %v5214 = vmax.f32 %v5202, 1e-07
        %v5215 = vmax.f32 %v5203, 1e-07
        %v5216 = vmax.f32 %v5204, 1e-07
        %v5217 = vmax.f32 %v5205, 1e-07
        %v5218 = vmax.f32 %v5206, 1e-07
        %v5219 = vmax.f32 %v5207, 1e-07
        %v5220 = vmax.f32 %v5208, 1e-07
        %v5221 = vmax.f32 %v5209, 1e-07
        %v5222 = vmax.f32 %v5210, 1e-07
        %v5223 = vmul.f32 %v4177, %v4177
        %v5224 = vmul.f32 %v4179, %v4179
        %v5225 = vmul.f32 %v4429, %v4429
        %v5226 = vmul.f32 %v4431, %v4431
        %v5227 = vmul.f32 %v4183, %v4183
        %v5228 = vmul.f32 %v4185, %v4185
        %v5229 = vmul.f32 %v4435, %v4435
        %v5230 = vmul.f32 %v4437, %v4437
        %v5231 = vmul.f32 %v4187, %v4187
        %v5232 = vmul.f32 %v4189, %v4189
        %v5233 = vmul.f32 %v4439, %v4439
        %v5234 = vmul.f32 %v4441, %v4441
        %v5235 = vmul.f32 %v4683, %v4683
        %v5236 = vmul.f32 %v4933, %v4933
        %v5237 = vmul.f32 %v4935, %v4935
        %v5238 = vmul.f32 %v5164, %v5164
        %v5239 = vmul.f32 %v4689, %v4689
        %v5240 = vmul.f32 %v4939, %v4939
        %v5241 = vmul.f32 %v4941, %v4941
        %v5242 = vmul.f32 %v5169, %v5169
        %v5243 = vmul.f32 %v4693, %v4693
        %v5244 = vmul.f32 %v4943, %v4943
        %v5245 = vmul.f32 %v4945, %v4945
        %v5246 = vmul.f32 %v5172, %v5172
        %v5247 = vadd.f32 %v5223, %v5235
        %v5248 = vadd.f32 %v5224, %v5236
        %v5249 = vadd.f32 %v5225, %v5237
        %v5250 = vadd.f32 %v5226, %v5238
        %v5251 = vadd.f32 %v5227, %v5239
        %v5252 = vadd.f32 %v5228, %v5240
        %v5253 = vadd.f32 %v5229, %v5241
        %v5254 = vadd.f32 %v5230, %v5242
        %v5255 = vadd.f32 %v5231, %v5243
        %v5256 = vadd.f32 %v5232, %v5244
        %v5257 = vadd.f32 %v5233, %v5245
        %v5258 = vadd.f32 %v5234, %v5246
        %v5259 = vmax.f32 %v5247, 1e-07
        %v5260 = vmax.f32 %v5248, 1e-07
        %v5261 = vmax.f32 %v5249, 1e-07
        %v5262 = vmax.f32 %v5250, 1e-07
        %v5263 = vmax.f32 %v5251, 1e-07
        %v5264 = vmax.f32 %v5252, 1e-07
        %v5265 = vmax.f32 %v5253, 1e-07
        %v5266 = vmax.f32 %v5254, 1e-07
        %v5267 = vmax.f32 %v5255, 1e-07
        %v5268 = vmax.f32 %v5256, 1e-07
        %v5269 = vmax.f32 %v5257, 1e-07
        %v5270 = vmax.f32 %v5258, 1e-07
        %v5271 = vlaneseq
        %v5272 = vshrl.u32 %v5271, 7
        %v5273 = vadd.s32 %v5272, 8
        %v5274 = vadd.s32 %v5272, 16
        %s5275 = smul.u32 %s13, 24
        %v5276 = vstv %s5275
        %v5277 = vadd.s32 %v5272, %v5276
        %v5278 = vadd.s32 %v5273, %v5276
        %v5279 = vadd.s32 %v5274, %v5276
        %vm5280 = vcmp.lt.s32.totalorder %v5277, 42
        %vm5281 = vcmp.lt.s32.totalorder %v5278, 42
        %vm5282 = vcmp.lt.s32.totalorder %v5279, 42
        %v5283 = vrsqrt.pop %v5259
        %v5284 = vmul.f32 %v5259, %v5283
        %vm5285 = vcmp.eq.f32.partialorder %v5259, inf
        %v5286 = vsel %vm5285, %v5259, %v5284
        %vm5287 = vcmp.eq.f32.partialorder %v5259, 0.0
        %v5288 = vand.u32 %v5259, 2147483648
        %v5289 = vsel %vm5287, %v5288, %v5286
        %v5290 = vrsqrt.pop %v5260
        %v5291 = vmul.f32 %v5260, %v5290
        %vm5292 = vcmp.eq.f32.partialorder %v5260, inf
        %v5293 = vsel %vm5292, %v5260, %v5291
        %vm5294 = vcmp.eq.f32.partialorder %v5260, 0.0
        %v5295 = vand.u32 %v5260, 2147483648
        %v5296 = vsel %vm5294, %v5295, %v5293
        %v5297 = vrsqrt.pop %v5261
        %v5298 = vmul.f32 %v5261, %v5297
        %vm5299 = vcmp.eq.f32.partialorder %v5261, inf
        %v5300 = vsel %vm5299, %v5261, %v5298
        %vm5301 = vcmp.eq.f32.partialorder %v5261, 0.0
        %v5302 = vand.u32 %v5261, 2147483648
        %v5303 = vsel %vm5301, %v5302, %v5300
        %v5304 = vrsqrt.pop %v5262
        %v5305 = vmul.f32 %v5262, %v5304
        %vm5306 = vcmp.eq.f32.partialorder %v5262, inf
        %v5307 = vsel %vm5306, %v5262, %v5305
        %vm5308 = vcmp.eq.f32.partialorder %v5262, 0.0
        %v5309 = vand.u32 %v5262, 2147483648
        %v5310 = vsel %vm5308, %v5309, %v5307
        %v5311 = vrsqrt.pop %v5263
        %v5312 = vmul.f32 %v5263, %v5311
        %vm5313 = vcmp.eq.f32.partialorder %v5263, inf
        %v5314 = vsel %vm5313, %v5263, %v5312
        %vm5315 = vcmp.eq.f32.partialorder %v5263, 0.0
        %v5316 = vand.u32 %v5263, 2147483648
        %v5317 = vsel %vm5315, %v5316, %v5314
        %v5318 = vrsqrt.pop %v5264
        %v5319 = vmul.f32 %v5264, %v5318
        %vm5320 = vcmp.eq.f32.partialorder %v5264, inf
        %v5321 = vsel %vm5320, %v5264, %v5319
        %vm5322 = vcmp.eq.f32.partialorder %v5264, 0.0
        %v5323 = vand.u32 %v5264, 2147483648
        %v5324 = vsel %vm5322, %v5323, %v5321
        %v5325 = vrsqrt.pop %v5265
        %v5326 = vmul.f32 %v5265, %v5325
        %vm5327 = vcmp.eq.f32.partialorder %v5265, inf
        %v5328 = vsel %vm5327, %v5265, %v5326
        %vm5329 = vcmp.eq.f32.partialorder %v5265, 0.0
        %v5330 = vand.u32 %v5265, 2147483648
        %v5331 = vsel %vm5329, %v5330, %v5328
        %v5332 = vrsqrt.pop %v5266
        %v5333 = vmul.f32 %v5266, %v5332
        %vm5334 = vcmp.eq.f32.partialorder %v5266, inf
        %v5335 = vsel %vm5334, %v5266, %v5333
        %vm5336 = vcmp.eq.f32.partialorder %v5266, 0.0
        %v5337 = vand.u32 %v5266, 2147483648
        %v5338 = vsel %vm5336, %v5337, %v5335
        %v5339 = vrsqrt.pop %v5267
        %v5340 = vmul.f32 %v5267, %v5339
        %vm5341 = vcmp.eq.f32.partialorder %v5267, inf
        %v5342 = vsel %vm5341, %v5267, %v5340
        %vm5343 = vcmp.eq.f32.partialorder %v5267, 0.0
        %v5344 = vand.u32 %v5267, 2147483648
        %v5345 = vsel %vm5343, %v5344, %v5342
        %v5346 = vrsqrt.pop %v5268
        %v5347 = vmul.f32 %v5268, %v5346
        %vm5348 = vcmp.eq.f32.partialorder %v5268, inf
        %v5349 = vsel %vm5348, %v5268, %v5347
        %vm5350 = vcmp.eq.f32.partialorder %v5268, 0.0
        %v5351 = vand.u32 %v5268, 2147483648
        %v5352 = vsel %vm5350, %v5351, %v5349
        %v5353 = vrsqrt.pop %v5269
        %v5354 = vmul.f32 %v5269, %v5353
        %vm5355 = vcmp.eq.f32.partialorder %v5269, inf
        %v5356 = vsel %vm5355, %v5269, %v5354
        %vm5357 = vcmp.eq.f32.partialorder %v5269, 0.0
        %v5358 = vand.u32 %v5269, 2147483648
        %v5359 = vsel %vm5357, %v5358, %v5356
        %v5360 = vrsqrt.pop %v5270
        %v5361 = vmul.f32 %v5270, %v5360
        %vm5362 = vcmp.eq.f32.partialorder %v5270, inf
        %v5363 = vsel %vm5362, %v5270, %v5361
        %vm5364 = vcmp.eq.f32.partialorder %v5270, 0.0
        %v5365 = vand.u32 %v5270, 2147483648
        %v5366 = vsel %vm5364, %v5365, %v5363
        %v5367 = vrsqrt.pop %v5211
        %v5368 = vmul.f32 %v5211, %v5367
        %vm5369 = vcmp.eq.f32.partialorder %v5211, inf
        %v5370 = vsel %vm5369, %v5211, %v5368
        %vm5371 = vcmp.eq.f32.partialorder %v5211, 0.0
        %v5372 = vand.u32 %v5211, 2147483648
        %v5373 = vsel %vm5371, %v5372, %v5370
        %v5374 = vrsqrt.pop %v5212
        %v5375 = vmul.f32 %v5212, %v5374
        %vm5376 = vcmp.eq.f32.partialorder %v5212, inf
        %v5377 = vsel %vm5376, %v5212, %v5375
        %vm5378 = vcmp.eq.f32.partialorder %v5212, 0.0
        %v5379 = vand.u32 %v5212, 2147483648
        %v5380 = vsel %vm5378, %v5379, %v5377
        %v5381 = vrsqrt.pop %v5213
        %v5382 = vmul.f32 %v5213, %v5381
        %vm5383 = vcmp.eq.f32.partialorder %v5213, inf
        %v5384 = vsel %vm5383, %v5213, %v5382
        %vm5385 = vcmp.eq.f32.partialorder %v5213, 0.0
        %v5386 = vand.u32 %v5213, 2147483648
        %v5387 = vsel %vm5385, %v5386, %v5384
        %v5388 = vrsqrt.pop %v5214
        %v5389 = vmul.f32 %v5214, %v5388
        %vm5390 = vcmp.eq.f32.partialorder %v5214, inf
        %v5391 = vsel %vm5390, %v5214, %v5389
        %vm5392 = vcmp.eq.f32.partialorder %v5214, 0.0
        %v5393 = vand.u32 %v5214, 2147483648
        %v5394 = vsel %vm5392, %v5393, %v5391
        %v5395 = vrsqrt.pop %v5215
        %v5396 = vmul.f32 %v5215, %v5395
        %vm5397 = vcmp.eq.f32.partialorder %v5215, inf
        %v5398 = vsel %vm5397, %v5215, %v5396
        %vm5399 = vcmp.eq.f32.partialorder %v5215, 0.0
        %v5400 = vand.u32 %v5215, 2147483648
        %v5401 = vsel %vm5399, %v5400, %v5398
        %v5402 = vrsqrt.pop %v5216
        %v5403 = vmul.f32 %v5216, %v5402
        %vm5404 = vcmp.eq.f32.partialorder %v5216, inf
        %v5405 = vsel %vm5404, %v5216, %v5403
        %vm5406 = vcmp.eq.f32.partialorder %v5216, 0.0
        %v5407 = vand.u32 %v5216, 2147483648
        %v5408 = vsel %vm5406, %v5407, %v5405
        %v5409 = vrsqrt.pop %v5217
        %v5410 = vmul.f32 %v5217, %v5409
        %vm5411 = vcmp.eq.f32.partialorder %v5217, inf
        %v5412 = vsel %vm5411, %v5217, %v5410
        %vm5413 = vcmp.eq.f32.partialorder %v5217, 0.0
        %v5414 = vand.u32 %v5217, 2147483648
        %v5415 = vsel %vm5413, %v5414, %v5412
        %v5416 = vrsqrt.pop %v5218
        %v5417 = vmul.f32 %v5218, %v5416
        %vm5418 = vcmp.eq.f32.partialorder %v5218, inf
        %v5419 = vsel %vm5418, %v5218, %v5417
        %vm5420 = vcmp.eq.f32.partialorder %v5218, 0.0
        %v5421 = vand.u32 %v5218, 2147483648
        %v5422 = vsel %vm5420, %v5421, %v5419
        %v5423 = vrsqrt.pop %v5219
        %v5424 = vmul.f32 %v5219, %v5423
        %vm5425 = vcmp.eq.f32.partialorder %v5219, inf
        %v5426 = vsel %vm5425, %v5219, %v5424
        %vm5427 = vcmp.eq.f32.partialorder %v5219, 0.0
        %v5428 = vand.u32 %v5219, 2147483648
        %v5429 = vsel %vm5427, %v5428, %v5426
        %v5430 = vrsqrt.pop %v5220
        %v5431 = vmul.f32 %v5220, %v5430
        %vm5432 = vcmp.eq.f32.partialorder %v5220, inf
        %v5433 = vsel %vm5432, %v5220, %v5431
        %vm5434 = vcmp.eq.f32.partialorder %v5220, 0.0
        %v5435 = vand.u32 %v5220, 2147483648
        %v5436 = vsel %vm5434, %v5435, %v5433
        %v5437 = vrsqrt.pop %v5221
        %v5438 = vmul.f32 %v5221, %v5437
        %vm5439 = vcmp.eq.f32.partialorder %v5221, inf
        %v5440 = vsel %vm5439, %v5221, %v5438
        %vm5441 = vcmp.eq.f32.partialorder %v5221, 0.0
        %v5442 = vand.u32 %v5221, 2147483648
        %v5443 = vsel %vm5441, %v5442, %v5440
        %v5444 = vrsqrt.pop %v5222
        %v5445 = vmul.f32 %v5222, %v5444
        %vm5446 = vcmp.eq.f32.partialorder %v5222, inf
        %v5447 = vsel %vm5446, %v5222, %v5445
        %vm5448 = vcmp.eq.f32.partialorder %v5222, 0.0
        %v5449 = vand.u32 %v5222, 2147483648
        %v5450 = vsel %vm5448, %v5449, %v5447
        %v5451 = vsub.f32 %v5289, %v5373
        %v5452 = vsub.f32 %v5296, %v5380
        %v5453 = vsub.f32 %v5303, %v5387
        %v5454 = vsub.f32 %v5310, %v5394
        %v5455 = vsub.f32 %v5317, %v5401
        %v5456 = vsub.f32 %v5324, %v5408
        %v5457 = vsub.f32 %v5331, %v5415
        %v5458 = vsub.f32 %v5338, %v5422
        %v5459 = vsub.f32 %v5345, %v5429
        %v5460 = vsub.f32 %v5352, %v5436
        %v5461 = vsub.f32 %v5359, %v5443
        %v5462 = vsub.f32 %v5366, %v5450
        %v5463 = vmul.f32 %v5451, %v5451
        %v5464 = vmul.f32 %v5452, %v5452
        %v5465 = vmul.f32 %v5453, %v5453
        %v5466 = vmul.f32 %v5454, %v5454
        %v5467 = vmul.f32 %v5455, %v5455
        %v5468 = vmul.f32 %v5456, %v5456
        %v5469 = vmul.f32 %v5457, %v5457
        %v5470 = vmul.f32 %v5458, %v5458
        %v5471 = vmul.f32 %v5459, %v5459
        %v5472 = vmul.f32 %v5460, %v5460
        %v5473 = vmul.f32 %v5461, %v5461
        %v5474 = vmul.f32 %v5462, %v5462
        %v5475 = vadd.f32 %v5463, %v5464
        %v5476 = vadd.f32 %v5467, %v5468
        %v5477 = vadd.f32 %v5471, %v5472
        %v5478 = vadd.f32 %v5475, %v5465
        %v5479 = vadd.f32 %v5476, %v5469
        %v5480 = vadd.f32 %v5477, %v5473
        %v5481 = vadd.f32 %v5478, %v5466
        %v5482 = vadd.f32 %v5479, %v5470
        %v5483 = vadd.f32 %v5480, %v5474
        %v5484 = vadd.f32 %v5481, %v5482
        %v5485 = vadd.f32 %v5484, %v5483
        %v5486 = vrot.slane %v5485, 4
        %v5487 = vadd.f32 %v5485, %v5486
        %v5488 = vrot.slane %v5487, 2
        %v5489 = vadd.f32 %v5487, %v5488
        %v5490 = vrot.slane %v5489, 1
        %v5491 = vadd.f32 %v5489, %v5490
        %v5492 = vrcp.pop %v5211
        %v5493 = vrcp.pop %v5212
        %v5494 = vrcp.pop %v5213
        %v5495 = vrcp.pop %v5214
        %v5496 = vrcp.pop %v5215
        %v5497 = vrcp.pop %v5216
        %v5498 = vrcp.pop %v5217
        %v5499 = vrcp.pop %v5218
        %v5500 = vrcp.pop %v5219
        %v5501 = vrcp.pop %v5220
        %v5502 = vrcp.pop %v5221
        %v5503 = vrcp.pop %v5222
        %v5504 = vmul.f32 %v5259, %v5492
        %v5505 = vmul.f32 %v5260, %v5493
        %v5506 = vmul.f32 %v5261, %v5494
        %v5507 = vmul.f32 %v5262, %v5495
        %v5508 = vmul.f32 %v5263, %v5496
        %v5509 = vmul.f32 %v5264, %v5497
        %v5510 = vmul.f32 %v5265, %v5498
        %v5511 = vmul.f32 %v5266, %v5499
        %v5512 = vmul.f32 %v5267, %v5500
        %v5513 = vmul.f32 %v5268, %v5501
        %v5514 = vmul.f32 %v5269, %v5502
        %v5515 = vmul.f32 %v5270, %v5503
        %v5516 = vlog2.pop %v5504
        %v5517 = vmul.f32 %v5516, 0.6931472
        %v5518 = vlog2.pop %v5505
        %v5519 = vmul.f32 %v5518, 0.6931472
        %v5520 = vlog2.pop %v5506
        %v5521 = vmul.f32 %v5520, 0.6931472
        %v5522 = vlog2.pop %v5507
        %v5523 = vmul.f32 %v5522, 0.6931472
        %v5524 = vlog2.pop %v5508
        %v5525 = vmul.f32 %v5524, 0.6931472
        %v5526 = vlog2.pop %v5509
        %v5527 = vmul.f32 %v5526, 0.6931472
        %v5528 = vlog2.pop %v5510
        %v5529 = vmul.f32 %v5528, 0.6931472
        %v5530 = vlog2.pop %v5511
        %v5531 = vmul.f32 %v5530, 0.6931472
        %v5532 = vlog2.pop %v5512
        %v5533 = vmul.f32 %v5532, 0.6931472
        %v5534 = vlog2.pop %v5513
        %v5535 = vmul.f32 %v5534, 0.6931472
        %v5536 = vlog2.pop %v5514
        %v5537 = vmul.f32 %v5536, 0.6931472
        %v5538 = vlog2.pop %v5515
        %v5539 = vmul.f32 %v5538, 0.6931472
        %v5540 = vand.u32 2147483647, %v5517
        %v5541 = vand.u32 2147483647, %v5519
        %v5542 = vand.u32 2147483647, %v5521
        %v5543 = vand.u32 2147483647, %v5523
        %v5544 = vand.u32 2147483647, %v5525
        %v5545 = vand.u32 2147483647, %v5527
        %v5546 = vand.u32 2147483647, %v5529
        %v5547 = vand.u32 2147483647, %v5531
        %v5548 = vand.u32 2147483647, %v5533
        %v5549 = vand.u32 2147483647, %v5535
        %v5550 = vand.u32 2147483647, %v5537
        %v5551 = vand.u32 2147483647, %v5539
        %v5552 = vadd.f32 %v5259, %v5260
        %v5553 = vadd.f32 %v5263, %v5264
        %v5554 = vadd.f32 %v5267, %v5268
        %v5555 = vadd.f32 %v5552, %v5261
        %v5556 = vadd.f32 %v5553, %v5265
        %v5557 = vadd.f32 %v5554, %v5269
        %v5558 = vadd.f32 %v5555, %v5262
        %v5559 = vadd.f32 %v5556, %v5266
        %v5560 = vadd.f32 %v5557, %v5270
        %v5561 = vsel %vm5280, %v5558, 0.0
        %v5562 = vsel %vm5281, %v5559, 0.0
        %v5563 = vsel %vm5282, %v5560, 0.0
        %v5564 = vadd.f32 %v5561, %v5562
        %v5565 = vadd.f32 %v5564, %v5563
        %v5566 = vrot.slane %v5565, 4
        %v5567 = vadd.f32 %v5565, %v5566
        %v5568 = vrot.slane %v5567, 2
        %v5569 = vadd.f32 %v5567, %v5568
        %v5570 = vrot.slane %v5569, 1
        %v5571 = vadd.f32 %v5569, %v5570
        %v5572 = vadd.f32 %v5540, %v5541
        %v5573 = vadd.f32 %v5544, %v5545
        %v5574 = vadd.f32 %v5548, %v5549
        %v5575 = vadd.f32 %v5572, %v5542
        %v5576 = vadd.f32 %v5573, %v5546
        %v5577 = vadd.f32 %v5574, %v5550
        %v5578 = vadd.f32 %v5575, %v5543
        %v5579 = vadd.f32 %v5576, %v5547
        %v5580 = vadd.f32 %v5577, %v5551
        %v5581 = vsel %vm5280, %v5578, 0.0
        %v5582 = vsel %vm5281, %v5579, 0.0
        %v5583 = vsel %vm5282, %v5580, 0.0
        %v5584 = vadd.f32 %v5581, %v5582
        %v5585 = vadd.f32 %v5584, %v5583
        %v5586 = vrot.slane %v5585, 4
        %v5587 = vadd.f32 %v5585, %v5586
        %v5588 = vrot.slane %v5587, 2
        %v5589 = vadd.f32 %v5587, %v5588
        %v5590 = vrot.slane %v5589, 1
        %v5591 = vadd.f32 %v5589, %v5590
        %v5592 = vmul.f32 %v4667, %v4667
        %v5593 = vmul.f32 %v4671, %v4671
        %v5594 = vmul.f32 %v4677, %v4677
        %v5595 = vmax.f32 %v5592, 1e-07
        %v5596 = vmax.f32 %v5593, 1e-07
        %v5597 = vmax.f32 %v5594, 1e-07
        %v5598 = vmul.f32 %v4681, %v4681
        %v5599 = vmul.f32 %v4687, %v4687
        %v5600 = vmul.f32 %v4691, %v4691
        %v5601 = vmax.f32 %v5598, 1e-07
        %v5602 = vmax.f32 %v5599, 1e-07
        %v5603 = vmax.f32 %v5600, 1e-07
        %v5604 = vrsqrt.pop %v5601
        %v5605 = vmul.f32 %v5601, %v5604
        %vm5606 = vcmp.eq.f32.partialorder %v5601, inf
        %v5607 = vsel %vm5606, %v5601, %v5605
        %vm5608 = vcmp.eq.f32.partialorder %v5601, 0.0
        %v5609 = vand.u32 %v5601, 2147483648
        %v5610 = vsel %vm5608, %v5609, %v5607
        %v5611 = vrsqrt.pop %v5602
        %v5612 = vmul.f32 %v5602, %v5611
        %vm5613 = vcmp.eq.f32.partialorder %v5602, inf
        %v5614 = vsel %vm5613, %v5602, %v5612
        %vm5615 = vcmp.eq.f32.partialorder %v5602, 0.0
        %v5616 = vand.u32 %v5602, 2147483648
        %v5617 = vsel %vm5615, %v5616, %v5614
        %v5618 = vrsqrt.pop %v5603
        %v5619 = vmul.f32 %v5603, %v5618
        %vm5620 = vcmp.eq.f32.partialorder %v5603, inf
        %v5621 = vsel %vm5620, %v5603, %v5619
        %vm5622 = vcmp.eq.f32.partialorder %v5603, 0.0
        %v5623 = vand.u32 %v5603, 2147483648
        %v5624 = vsel %vm5622, %v5623, %v5621
        %v5625 = vrsqrt.pop %v5595
        %v5626 = vmul.f32 %v5595, %v5625
        %vm5627 = vcmp.eq.f32.partialorder %v5595, inf
        %v5628 = vsel %vm5627, %v5595, %v5626
        %vm5629 = vcmp.eq.f32.partialorder %v5595, 0.0
        %v5630 = vand.u32 %v5595, 2147483648
        %v5631 = vsel %vm5629, %v5630, %v5628
        %v5632 = vrsqrt.pop %v5596
        %v5633 = vmul.f32 %v5596, %v5632
        %vm5634 = vcmp.eq.f32.partialorder %v5596, inf
        %v5635 = vsel %vm5634, %v5596, %v5633
        %vm5636 = vcmp.eq.f32.partialorder %v5596, 0.0
        %v5637 = vand.u32 %v5596, 2147483648
        %v5638 = vsel %vm5636, %v5637, %v5635
        %v5639 = vrsqrt.pop %v5597
        %v5640 = vmul.f32 %v5597, %v5639
        %vm5641 = vcmp.eq.f32.partialorder %v5597, inf
        %v5642 = vsel %vm5641, %v5597, %v5640
        %vm5643 = vcmp.eq.f32.partialorder %v5597, 0.0
        %v5644 = vand.u32 %v5597, 2147483648
        %v5645 = vsel %vm5643, %v5644, %v5642
        %v5646 = vsub.f32 %v5610, %v5631
        %v5647 = vsub.f32 %v5617, %v5638
        %v5648 = vsub.f32 %v5624, %v5645
        %v5649 = vmul.f32 %v5646, %v5646
        %v5650 = vmul.f32 %v5647, %v5647
        %v5651 = vmul.f32 %v5648, %v5648
        %v5652 = vadd.f32 %v5649, %v5650
        %v5653 = vadd.f32 %v5652, %v5651
        %v5654 = vrot.slane %v5653, 4
        %v5655 = vadd.f32 %v5653, %v5654
        %v5656 = vrot.slane %v5655, 2
        %v5657 = vadd.f32 %v5655, %v5656
        %v5658 = vrot.slane %v5657, 1
        %v5659 = vadd.f32 %v5657, %v5658
        %v5660 = vadd.f32 %v5491, %v5659
        %v5661 = vlaneseq
        %v5662 = vand.u32 %v5661, 127
        %vm5663 = vcmp.lt.s32.totalorder %v5662, 1
        %vm5664 = vmand %vm5663, %vm5280
        %vm5665 = vmand %vm5663, %vm5281
        %vm5666 = vmand %vm5663, %vm5282
        %v5667 = vrcp.pop %v5595
        %v5668 = vrcp.pop %v5596
        %v5669 = vrcp.pop %v5597
        %v5670 = vmul.f32 %v5601, %v5667
        %v5671 = vmul.f32 %v5602, %v5668
        %v5672 = vmul.f32 %v5603, %v5669
        %v5673 = vlog2.pop %v5670
        %v5674 = vmul.f32 %v5673, 0.6931472
        %v5675 = vlog2.pop %v5671
        %v5676 = vmul.f32 %v5675, 0.6931472
        %v5677 = vlog2.pop %v5672
        %v5678 = vmul.f32 %v5677, 0.6931472
        %v5679 = vand.u32 2147483647, %v5674
        %v5680 = vand.u32 2147483647, %v5676
        %v5681 = vand.u32 2147483647, %v5678
        %v5682 = vsel %vm5664, %v5601, 0.0
        %v5683 = vsel %vm5665, %v5602, 0.0
        %v5684 = vsel %vm5666, %v5603, 0.0
        %v5685 = vadd.f32 %v5682, %v5683
        %v5686 = vadd.f32 %v5685, %v5684
        %v5687 = vrot.slane %v5686, 4
        %v5688 = vadd.f32 %v5686, %v5687
        %v5689 = vrot.slane %v5688, 2
        %v5690 = vadd.f32 %v5688, %v5689
        %v5691 = vrot.slane %v5690, 1
        %v5692 = vadd.f32 %v5690, %v5691
        %v5693 = vadd.f32 %v5571, %v5692
        %v5694 = vsel %vm5664, %v5679, 0.0
        %v5695 = vsel %vm5665, %v5680, 0.0
        %v5696 = vsel %vm5666, %v5681, 0.0
        %v5697 = vadd.f32 %v5694, %v5695
        %v5698 = vadd.f32 %v5697, %v5696
        %v5699 = vrot.slane %v5698, 4
        %v5700 = vadd.f32 %v5698, %v5699
        %v5701 = vrot.slane %v5700, 2
        %v5702 = vadd.f32 %v5700, %v5701
        %v5703 = vrot.slane %v5702, 1
        %v5704 = vadd.f32 %v5702, %v5703
        %v5705 = vadd.f32 %v5591, %v5704
        %v5706 = vmul.f32 %v5705, 0.5
        %vm5707 = vcmp.eq.s32.totalorder %v5272, 0
        %vm5708 = vcmp.eq.s32.totalorder %v5272, 1
        %vm5709 = vcmp.eq.s32.totalorder %v5272, 2
        %v5710 = vsel %vm5709, %v5706, 0.0
        %v5711 = vsel %vm5708, %v5693, %v5710
        %v5712 = vsel %vm5707, %v5660, %v5711
        %5713 = vst [vmem:[%s209] sm:$0xff] %v5712
        %p5714 = scmp.lt.s32.totalorder %s13, 1
        %s5715 = scalar_select %p5714, %s13, 1
        %s5716 = smul.addr %s5715, 8
        %s5717 = scalar_lea.vmem %s2, %s5716
        // Predicated region
        $region52: #{a_call__.1} parent=46 // pred_check
          %p5718 = pneg %p78
        $region53: #{a_call__.1} parent=46 // pred_check_branch
          %5720 = sbr.rel (%p5718) target = $region55
        $region54: #{a_call__.1} parent=46 // pred_region
          _
        $region55: #{a_call__.1} parent=46 // pred_fallthru
          _
      $region47: #{a_call__.1} parent=5 // pred_fallthru
        _
      %p5721 = scmp.le.s32.totalorder 2, %s8
      // Predicated region
      $region56: #{a_call__.1} parent=5 // pred_check
        %p5722 = pneg %p5721
      $region57: #{a_call__.1} parent=5 // pred_check_branch
        %5724 = sbr.rel (%p5722) target = $region59
      $region58: #{a_call__.1} parent=5 // pred_region
        %s5725 = ssub.s32 %s8, 2
        // Predicated region
        $region60: #{a_call__.1} parent=58 // pred_check
          %p5726 = pneg %p84
        $region61: #{a_call__.1} parent=58 // pred_check_branch
          %5728 = sbr.rel (%p5726) target = $region63
        $region62: #{a_call__.1} parent=58 // pred_region
          %p5729 = scmp.lt.s32.totalorder %s14, 1
          %s5730 = scalar_select %p5729, %s14, 1
          %s5731 = smul.addr %s5730, 8
          %s5732 = scalar_lea.vmem %s2, %s5731
        $region63: #{a_call__.1} parent=58 // pred_fallthru
          _
      $region59: #{a_call__.1} parent=5 // pred_fallthru
        _
    $region6: #{a_call__.1} parent=1 // loop_footer
      %s12 = sadd.s32 1, %s8
    $region7: #{a_call__.1} parent=1 // loop_footer_branch
      %7 = sbr.rel target = $region3
    $region8: #{a_call__.1} parent=1 // loop_exit
      _

</llo_original>
